<compile_context>
chip_gen: v5e
topology: v5e:2x2
jax: 0.10.0
libtpu: 0.0.40
codegen_flags: <defaults>
</compile_context>

<pallas_src>
import functools

import jax
import jax.numpy as jnp
from jax.experimental import pallas as pl
from jax.experimental.pallas import tpu as pltpu


def _round_up(n, m):
    return ((n + m - 1) // m) * m


def _fpn_kernel(x_ref, w1_ref, b1_ref, w2_ref, b2_ref, out_ref):
    """Fused fc1 -> (dropout: identity) -> ReLU -> fc2 for one batch block."""
    # fc1: (block_b, 2304) @ (2304, fp_2_dim) on the MXU, f32 accumulation.
    h = jnp.dot(x_ref[...], w1_ref[...], preferred_element_type=jnp.float32)
    h = h + b1_ref[...]                       # fc1 bias (f32)
    h = jnp.maximum(h, 0.0)                   # ReLU (dropout = identity)
    # fc2: (block_b, fp_2_dim) @ (fp_2_dim, hidden_dim), bf16 MXU, f32 accum.
    y = jnp.dot(h.astype(w2_ref.dtype), w2_ref[...],
                preferred_element_type=jnp.float32)
    out_ref[...] = (y + b2_ref[...]).astype(out_ref.dtype)


def fpn_forward(x, w1, b1, w2, b2, *, block_b=256, matmul_dtype=jnp.bfloat16):
    """x: (B, fp_dim) -> (B, hidden_dim)."""
    B, K = x.shape
    F1 = w1.shape[1]    # fp_2_dim
    F2 = w2.shape[1]    # hidden_dim
    assert w1.shape[0] == K and w2.shape[0] == F1

    # Biases stay in f32 (tiny); matmul operands go to bf16 (MXU-native).
    b1 = jnp.asarray(b1, jnp.float32).reshape(1, F1)
    b2 = jnp.asarray(b2, jnp.float32).reshape(1, F2)
    x = x.astype(matmul_dtype)
    w1 = w1.astype(matmul_dtype)
    w2 = w2.astype(matmul_dtype)

    # Batch tile: big (default 256) for throughput, but never pad a small
    # batch up past its own sublane-aligned size.
    bb = min(block_b, _round_up(B, 8))
    pad_b = (-B) % bb
    if pad_b:
        x = jnp.pad(x, ((0, pad_b), (0, 0)))
    Bp = B + pad_b

    out = pl.pallas_call(
        _fpn_kernel,
        out_shape=jax.ShapeDtypeStruct((Bp, F2), jnp.float32),
        grid_spec=pltpu.PrefetchScalarGridSpec(
            num_scalar_prefetch=0,
            grid=(Bp // bb,),                                 # batch blocks only
            in_specs=[
                pl.BlockSpec((bb, K),   lambda i: (i, 0)),    # x  (streamed)
                pl.BlockSpec((K, F1),   lambda i: (0, 0)),    # w1 (VMEM-resident)
                pl.BlockSpec((1, F1),   lambda i: (0, 0)),    # b1
                pl.BlockSpec((F1, F2),  lambda i: (0, 0)),    # w2 (VMEM-resident)
                pl.BlockSpec((1, F2),   lambda i: (0, 0)),    # b2
            ],
            out_specs=pl.BlockSpec((bb, F2), lambda i: (i, 0)),
        ),
        compiler_params=pltpu.CompilerParams(
            dimension_semantics=("parallel",)),
    )(x, w1, b1, w2, b2)
    return out[:B]


if __name__ == "__main__":
    key = jax.random.PRNGKey(0)

    # Shapes consistent with FPN: fp_dim is fixed at 2304 by the module;
    # fp_2_dim / hidden_dim chosen small and lane-friendly.
    B = 8
    fp_dim = 2304
    fp_2_dim = 512
    hidden_dim = 128

    key, kx, kw1, kb1, kw2, kb2 = jax.random.split(key, 6)
    x  = jax.random.normal(kx, (B, fp_dim), jnp.float32)
    w1 = 0.02 * jax.random.normal(kw1, (fp_dim, fp_2_dim), jnp.float32)
    b1 = 0.02 * jax.random.normal(kb1, (1, fp_2_dim), jnp.float32)
    w2 = 0.05 * jax.random.normal(kw2, (fp_2_dim, hidden_dim), jnp.float32)
    b2 = 0.05 * jax.random.normal(kb2, (1, hidden_dim), jnp.float32)

    out = fpn_forward(x, w1, b1, w2, b2)
    out = jax.block_until_ready(out)
    assert out.shape == (B, hidden_dim), out.shape

    hp_dot = functools.partial(jnp.dot, precision=jax.lax.Precision.HIGHEST)

    # 1) Tight check against a reference that uses the same bf16-cast operands
    #    and f32 accumulation (validates kernel plumbing / fusion).
    xb  = x.astype(jnp.bfloat16).astype(jnp.float32)
    w1b = w1.astype(jnp.bfloat16).astype(jnp.float32)
    w2b = w2.astype(jnp.bfloat16).astype(jnp.float32)
    h_b  = jnp.maximum(hp_dot(xb, w1b) + b1, 0.0)
    h_b  = h_b.astype(jnp.bfloat16).astype(jnp.float32)
    ref_b = hp_dot(h_b, w2b) + b2
    err_b = float(jnp.max(jnp.abs(out - ref_b)))
    assert jnp.allclose(out, ref_b, rtol=1e-4, atol=1e-4), err_b

    # 2) Fidelity check against the pure-f32 module forward (bf16-matmul
    #    tolerance): fc1 -> ReLU -> fc2 in inference mode.
    h_ref = jnp.maximum(hp_dot(x, w1) + b1, 0.0)
    ref   = hp_dot(h_ref, w2) + b2
    err   = float(jnp.max(jnp.abs(out - ref)))
    assert jnp.allclose(out, ref, rtol=2e-2, atol=2e-2), err

    print("KERNEL_OK")
</pallas_src>

<mosaic_0001>
module attributes {stable_mosaic.version = 11 : i64} {
  func.func @_fpn_kernel(%arg0: i32, %arg1: memref<8x2304xbf16, #tpu.memory_space<vmem>>, %arg2: memref<2304x512xbf16, #tpu.memory_space<vmem>>, %arg3: memref<1x512xf32, #tpu.memory_space<vmem>>, %arg4: memref<512x128xbf16, #tpu.memory_space<vmem>>, %arg5: memref<1x128xf32, #tpu.memory_space<vmem>>, %arg6: memref<8x128xf32, #tpu.memory_space<vmem>>) attributes {dimension_semantics = [#tpu.dimension_semantics<parallel>], iteration_bounds = array<i64: 1>, scalar_prefetch = 0 : i64, scratch_operands = 0 : i64, tpu.core_type = #tpu.core_type<tc>, window_params = [{transform_indices = @transform_0, window_bounds = array<i64: 8, 2304>}, {pipeline_mode = #tpu.pipeline_mode<synchronous>, transform_indices = @transform_1, window_bounds = array<i64: 2304, 512>}, {pipeline_mode = #tpu.pipeline_mode<synchronous>, transform_indices = @transform_2, window_bounds = array<i64: 1, 512>}, {pipeline_mode = #tpu.pipeline_mode<synchronous>, transform_indices = @transform_3, window_bounds = array<i64: 512, 128>}, {pipeline_mode = #tpu.pipeline_mode<synchronous>, transform_indices = @transform_4, window_bounds = array<i64: 1, 128>}, {transform_indices = @transform_5, window_bounds = array<i64: 8, 128>}]} {
    %c0 = arith.constant 0 : index
    %c0_0 = arith.constant 0 : index
    %0 = vector.load %arg1[%c0, %c0_0] : memref<8x2304xbf16, #tpu.memory_space<vmem>>, vector<8x2304xbf16>
    %c0_1 = arith.constant 0 : index
    %c0_2 = arith.constant 0 : index
    %1 = vector.load %arg2[%c0_1, %c0_2] : memref<2304x512xbf16, #tpu.memory_space<vmem>>, vector<2304x512xbf16>
    %cst = arith.constant dense<0.000000e+00> : vector<8x512xf32>
    %2 = tpu.matmul %0, %1, %cst {dimension_numbers = #tpu.dot_dimension_numbers<[1], [0], [0], [1], [0, 0, 1, 1], [], []>} : vector<8x2304xbf16>, vector<2304x512xbf16>, vector<8x512xf32> -> vector<8x512xf32>
    %c0_3 = arith.constant 0 : index
    %c0_4 = arith.constant 0 : index
    %3 = vector.load %arg3[%c0_3, %c0_4] : memref<1x512xf32, #tpu.memory_space<vmem>>, vector<1x512xf32>
    %4 = vector.broadcast %3 : vector<1x512xf32> to vector<8x512xf32>
    %5 = arith.addf %2, %4 : vector<8x512xf32>
    %cst_5 = arith.constant 0.000000e+00 : f32
    %6 = vector.broadcast %cst_5 : f32 to vector<8x512xf32>
    %7 = arith.maximumf %5, %6 : vector<8x512xf32>
    %8 = arith.truncf %7 : vector<8x512xf32> to vector<8x512xbf16>
    %c0_6 = arith.constant 0 : index
    %c0_7 = arith.constant 0 : index
    %9 = vector.load %arg4[%c0_6, %c0_7] : memref<512x128xbf16, #tpu.memory_space<vmem>>, vector<512x128xbf16>
    %cst_8 = arith.constant dense<0.000000e+00> : vector<8x128xf32>
    %10 = tpu.matmul %8, %9, %cst_8 {dimension_numbers = #tpu.dot_dimension_numbers<[1], [0], [0], [1], [0, 0, 1, 1], [], []>} : vector<8x512xbf16>, vector<512x128xbf16>, vector<8x128xf32> -> vector<8x128xf32>
    %c0_9 = arith.constant 0 : index
    %c0_10 = arith.constant 0 : index
    %11 = vector.load %arg5[%c0_9, %c0_10] : memref<1x128xf32, #tpu.memory_space<vmem>>, vector<1x128xf32>
    %12 = vector.broadcast %11 : vector<1x128xf32> to vector<8x128xf32>
    %13 = arith.addf %10, %12 : vector<8x128xf32>
    %c0_11 = arith.constant 0 : index
    %c0_12 = arith.constant 0 : index
    %14 = vector.load %arg6[%c0_11, %c0_12] : memref<8x128xf32, #tpu.memory_space<vmem>>, vector<8x128xf32>
    tpu.vector_store %arg6[%c0_11, %c0_12], %13 {strides = array<i32>} : memref<8x128xf32, #tpu.memory_space<vmem>>, vector<8x128xf32>,
    return
  }
  func.func @transform_0(%arg0: i32) -> (i32, i32) {
    %c0_i32 = arith.constant 0 : i32
    %c0_i32_0 = arith.constant 0 : i32
    return %arg0, %c0_i32 : i32, i32
  }
  func.func @transform_1(%arg0: i32) -> (i32, i32) {
    %c0_i32 = arith.constant 0 : i32
    %c0_i32_0 = arith.constant 0 : i32
    %c0_i32_1 = arith.constant 0 : i32
    return %c0_i32, %c0_i32_0 : i32, i32
  }
  func.func @transform_2(%arg0: i32) -> (i32, i32) {
    %c0_i32 = arith.constant 0 : i32
    %c0_i32_0 = arith.constant 0 : i32
    %c0_i32_1 = arith.constant 0 : i32
    return %c0_i32, %c0_i32_0 : i32, i32
  }
  func.func @transform_3(%arg0: i32) -> (i32, i32) {
    %c0_i32 = arith.constant 0 : i32
    %c0_i32_0 = arith.constant 0 : i32
    %c0_i32_1 = arith.constant 0 : i32
    return %c0_i32, %c0_i32_0 : i32, i32
  }
  func.func @transform_4(%arg0: i32) -> (i32, i32) {
    %c0_i32 = arith.constant 0 : i32
    %c0_i32_0 = arith.constant 0 : i32
    %c0_i32_1 = arith.constant 0 : i32
    return %c0_i32, %c0_i32_0 : i32, i32
  }
  func.func @transform_5(%arg0: i32) -> (i32, i32) {
    %c0_i32 = arith.constant 0 : i32
    %c0_i32_0 = arith.constant 0 : i32
    return %arg0, %c0_i32 : i32, i32
  }
}

</mosaic_0001>

<llo_original>
// kernel: tpu_custom_call.1
$region0: #{tpu_custom_call.1}
  #allocation0 [shape = 'u32[]', space=smem, size = 0x4, offset = 0x4, fixed_abs, tag = 'smem constant byte address 0x4 - core index']
  #allocation1 [shape = 'u32[72,128]{1,0:T(1,128)}', space=vmem, size = 0x9000, scoped, tag = 'internal scratch']
  %s0 = inlined_call_operand.hbm [shape: bf16[8,2304], index: 0, kind: input, shape index: {}]
  %s1 = inlined_call_operand.hbm [shape: bf16[2304,512], index: 1, kind: input, shape index: {}]
  %s2 = inlined_call_operand.hbm [shape: f32[1,512], index: 2, kind: input, shape index: {}]
  %s3 = inlined_call_operand.hbm [shape: bf16[512,128], index: 3, kind: input, shape index: {}]
  %s4 = inlined_call_operand.hbm [shape: f32[1,128], index: 4, kind: input, shape index: {}]
  %s5 = inlined_call_operand.hbm [shape: f32[8,128], index: 5, kind: output, shape index: {}]
  %s6 = sld [smem:[#allocation0]]
  $region50: #{tpu_custom_call.1} parent=0
    _
  %s8 = ssub.s32 1, %s6
  %s9 = scalar_select 0, %s8, %s6
  $region1: #{tpu_custom_call.1} parent=0
    #allocation2 [shape = 'u8[36864]{0}', space=vmem, size = 0x9000, scoped, tag = 'input window, operand 0, single buffered']
    #allocation3 [shape = 's32[1]{0}', space=sflag, size = 0x4, scoped, tag = 'scoped memory for tpu_custom_call.1']
    #allocation4 [shape = 's32[1]{0}', space=sflag, size = 0x4, scoped, tag = 'scoped memory for tpu_custom_call.1']
    #allocation5 [shape = 'u8[2359296]{0}', space=vmem, size = 0x240000, scoped, tag = 'input window, operand 1, single buffered']
    #allocation6 [shape = 's32[1]{0}', space=sflag, size = 0x4, scoped, tag = 'scoped memory for tpu_custom_call.1']
    #allocation7 [shape = 'u8[2048]{0}', space=vmem, size = 0x800, scoped, tag = 'input window, operand 2, single buffered']
    #allocation8 [shape = 'u8[131072]{0}', space=vmem, size = 0x20000, scoped, tag = 'input window, operand 3, single buffered']
    #allocation9 [shape = 's32[1]{0}', space=sflag, size = 0x4, scoped, tag = 'scoped memory for tpu_custom_call.1']
    #allocation10 [shape = 'u8[512]{0}', space=vmem, size = 0x400, scoped, tag = 'input window, operand 4, single buffered']
    #allocation11 [shape = 'u8[4096]{0}', space=vmem, size = 0x1000, scoped, tag = 'output window, operand 0, single buffered']
    %10 = vsyncpa [#allocation3], 0
    %11 = vsyncpa [#allocation6], 0
    %12 = vsyncpa [#allocation9], 0
    %13 = vsyncpa [#allocation4], 0
    // Predicated region
    $region2: #{tpu_custom_call.1} parent=1 // pred_check
      _
    $region3: #{tpu_custom_call.1} parent=1 // pred_check_branch
      %15 = sbr.rel (0) target = $region5
    $region4: #{tpu_custom_call.1} parent=1 // pred_region
      %17 = vsyncadd [#allocation3], 0
      %s19 = sshll.u32 %s0, 4
      %s20 = int_to_ptr.hbm [resolvable:$true] %s19
      %s21 = sshll.u32 [#allocation2], 4
      %s22 = int_to_ptr.vmem [resolvable:$true] %s21
      %24 = dma.hbm_to_vmem [thread:$0]  %s20, 1152, %s22, [#allocation3]
    $region5: #{tpu_custom_call.1} parent=1 // pred_fallthru
      _
    // Predicated region
    $region6: #{tpu_custom_call.1} parent=1 // pred_check
      _
    $region7: #{tpu_custom_call.1} parent=1 // pred_check_branch
      %26 = sbr.rel (0) target = $region9
    $region8: #{tpu_custom_call.1} parent=1 // pred_region
      %28 = vsyncadd [#allocation6], 0
      %s29 = sshll.u32 %s1, 4
      %s30 = int_to_ptr.hbm [resolvable:$true] %s29
      %s31 = sshll.u32 [#allocation5], 4
      %s32 = int_to_ptr.vmem [resolvable:$true] %s31
      %37 = dma.hbm_to_vmem [thread:$0]  %s30, 73728, %s32, [#allocation6], 256, 256, 16
    $region9: #{tpu_custom_call.1} parent=1 // pred_fallthru
      _
    // Predicated region
    $region10: #{tpu_custom_call.1} parent=1 // pred_check
      _
    $region11: #{tpu_custom_call.1} parent=1 // pred_check_branch
      %39 = sbr.rel (0) target = $region13
    $region12: #{tpu_custom_call.1} parent=1 // pred_region
      %41 = vsyncadd [#allocation6], 0
      %s43 = sshll.u32 %s2, 4
      %s44 = int_to_ptr.hbm [resolvable:$true] %s43
      %s45 = sshll.u32 [#allocation7], 4
      %s46 = int_to_ptr.vmem [resolvable:$true] %s45
      %48 = dma.hbm_to_vmem [thread:$0]  %s44, 64, %s46, [#allocation6]
    $region13: #{tpu_custom_call.1} parent=1 // pred_fallthru
      _
    // Predicated region
    $region14: #{tpu_custom_call.1} parent=1 // pred_check
      _
    $region15: #{tpu_custom_call.1} parent=1 // pred_check_branch
      %50 = sbr.rel (0) target = $region17
    $region16: #{tpu_custom_call.1} parent=1 // pred_region
      %52 = vsyncadd [#allocation9], 0
      %s53 = sshll.u32 %s3, 4
      %s54 = int_to_ptr.hbm [resolvable:$true] %s53
      %s55 = sshll.u32 [#allocation8], 4
      %s56 = int_to_ptr.vmem [resolvable:$true] %s55
      %61 = dma.hbm_to_vmem [thread:$0]  %s54, 4096, %s56, [#allocation9], 64, 64, 4
    $region17: #{tpu_custom_call.1} parent=1 // pred_fallthru
      _
    // Predicated region
    $region18: #{tpu_custom_call.1} parent=1 // pred_check
      _
    $region19: #{tpu_custom_call.1} parent=1 // pred_check_branch
      %63 = sbr.rel (0) target = $region21
    $region20: #{tpu_custom_call.1} parent=1 // pred_region
      %65 = vsyncadd [#allocation9], 0
      %s67 = sshll.u32 %s4, 4
      %s68 = int_to_ptr.hbm [resolvable:$true] %s67
      %s69 = sshll.u32 [#allocation10], 4
      %s70 = int_to_ptr.vmem [resolvable:$true] %s69
      %72 = dma.hbm_to_vmem [thread:$0]  %s68, 16, %s70, [#allocation9]
    $region21: #{tpu_custom_call.1} parent=1 // pred_fallthru
      _
    // Predicated region
    $region22: #{tpu_custom_call.1} parent=1 // pred_check
      _
    $region23: #{tpu_custom_call.1} parent=1 // pred_check_branch
      %74 = sbr.rel (0) target = $region25
    $region24: #{tpu_custom_call.1} parent=1 // pred_region
      %76 = dma.done [#allocation3], 1152
    $region25: #{tpu_custom_call.1} parent=1 // pred_fallthru
      _
    // Predicated region
    $region26: #{tpu_custom_call.1} parent=1 // pred_check
      _
    $region27: #{tpu_custom_call.1} parent=1 // pred_check_branch
      %78 = sbr.rel (0) target = $region29
    $region28: #{tpu_custom_call.1} parent=1 // pred_region
      %80 = dma.done [#allocation6], 73728
    $region29: #{tpu_custom_call.1} parent=1 // pred_fallthru
      _
    // Predicated region
    $region30: #{tpu_custom_call.1} parent=1 // pred_check
      _
    $region31: #{tpu_custom_call.1} parent=1 // pred_check_branch
      %82 = sbr.rel (0) target = $region33
    $region32: #{tpu_custom_call.1} parent=1 // pred_region
      %84 = dma.done [#allocation6], 64
    $region33: #{tpu_custom_call.1} parent=1 // pred_fallthru
      _
    // Predicated region
    $region34: #{tpu_custom_call.1} parent=1 // pred_check
      _
    $region35: #{tpu_custom_call.1} parent=1 // pred_check_branch
      %86 = sbr.rel (0) target = $region37
    $region36: #{tpu_custom_call.1} parent=1 // pred_region
      %88 = dma.done [#allocation9], 4096
    $region37: #{tpu_custom_call.1} parent=1 // pred_fallthru
      _
    // Predicated region
    $region38: #{tpu_custom_call.1} parent=1 // pred_check
      _
    $region39: #{tpu_custom_call.1} parent=1 // pred_check_branch
      %90 = sbr.rel (0) target = $region41
    $region40: #{tpu_custom_call.1} parent=1 // pred_region
      %92 = dma.done [#allocation9], 16
    $region41: #{tpu_custom_call.1} parent=1 // pred_fallthru
      _
    %v93 = vld [vmem:[#allocation2] sm:$0xff]
    %v94 = vld [vmem:[#allocation2 + $0x8] sm:$0xff]
    %v95 = vld [vmem:[#allocation2 + $0x10] sm:$0xff]
    %v96 = vld [vmem:[#allocation2 + $0x18] sm:$0xff]
    %v97 = vld [vmem:[#allocation2 + $0x20] sm:$0xff]
    %v98 = vld [vmem:[#allocation2 + $0x28] sm:$0xff]
    %v99 = vld [vmem:[#allocation2 + $0x30] sm:$0xff]
    %v100 = vld [vmem:[#allocation2 + $0x38] sm:$0xff]
    %v101 = vld [vmem:[#allocation2 + $0x40] sm:$0xff]
    %v102 = vld [vmem:[#allocation5] sm:$0xff]
    %v103 = vld [vmem:[#allocation5 + $0x8] sm:$0xff]
    %v104 = vld [vmem:[#allocation5 + $0x10] sm:$0xff]
    %v105 = vld [vmem:[#allocation5 + $0x18] sm:$0xff]
    %v106 = vld [vmem:[#allocation5 + $0x20] sm:$0xff]
    %v107 = vld [vmem:[#allocation5 + $0x28] sm:$0xff]
    %v108 = vld [vmem:[#allocation5 + $0x30] sm:$0xff]
    %v109 = vld [vmem:[#allocation5 + $0x38] sm:$0xff]
    %v110 = vld [vmem:[#allocation5 + $0x40] sm:$0xff]
    %v111 = vld [vmem:[#allocation5 + $0x48] sm:$0xff]
    %v112 = vld [vmem:[#allocation5 + $0x50] sm:$0xff]
    %v113 = vld [vmem:[#allocation5 + $0x58] sm:$0xff]
    %v114 = vld [vmem:[#allocation5 + $0x60] sm:$0xff]
    %v115 = vld [vmem:[#allocation5 + $0x68] sm:$0xff]
    %v116 = vld [vmem:[#allocation5 + $0x70] sm:$0xff]
    %v117 = vld [vmem:[#allocation5 + $0x78] sm:$0xff]
    %v118 = vld [vmem:[#allocation5 + $0x80] sm:$0xff]
    %v119 = vld [vmem:[#allocation5 + $0x88] sm:$0xff]
    %v120 = vld [vmem:[#allocation5 + $0x90] sm:$0xff]
    %v121 = vld [vmem:[#allocation5 + $0x98] sm:$0xff]
    %v122 = vld [vmem:[#allocation5 + $0xa0] sm:$0xff]
    %v123 = vld [vmem:[#allocation5 + $0xa8] sm:$0xff]
    %v124 = vld [vmem:[#allocation5 + $0xb0] sm:$0xff]
    %v125 = vld [vmem:[#allocation5 + $0xb8] sm:$0xff]
    %v126 = vld [vmem:[#allocation5 + $0xc0] sm:$0xff]
    %v127 = vld [vmem:[#allocation5 + $0xc8] sm:$0xff]
    %v128 = vld [vmem:[#allocation5 + $0xd0] sm:$0xff]
    %v129 = vld [vmem:[#allocation5 + $0xd8] sm:$0xff]
    %v130 = vld [vmem:[#allocation5 + $0xe0] sm:$0xff]
    %v131 = vld [vmem:[#allocation5 + $0xe8] sm:$0xff]
    %v132 = vld [vmem:[#allocation5 + $0xf0] sm:$0xff]
    %v133 = vld [vmem:[#allocation5 + $0xf8] sm:$0xff]
    %v134 = vld [vmem:[#allocation5 + $0x100] sm:$0xff]
    %v135 = vld [vmem:[#allocation5 + $0x108] sm:$0xff]
    %v136 = vld [vmem:[#allocation5 + $0x110] sm:$0xff]
    %v137 = vld [vmem:[#allocation5 + $0x118] sm:$0xff]
    %v138 = vld [vmem:[#allocation5 + $0x120] sm:$0xff]
    %v139 = vld [vmem:[#allocation5 + $0x128] sm:$0xff]
    %v140 = vld [vmem:[#allocation5 + $0x130] sm:$0xff]
    %v141 = vld [vmem:[#allocation5 + $0x138] sm:$0xff]
    %v142 = vld [vmem:[#allocation5 + $0x140] sm:$0xff]
    %v143 = vld [vmem:[#allocation5 + $0x148] sm:$0xff]
    %v144 = vld [vmem:[#allocation5 + $0x150] sm:$0xff]
    %v145 = vld [vmem:[#allocation5 + $0x158] sm:$0xff]
    %v146 = vld [vmem:[#allocation5 + $0x160] sm:$0xff]
    %v147 = vld [vmem:[#allocation5 + $0x168] sm:$0xff]
    %v148 = vld [vmem:[#allocation5 + $0x170] sm:$0xff]
    %v149 = vld [vmem:[#allocation5 + $0x178] sm:$0xff]
    %v150 = vld [vmem:[#allocation5 + $0x180] sm:$0xff]
    %v151 = vld [vmem:[#allocation5 + $0x188] sm:$0xff]
    %v152 = vld [vmem:[#allocation5 + $0x190] sm:$0xff]
    %v153 = vld [vmem:[#allocation5 + $0x198] sm:$0xff]
    %v154 = vld [vmem:[#allocation5 + $0x1a0] sm:$0xff]
    %v155 = vld [vmem:[#allocation5 + $0x1a8] sm:$0xff]
    %v156 = vld [vmem:[#allocation5 + $0x1b0] sm:$0xff]
    %v157 = vld [vmem:[#allocation5 + $0x1b8] sm:$0xff]
    %v158 = vld [vmem:[#allocation5 + $0x1c0] sm:$0xff]
    %v159 = vld [vmem:[#allocation5 + $0x1c8] sm:$0xff]
    %v160 = vld [vmem:[#allocation5 + $0x1d0] sm:$0xff]
    %v161 = vld [vmem:[#allocation5 + $0x1d8] sm:$0xff]
    %v162 = vld [vmem:[#allocation5 + $0x1e0] sm:$0xff]
    %v163 = vld [vmem:[#allocation5 + $0x1e8] sm:$0xff]
    %v164 = vld [vmem:[#allocation5 + $0x1f0] sm:$0xff]
    %v165 = vld [vmem:[#allocation5 + $0x1f8] sm:$0xff]
    %v166 = vld [vmem:[#allocation5 + $0x200] sm:$0xff]
    %v167 = vld [vmem:[#allocation5 + $0x208] sm:$0xff]
    %v168 = vld [vmem:[#allocation5 + $0x210] sm:$0xff]
    %v169 = vld [vmem:[#allocation5 + $0x218] sm:$0xff]
    %v170 = vld [vmem:[#allocation5 + $0x220] sm:$0xff]
    %v171 = vld [vmem:[#allocation5 + $0x228] sm:$0xff]
    %v172 = vld [vmem:[#allocation5 + $0x230] sm:$0xff]
    %v173 = vld [vmem:[#allocation5 + $0x238] sm:$0xff]
    %v174 = vld [vmem:[#allocation5 + $0x240] sm:$0xff]
    %v175 = vld [vmem:[#allocation5 + $0x248] sm:$0xff]
    %v176 = vld [vmem:[#allocation5 + $0x250] sm:$0xff]
    %v177 = vld [vmem:[#allocation5 + $0x258] sm:$0xff]
    %v178 = vld [vmem:[#allocation5 + $0x260] sm:$0xff]
    %v179 = vld [vmem:[#allocation5 + $0x268] sm:$0xff]
    %v180 = vld [vmem:[#allocation5 + $0x270] sm:$0xff]
    %v181 = vld [vmem:[#allocation5 + $0x278] sm:$0xff]
    %v182 = vld [vmem:[#allocation5 + $0x280] sm:$0xff]
    %v183 = vld [vmem:[#allocation5 + $0x288] sm:$0xff]
    %v184 = vld [vmem:[#allocation5 + $0x290] sm:$0xff]
    %v185 = vld [vmem:[#allocation5 + $0x298] sm:$0xff]
    %v186 = vld [vmem:[#allocation5 + $0x2a0] sm:$0xff]
    %v187 = vld [vmem:[#allocation5 + $0x2a8] sm:$0xff]
    %v188 = vld [vmem:[#allocation5 + $0x2b0] sm:$0xff]
    %v189 = vld [vmem:[#allocation5 + $0x2b8] sm:$0xff]
    %v190 = vld [vmem:[#allocation5 + $0x2c0] sm:$0xff]
    %v191 = vld [vmem:[#allocation5 + $0x2c8] sm:$0xff]
    %v192 = vld [vmem:[#allocation5 + $0x2d0] sm:$0xff]
    %v193 = vld [vmem:[#allocation5 + $0x2d8] sm:$0xff]
    %v194 = vld [vmem:[#allocation5 + $0x2e0] sm:$0xff]
    %v195 = vld [vmem:[#allocation5 + $0x2e8] sm:$0xff]
    %v196 = vld [vmem:[#allocation5 + $0x2f0] sm:$0xff]
    %v197 = vld [vmem:[#allocation5 + $0x2f8] sm:$0xff]
    %v198 = vld [vmem:[#allocation5 + $0x300] sm:$0xff]
    %v199 = vld [vmem:[#allocation5 + $0x308] sm:$0xff]
    %v200 = vld [vmem:[#allocation5 + $0x310] sm:$0xff]
    %v201 = vld [vmem:[#allocation5 + $0x318] sm:$0xff]
    %v202 = vld [vmem:[#allocation5 + $0x320] sm:$0xff]
    %v203 = vld [vmem:[#allocation5 + $0x328] sm:$0xff]
    %v204 = vld [vmem:[#allocation5 + $0x330] sm:$0xff]
    %v205 = vld [vmem:[#allocation5 + $0x338] sm:$0xff]
    %v206 = vld [vmem:[#allocation5 + $0x340] sm:$0xff]
    %v207 = vld [vmem:[#allocation5 + $0x348] sm:$0xff]
    %v208 = vld [vmem:[#allocation5 + $0x350] sm:$0xff]
    %v209 = vld [vmem:[#allocation5 + $0x358] sm:$0xff]
    %v210 = vld [vmem:[#allocation5 + $0x360] sm:$0xff]
    %v211 = vld [vmem:[#allocation5 + $0x368] sm:$0xff]
    %v212 = vld [vmem:[#allocation5 + $0x370] sm:$0xff]
    %v213 = vld [vmem:[#allocation5 + $0x378] sm:$0xff]
    %v214 = vld [vmem:[#allocation5 + $0x380] sm:$0xff]
    %v215 = vld [vmem:[#allocation5 + $0x388] sm:$0xff]
    %v216 = vld [vmem:[#allocation5 + $0x390] sm:$0xff]
    %v217 = vld [vmem:[#allocation5 + $0x398] sm:$0xff]
    %v218 = vld [vmem:[#allocation5 + $0x3a0] sm:$0xff]
    %v219 = vld [vmem:[#allocation5 + $0x3a8] sm:$0xff]
    %v220 = vld [vmem:[#allocation5 + $0x3b0] sm:$0xff]
    %v221 = vld [vmem:[#allocation5 + $0x3b8] sm:$0xff]
    %v222 = vld [vmem:[#allocation5 + $0x3c0] sm:$0xff]
    %v223 = vld [vmem:[#allocation5 + $0x3c8] sm:$0xff]
    %v224 = vld [vmem:[#allocation5 + $0x3d0] sm:$0xff]
    %v225 = vld [vmem:[#allocation5 + $0x3d8] sm:$0xff]
    %v226 = vld [vmem:[#allocation5 + $0x3e0] sm:$0xff]
    %v227 = vld [vmem:[#allocation5 + $0x3e8] sm:$0xff]
    %v228 = vld [vmem:[#allocation5 + $0x3f0] sm:$0xff]
    %v229 = vld [vmem:[#allocation5 + $0x3f8] sm:$0xff]
    %v230 = vld [vmem:[#allocation5 + $0x400] sm:$0xff]
    %v231 = vld [vmem:[#allocation5 + $0x408] sm:$0xff]
    %v232 = vld [vmem:[#allocation5 + $0x410] sm:$0xff]
    %v233 = vld [vmem:[#allocation5 + $0x418] sm:$0xff]
    %v234 = vld [vmem:[#allocation5 + $0x420] sm:$0xff]
    %v235 = vld [vmem:[#allocation5 + $0x428] sm:$0xff]
    %v236 = vld [vmem:[#allocation5 + $0x430] sm:$0xff]
    %v237 = vld [vmem:[#allocation5 + $0x438] sm:$0xff]
    %v238 = vld [vmem:[#allocation5 + $0x440] sm:$0xff]
    %v239 = vld [vmem:[#allocation5 + $0x448] sm:$0xff]
    %v240 = vld [vmem:[#allocation5 + $0x450] sm:$0xff]
    %v241 = vld [vmem:[#allocation5 + $0x458] sm:$0xff]
    %v242 = vld [vmem:[#allocation5 + $0x460] sm:$0xff]
    %v243 = vld [vmem:[#allocation5 + $0x468] sm:$0xff]
    %v244 = vld [vmem:[#allocation5 + $0x470] sm:$0xff]
    %v245 = vld [vmem:[#allocation5 + $0x478] sm:$0xff]
    %v246 = vld [vmem:[#allocation5 + $0x480] sm:$0xff]
    %v247 = vld [vmem:[#allocation5 + $0x488] sm:$0xff]
    %v248 = vld [vmem:[#allocation5 + $0x490] sm:$0xff]
    %v249 = vld [vmem:[#allocation5 + $0x498] sm:$0xff]
    %v250 = vld [vmem:[#allocation5 + $0x4a0] sm:$0xff]
    %v251 = vld [vmem:[#allocation5 + $0x4a8] sm:$0xff]
    %v252 = vld [vmem:[#allocation5 + $0x4b0] sm:$0xff]
    %v253 = vld [vmem:[#allocation5 + $0x4b8] sm:$0xff]
    %v254 = vld [vmem:[#allocation5 + $0x4c0] sm:$0xff]
    %v255 = vld [vmem:[#allocation5 + $0x4c8] sm:$0xff]
    %v256 = vld [vmem:[#allocation5 + $0x4d0] sm:$0xff]
    %v257 = vld [vmem:[#allocation5 + $0x4d8] sm:$0xff]
    %v258 = vld [vmem:[#allocation5 + $0x4e0] sm:$0xff]
    %v259 = vld [vmem:[#allocation5 + $0x4e8] sm:$0xff]
    %v260 = vld [vmem:[#allocation5 + $0x4f0] sm:$0xff]
    %v261 = vld [vmem:[#allocation5 + $0x4f8] sm:$0xff]
    %v262 = vld [vmem:[#allocation5 + $0x500] sm:$0xff]
    %v263 = vld [vmem:[#allocation5 + $0x508] sm:$0xff]
    %v264 = vld [vmem:[#allocation5 + $0x510] sm:$0xff]
    %v265 = vld [vmem:[#allocation5 + $0x518] sm:$0xff]
    %v266 = vld [vmem:[#allocation5 + $0x520] sm:$0xff]
    %v267 = vld [vmem:[#allocation5 + $0x528] sm:$0xff]
    %v268 = vld [vmem:[#allocation5 + $0x530] sm:$0xff]
    %v269 = vld [vmem:[#allocation5 + $0x538] sm:$0xff]
    %v270 = vld [vmem:[#allocation5 + $0x540] sm:$0xff]
    %v271 = vld [vmem:[#allocation5 + $0x548] sm:$0xff]
    %v272 = vld [vmem:[#allocation5 + $0x550] sm:$0xff]
    %v273 = vld [vmem:[#allocation5 + $0x558] sm:$0xff]
    %v274 = vld [vmem:[#allocation5 + $0x560] sm:$0xff]
    %v275 = vld [vmem:[#allocation5 + $0x568] sm:$0xff]
    %v276 = vld [vmem:[#allocation5 + $0x570] sm:$0xff]
    %v277 = vld [vmem:[#allocation5 + $0x578] sm:$0xff]
    %v278 = vld [vmem:[#allocation5 + $0x580] sm:$0xff]
    %v279 = vld [vmem:[#allocation5 + $0x588] sm:$0xff]
    %v280 = vld [vmem:[#allocation5 + $0x590] sm:$0xff]
    %v281 = vld [vmem:[#allocation5 + $0x598] sm:$0xff]
    %v282 = vld [vmem:[#allocation5 + $0x5a0] sm:$0xff]
    %v283 = vld [vmem:[#allocation5 + $0x5a8] sm:$0xff]
    %v284 = vld [vmem:[#allocation5 + $0x5b0] sm:$0xff]
    %v285 = vld [vmem:[#allocation5 + $0x5b8] sm:$0xff]
    %v286 = vld [vmem:[#allocation5 + $0x5c0] sm:$0xff]
    %v287 = vld [vmem:[#allocation5 + $0x5c8] sm:$0xff]
    %v288 = vld [vmem:[#allocation5 + $0x5d0] sm:$0xff]
    %v289 = vld [vmem:[#allocation5 + $0x5d8] sm:$0xff]
    %v290 = vld [vmem:[#allocation5 + $0x5e0] sm:$0xff]
    %v291 = vld [vmem:[#allocation5 + $0x5e8] sm:$0xff]
    %v292 = vld [vmem:[#allocation5 + $0x5f0] sm:$0xff]
    %v293 = vld [vmem:[#allocation5 + $0x5f8] sm:$0xff]
    %v294 = vld [vmem:[#allocation5 + $0x600] sm:$0xff]
    %v295 = vld [vmem:[#allocation5 + $0x608] sm:$0xff]
    %v296 = vld [vmem:[#allocation5 + $0x610] sm:$0xff]
    %v297 = vld [vmem:[#allocation5 + $0x618] sm:$0xff]
    %v298 = vld [vmem:[#allocation5 + $0x620] sm:$0xff]
    %v299 = vld [vmem:[#allocation5 + $0x628] sm:$0xff]
    %v300 = vld [vmem:[#allocation5 + $0x630] sm:$0xff]
    %v301 = vld [vmem:[#allocation5 + $0x638] sm:$0xff]
    %v302 = vld [vmem:[#allocation5 + $0x640] sm:$0xff]
    %v303 = vld [vmem:[#allocation5 + $0x648] sm:$0xff]
    %v304 = vld [vmem:[#allocation5 + $0x650] sm:$0xff]
    %v305 = vld [vmem:[#allocation5 + $0x658] sm:$0xff]
    %v306 = vld [vmem:[#allocation5 + $0x660] sm:$0xff]
    %v307 = vld [vmem:[#allocation5 + $0x668] sm:$0xff]
    %v308 = vld [vmem:[#allocation5 + $0x670] sm:$0xff]
    %v309 = vld [vmem:[#allocation5 + $0x678] sm:$0xff]
    %v310 = vld [vmem:[#allocation5 + $0x680] sm:$0xff]
    %v311 = vld [vmem:[#allocation5 + $0x688] sm:$0xff]
    %v312 = vld [vmem:[#allocation5 + $0x690] sm:$0xff]
    %v313 = vld [vmem:[#allocation5 + $0x698] sm:$0xff]
    %v314 = vld [vmem:[#allocation5 + $0x6a0] sm:$0xff]
    %v315 = vld [vmem:[#allocation5 + $0x6a8] sm:$0xff]
    %v316 = vld [vmem:[#allocation5 + $0x6b0] sm:$0xff]
    %v317 = vld [vmem:[#allocation5 + $0x6b8] sm:$0xff]
    %v318 = vld [vmem:[#allocation5 + $0x6c0] sm:$0xff]
    %v319 = vld [vmem:[#allocation5 + $0x6c8] sm:$0xff]
    %v320 = vld [vmem:[#allocation5 + $0x6d0] sm:$0xff]
    %v321 = vld [vmem:[#allocation5 + $0x6d8] sm:$0xff]
    %v322 = vld [vmem:[#allocation5 + $0x6e0] sm:$0xff]
    %v323 = vld [vmem:[#allocation5 + $0x6e8] sm:$0xff]
    %v324 = vld [vmem:[#allocation5 + $0x6f0] sm:$0xff]
    %v325 = vld [vmem:[#allocation5 + $0x6f8] sm:$0xff]
    %v326 = vld [vmem:[#allocation5 + $0x700] sm:$0xff]
    %v327 = vld [vmem:[#allocation5 + $0x708] sm:$0xff]
    %v328 = vld [vmem:[#allocation5 + $0x710] sm:$0xff]
    %v329 = vld [vmem:[#allocation5 + $0x718] sm:$0xff]
    %v330 = vld [vmem:[#allocation5 + $0x720] sm:$0xff]
    %v331 = vld [vmem:[#allocation5 + $0x728] sm:$0xff]
    %v332 = vld [vmem:[#allocation5 + $0x730] sm:$0xff]
    %v333 = vld [vmem:[#allocation5 + $0x738] sm:$0xff]
    %v334 = vld [vmem:[#allocation5 + $0x740] sm:$0xff]
    %v335 = vld [vmem:[#allocation5 + $0x748] sm:$0xff]
    %v336 = vld [vmem:[#allocation5 + $0x750] sm:$0xff]
    %v337 = vld [vmem:[#allocation5 + $0x758] sm:$0xff]
    %v338 = vld [vmem:[#allocation5 + $0x760] sm:$0xff]
    %v339 = vld [vmem:[#allocation5 + $0x768] sm:$0xff]
    %v340 = vld [vmem:[#allocation5 + $0x770] sm:$0xff]
    %v341 = vld [vmem:[#allocation5 + $0x778] sm:$0xff]
    %v342 = vld [vmem:[#allocation5 + $0x780] sm:$0xff]
    %v343 = vld [vmem:[#allocation5 + $0x788] sm:$0xff]
    %v344 = vld [vmem:[#allocation5 + $0x790] sm:$0xff]
    %v345 = vld [vmem:[#allocation5 + $0x798] sm:$0xff]
    %v346 = vld [vmem:[#allocation5 + $0x7a0] sm:$0xff]
    %v347 = vld [vmem:[#allocation5 + $0x7a8] sm:$0xff]
    %v348 = vld [vmem:[#allocation5 + $0x7b0] sm:$0xff]
    %v349 = vld [vmem:[#allocation5 + $0x7b8] sm:$0xff]
    %v350 = vld [vmem:[#allocation5 + $0x7c0] sm:$0xff]
    %v351 = vld [vmem:[#allocation5 + $0x7c8] sm:$0xff]
    %v352 = vld [vmem:[#allocation5 + $0x7d0] sm:$0xff]
    %v353 = vld [vmem:[#allocation5 + $0x7d8] sm:$0xff]
    %v354 = vld [vmem:[#allocation5 + $0x7e0] sm:$0xff]
    %v355 = vld [vmem:[#allocation5 + $0x7e8] sm:$0xff]
    %v356 = vld [vmem:[#allocation5 + $0x7f0] sm:$0xff]
    %v357 = vld [vmem:[#allocation5 + $0x7f8] sm:$0xff]
    %v358 = vld [vmem:[#allocation5 + $0x800] sm:$0xff]
    %v359 = vld [vmem:[#allocation5 + $0x808] sm:$0xff]
    %v360 = vld [vmem:[#allocation5 + $0x810] sm:$0xff]
    %v361 = vld [vmem:[#allocation5 + $0x818] sm:$0xff]
    %v362 = vld [vmem:[#allocation5 + $0x820] sm:$0xff]
    %v363 = vld [vmem:[#allocation5 + $0x828] sm:$0xff]
    %v364 = vld [vmem:[#allocation5 + $0x830] sm:$0xff]
    %v365 = vld [vmem:[#allocation5 + $0x838] sm:$0xff]
    %v366 = vld [vmem:[#allocation5 + $0x840] sm:$0xff]
    %v367 = vld [vmem:[#allocation5 + $0x848] sm:$0xff]
    %v368 = vld [vmem:[#allocation5 + $0x850] sm:$0xff]
    %v369 = vld [vmem:[#allocation5 + $0x858] sm:$0xff]
    %v370 = vld [vmem:[#allocation5 + $0x860] sm:$0xff]
    %v371 = vld [vmem:[#allocation5 + $0x868] sm:$0xff]
    %v372 = vld [vmem:[#allocation5 + $0x870] sm:$0xff]
    %v373 = vld [vmem:[#allocation5 + $0x878] sm:$0xff]
    %v374 = vld [vmem:[#allocation5 + $0x880] sm:$0xff]
    %v375 = vld [vmem:[#allocation5 + $0x888] sm:$0xff]
    %v376 = vld [vmem:[#allocation5 + $0x890] sm:$0xff]
    %v377 = vld [vmem:[#allocation5 + $0x898] sm:$0xff]
    %v378 = vld [vmem:[#allocation5 + $0x8a0] sm:$0xff]
    %v379 = vld [vmem:[#allocation5 + $0x8a8] sm:$0xff]
    %v380 = vld [vmem:[#allocation5 + $0x8b0] sm:$0xff]
    %v381 = vld [vmem:[#allocation5 + $0x8b8] sm:$0xff]
    %v382 = vld [vmem:[#allocation5 + $0x8c0] sm:$0xff]
    %v383 = vld [vmem:[#allocation5 + $0x8c8] sm:$0xff]
    %v384 = vld [vmem:[#allocation5 + $0x8d0] sm:$0xff]
    %v385 = vld [vmem:[#allocation5 + $0x8d8] sm:$0xff]
    %v386 = vld [vmem:[#allocation5 + $0x8e0] sm:$0xff]
    %v387 = vld [vmem:[#allocation5 + $0x8e8] sm:$0xff]
    %v388 = vld [vmem:[#allocation5 + $0x8f0] sm:$0xff]
    %v389 = vld [vmem:[#allocation5 + $0x8f8] sm:$0xff]
    %v390 = vld [vmem:[#allocation5 + $0x900] sm:$0xff]
    %v391 = vld [vmem:[#allocation5 + $0x908] sm:$0xff]
    %v392 = vld [vmem:[#allocation5 + $0x910] sm:$0xff]
    %v393 = vld [vmem:[#allocation5 + $0x918] sm:$0xff]
    %v394 = vld [vmem:[#allocation5 + $0x920] sm:$0xff]
    %v395 = vld [vmem:[#allocation5 + $0x928] sm:$0xff]
    %v396 = vld [vmem:[#allocation5 + $0x930] sm:$0xff]
    %v397 = vld [vmem:[#allocation5 + $0x938] sm:$0xff]
    %v398 = vld [vmem:[#allocation5 + $0x940] sm:$0xff]
    %v399 = vld [vmem:[#allocation5 + $0x948] sm:$0xff]
    %v400 = vld [vmem:[#allocation5 + $0x950] sm:$0xff]
    %v401 = vld [vmem:[#allocation5 + $0x958] sm:$0xff]
    %v402 = vld [vmem:[#allocation5 + $0x960] sm:$0xff]
    %v403 = vld [vmem:[#allocation5 + $0x968] sm:$0xff]
    %v404 = vld [vmem:[#allocation5 + $0x970] sm:$0xff]
    %v405 = vld [vmem:[#allocation5 + $0x978] sm:$0xff]
    %v406 = vld [vmem:[#allocation5 + $0x980] sm:$0xff]
    %v407 = vld [vmem:[#allocation5 + $0x988] sm:$0xff]
    %v408 = vld [vmem:[#allocation5 + $0x990] sm:$0xff]
    %v409 = vld [vmem:[#allocation5 + $0x998] sm:$0xff]
    %v410 = vld [vmem:[#allocation5 + $0x9a0] sm:$0xff]
    %v411 = vld [vmem:[#allocation5 + $0x9a8] sm:$0xff]
    %v412 = vld [vmem:[#allocation5 + $0x9b0] sm:$0xff]
    %v413 = vld [vmem:[#allocation5 + $0x9b8] sm:$0xff]
    %v414 = vld [vmem:[#allocation5 + $0x9c0] sm:$0xff]
    %v415 = vld [vmem:[#allocation5 + $0x9c8] sm:$0xff]
    %v416 = vld [vmem:[#allocation5 + $0x9d0] sm:$0xff]
    %v417 = vld [vmem:[#allocation5 + $0x9d8] sm:$0xff]
    %v418 = vld [vmem:[#allocation5 + $0x9e0] sm:$0xff]
    %v419 = vld [vmem:[#allocation5 + $0x9e8] sm:$0xff]
    %v420 = vld [vmem:[#allocation5 + $0x9f0] sm:$0xff]
    %v421 = vld [vmem:[#allocation5 + $0x9f8] sm:$0xff]
    %v422 = vld [vmem:[#allocation5 + $0xa00] sm:$0xff]
    %v423 = vld [vmem:[#allocation5 + $0xa08] sm:$0xff]
    %v424 = vld [vmem:[#allocation5 + $0xa10] sm:$0xff]
    %v425 = vld [vmem:[#allocation5 + $0xa18] sm:$0xff]
    %v426 = vld [vmem:[#allocation5 + $0xa20] sm:$0xff]
    %v427 = vld [vmem:[#allocation5 + $0xa28] sm:$0xff]
    %v428 = vld [vmem:[#allocation5 + $0xa30] sm:$0xff]
    %v429 = vld [vmem:[#allocation5 + $0xa38] sm:$0xff]
    %v430 = vld [vmem:[#allocation5 + $0xa40] sm:$0xff]
    %v431 = vld [vmem:[#allocation5 + $0xa48] sm:$0xff]
    %v432 = vld [vmem:[#allocation5 + $0xa50] sm:$0xff]
    %v433 = vld [vmem:[#allocation5 + $0xa58] sm:$0xff]
    %v434 = vld [vmem:[#allocation5 + $0xa60] sm:$0xff]
    %v435 = vld [vmem:[#allocation5 + $0xa68] sm:$0xff]
    %v436 = vld [vmem:[#allocation5 + $0xa70] sm:$0xff]
    %v437 = vld [vmem:[#allocation5 + $0xa78] sm:$0xff]
    %v438 = vld [vmem:[#allocation5 + $0xa80] sm:$0xff]
    %v439 = vld [vmem:[#allocation5 + $0xa88] sm:$0xff]
    %v440 = vld [vmem:[#allocation5 + $0xa90] sm:$0xff]
    %v441 = vld [vmem:[#allocation5 + $0xa98] sm:$0xff]
    %v442 = vld [vmem:[#allocation5 + $0xaa0] sm:$0xff]
    %v443 = vld [vmem:[#allocation5 + $0xaa8] sm:$0xff]
    %v444 = vld [vmem:[#allocation5 + $0xab0] sm:$0xff]
    %v445 = vld [vmem:[#allocation5 + $0xab8] sm:$0xff]
    %v446 = vld [vmem:[#allocation5 + $0xac0] sm:$0xff]
    %v447 = vld [vmem:[#allocation5 + $0xac8] sm:$0xff]
    %v448 = vld [vmem:[#allocation5 + $0xad0] sm:$0xff]
    %v449 = vld [vmem:[#allocation5 + $0xad8] sm:$0xff]
    %v450 = vld [vmem:[#allocation5 + $0xae0] sm:$0xff]
    %v451 = vld [vmem:[#allocation5 + $0xae8] sm:$0xff]
    %v452 = vld [vmem:[#allocation5 + $0xaf0] sm:$0xff]
    %v453 = vld [vmem:[#allocation5 + $0xaf8] sm:$0xff]
    %v454 = vld [vmem:[#allocation5 + $0xb00] sm:$0xff]
    %v455 = vld [vmem:[#allocation5 + $0xb08] sm:$0xff]
    %v456 = vld [vmem:[#allocation5 + $0xb10] sm:$0xff]
    %v457 = vld [vmem:[#allocation5 + $0xb18] sm:$0xff]
    %v458 = vld [vmem:[#allocation5 + $0xb20] sm:$0xff]
    %v459 = vld [vmem:[#allocation5 + $0xb28] sm:$0xff]
    %v460 = vld [vmem:[#allocation5 + $0xb30] sm:$0xff]
    %v461 = vld [vmem:[#allocation5 + $0xb38] sm:$0xff]
    %v462 = vld [vmem:[#allocation5 + $0xb40] sm:$0xff]
    %v463 = vld [vmem:[#allocation5 + $0xb48] sm:$0xff]
    %v464 = vld [vmem:[#allocation5 + $0xb50] sm:$0xff]
    %v465 = vld [vmem:[#allocation5 + $0xb58] sm:$0xff]
    %v466 = vld [vmem:[#allocation5 + $0xb60] sm:$0xff]
    %v467 = vld [vmem:[#allocation5 + $0xb68] sm:$0xff]
    %v468 = vld [vmem:[#allocation5 + $0xb70] sm:$0xff]
    %v469 = vld [vmem:[#allocation5 + $0xb78] sm:$0xff]
    %v470 = vld [vmem:[#allocation5 + $0xb80] sm:$0xff]
    %v471 = vld [vmem:[#allocation5 + $0xb88] sm:$0xff]
    %v472 = vld [vmem:[#allocation5 + $0xb90] sm:$0xff]
    %v473 = vld [vmem:[#allocation5 + $0xb98] sm:$0xff]
    %v474 = vld [vmem:[#allocation5 + $0xba0] sm:$0xff]
    %v475 = vld [vmem:[#allocation5 + $0xba8] sm:$0xff]
    %v476 = vld [vmem:[#allocation5 + $0xbb0] sm:$0xff]
    %v477 = vld [vmem:[#allocation5 + $0xbb8] sm:$0xff]
    %v478 = vld [vmem:[#allocation5 + $0xbc0] sm:$0xff]
    %v479 = vld [vmem:[#allocation5 + $0xbc8] sm:$0xff]
    %v480 = vld [vmem:[#allocation5 + $0xbd0] sm:$0xff]
    %v481 = vld [vmem:[#allocation5 + $0xbd8] sm:$0xff]
    %v482 = vld [vmem:[#allocation5 + $0xbe0] sm:$0xff]
    %v483 = vld [vmem:[#allocation5 + $0xbe8] sm:$0xff]
    %v484 = vld [vmem:[#allocation5 + $0xbf0] sm:$0xff]
    %v485 = vld [vmem:[#allocation5 + $0xbf8] sm:$0xff]
    %v486 = vld [vmem:[#allocation5 + $0xc00] sm:$0xff]
    %v487 = vld [vmem:[#allocation5 + $0xc08] sm:$0xff]
    %v488 = vld [vmem:[#allocation5 + $0xc10] sm:$0xff]
    %v489 = vld [vmem:[#allocation5 + $0xc18] sm:$0xff]
    %v490 = vld [vmem:[#allocation5 + $0xc20] sm:$0xff]
    %v491 = vld [vmem:[#allocation5 + $0xc28] sm:$0xff]
    %v492 = vld [vmem:[#allocation5 + $0xc30] sm:$0xff]
    %v493 = vld [vmem:[#allocation5 + $0xc38] sm:$0xff]
    %v494 = vld [vmem:[#allocation5 + $0xc40] sm:$0xff]
    %v495 = vld [vmem:[#allocation5 + $0xc48] sm:$0xff]
    %v496 = vld [vmem:[#allocation5 + $0xc50] sm:$0xff]
    %v497 = vld [vmem:[#allocation5 + $0xc58] sm:$0xff]
    %v498 = vld [vmem:[#allocation5 + $0xc60] sm:$0xff]
    %v499 = vld [vmem:[#allocation5 + $0xc68] sm:$0xff]
    %v500 = vld [vmem:[#allocation5 + $0xc70] sm:$0xff]
    %v501 = vld [vmem:[#allocation5 + $0xc78] sm:$0xff]
    %v502 = vld [vmem:[#allocation5 + $0xc80] sm:$0xff]
    %v503 = vld [vmem:[#allocation5 + $0xc88] sm:$0xff]
    %v504 = vld [vmem:[#allocation5 + $0xc90] sm:$0xff]
    %v505 = vld [vmem:[#allocation5 + $0xc98] sm:$0xff]
    %v506 = vld [vmem:[#allocation5 + $0xca0] sm:$0xff]
    %v507 = vld [vmem:[#allocation5 + $0xca8] sm:$0xff]
    %v508 = vld [vmem:[#allocation5 + $0xcb0] sm:$0xff]
    %v509 = vld [vmem:[#allocation5 + $0xcb8] sm:$0xff]
    %v510 = vld [vmem:[#allocation5 + $0xcc0] sm:$0xff]
    %v511 = vld [vmem:[#allocation5 + $0xcc8] sm:$0xff]
    %v512 = vld [vmem:[#allocation5 + $0xcd0] sm:$0xff]
    %v513 = vld [vmem:[#allocation5 + $0xcd8] sm:$0xff]
    %v514 = vld [vmem:[#allocation5 + $0xce0] sm:$0xff]
    %v515 = vld [vmem:[#allocation5 + $0xce8] sm:$0xff]
    %v516 = vld [vmem:[#allocation5 + $0xcf0] sm:$0xff]
    %v517 = vld [vmem:[#allocation5 + $0xcf8] sm:$0xff]
    %v518 = vld [vmem:[#allocation5 + $0xd00] sm:$0xff]
    %v519 = vld [vmem:[#allocation5 + $0xd08] sm:$0xff]
    %v520 = vld [vmem:[#allocation5 + $0xd10] sm:$0xff]
    %v521 = vld [vmem:[#allocation5 + $0xd18] sm:$0xff]
    %v522 = vld [vmem:[#allocation5 + $0xd20] sm:$0xff]
    %v523 = vld [vmem:[#allocation5 + $0xd28] sm:$0xff]
    %v524 = vld [vmem:[#allocation5 + $0xd30] sm:$0xff]
    %v525 = vld [vmem:[#allocation5 + $0xd38] sm:$0xff]
    %v526 = vld [vmem:[#allocation5 + $0xd40] sm:$0xff]
    %v527 = vld [vmem:[#allocation5 + $0xd48] sm:$0xff]
    %v528 = vld [vmem:[#allocation5 + $0xd50] sm:$0xff]
    %v529 = vld [vmem:[#allocation5 + $0xd58] sm:$0xff]
    %v530 = vld [vmem:[#allocation5 + $0xd60] sm:$0xff]
    %v531 = vld [vmem:[#allocation5 + $0xd68] sm:$0xff]
    %v532 = vld [vmem:[#allocation5 + $0xd70] sm:$0xff]
    %v533 = vld [vmem:[#allocation5 + $0xd78] sm:$0xff]
    %v534 = vld [vmem:[#allocation5 + $0xd80] sm:$0xff]
    %v535 = vld [vmem:[#allocation5 + $0xd88] sm:$0xff]
    %v536 = vld [vmem:[#allocation5 + $0xd90] sm:$0xff]
    %v537 = vld [vmem:[#allocation5 + $0xd98] sm:$0xff]
    %v538 = vld [vmem:[#allocation5 + $0xda0] sm:$0xff]
    %v539 = vld [vmem:[#allocation5 + $0xda8] sm:$0xff]
    %v540 = vld [vmem:[#allocation5 + $0xdb0] sm:$0xff]
    %v541 = vld [vmem:[#allocation5 + $0xdb8] sm:$0xff]
    %v542 = vld [vmem:[#allocation5 + $0xdc0] sm:$0xff]
    %v543 = vld [vmem:[#allocation5 + $0xdc8] sm:$0xff]
    %v544 = vld [vmem:[#allocation5 + $0xdd0] sm:$0xff]
    %v545 = vld [vmem:[#allocation5 + $0xdd8] sm:$0xff]
    %v546 = vld [vmem:[#allocation5 + $0xde0] sm:$0xff]
    %v547 = vld [vmem:[#allocation5 + $0xde8] sm:$0xff]
    %v548 = vld [vmem:[#allocation5 + $0xdf0] sm:$0xff]
    %v549 = vld [vmem:[#allocation5 + $0xdf8] sm:$0xff]
    %v550 = vld [vmem:[#allocation5 + $0xe00] sm:$0xff]
    %v551 = vld [vmem:[#allocation5 + $0xe08] sm:$0xff]
    %v552 = vld [vmem:[#allocation5 + $0xe10] sm:$0xff]
    %v553 = vld [vmem:[#allocation5 + $0xe18] sm:$0xff]
    %v554 = vld [vmem:[#allocation5 + $0xe20] sm:$0xff]
    %v555 = vld [vmem:[#allocation5 + $0xe28] sm:$0xff]
    %v556 = vld [vmem:[#allocation5 + $0xe30] sm:$0xff]
    %v557 = vld [vmem:[#allocation5 + $0xe38] sm:$0xff]
    %v558 = vld [vmem:[#allocation5 + $0xe40] sm:$0xff]
    %v559 = vld [vmem:[#allocation5 + $0xe48] sm:$0xff]
    %v560 = vld [vmem:[#allocation5 + $0xe50] sm:$0xff]
    %v561 = vld [vmem:[#allocation5 + $0xe58] sm:$0xff]
    %v562 = vld [vmem:[#allocation5 + $0xe60] sm:$0xff]
    %v563 = vld [vmem:[#allocation5 + $0xe68] sm:$0xff]
    %v564 = vld [vmem:[#allocation5 + $0xe70] sm:$0xff]
    %v565 = vld [vmem:[#allocation5 + $0xe78] sm:$0xff]
    %v566 = vld [vmem:[#allocation5 + $0xe80] sm:$0xff]
    %v567 = vld [vmem:[#allocation5 + $0xe88] sm:$0xff]
    %v568 = vld [vmem:[#allocation5 + $0xe90] sm:$0xff]
    %v569 = vld [vmem:[#allocation5 + $0xe98] sm:$0xff]
    %v570 = vld [vmem:[#allocation5 + $0xea0] sm:$0xff]
    %v571 = vld [vmem:[#allocation5 + $0xea8] sm:$0xff]
    %v572 = vld [vmem:[#allocation5 + $0xeb0] sm:$0xff]
    %v573 = vld [vmem:[#allocation5 + $0xeb8] sm:$0xff]
    %v574 = vld [vmem:[#allocation5 + $0xec0] sm:$0xff]
    %v575 = vld [vmem:[#allocation5 + $0xec8] sm:$0xff]
    %v576 = vld [vmem:[#allocation5 + $0xed0] sm:$0xff]
    %v577 = vld [vmem:[#allocation5 + $0xed8] sm:$0xff]
    %v578 = vld [vmem:[#allocation5 + $0xee0] sm:$0xff]
    %v579 = vld [vmem:[#allocation5 + $0xee8] sm:$0xff]
    %v580 = vld [vmem:[#allocation5 + $0xef0] sm:$0xff]
    %v581 = vld [vmem:[#allocation5 + $0xef8] sm:$0xff]
    %v582 = vld [vmem:[#allocation5 + $0xf00] sm:$0xff]
    %v583 = vld [vmem:[#allocation5 + $0xf08] sm:$0xff]
    %v584 = vld [vmem:[#allocation5 + $0xf10] sm:$0xff]
    %v585 = vld [vmem:[#allocation5 + $0xf18] sm:$0xff]
    %v586 = vld [vmem:[#allocation5 + $0xf20] sm:$0xff]
    %v587 = vld [vmem:[#allocation5 + $0xf28] sm:$0xff]
    %v588 = vld [vmem:[#allocation5 + $0xf30] sm:$0xff]
    %v589 = vld [vmem:[#allocation5 + $0xf38] sm:$0xff]
    %v590 = vld [vmem:[#allocation5 + $0xf40] sm:$0xff]
    %v591 = vld [vmem:[#allocation5 + $0xf48] sm:$0xff]
    %v592 = vld [vmem:[#allocation5 + $0xf50] sm:$0xff]
    %v593 = vld [vmem:[#allocation5 + $0xf58] sm:$0xff]
    %v594 = vld [vmem:[#allocation5 + $0xf60] sm:$0xff]
    %v595 = vld [vmem:[#allocation5 + $0xf68] sm:$0xff]
    %v596 = vld [vmem:[#allocation5 + $0xf70] sm:$0xff]
    %v597 = vld [vmem:[#allocation5 + $0xf78] sm:$0xff]
    %v598 = vld [vmem:[#allocation5 + $0xf80] sm:$0xff]
    %v599 = vld [vmem:[#allocation5 + $0xf88] sm:$0xff]
    %v600 = vld [vmem:[#allocation5 + $0xf90] sm:$0xff]
    %v601 = vld [vmem:[#allocation5 + $0xf98] sm:$0xff]
    %v602 = vld [vmem:[#allocation5 + $0xfa0] sm:$0xff]
    %v603 = vld [vmem:[#allocation5 + $0xfa8] sm:$0xff]
    %v604 = vld [vmem:[#allocation5 + $0xfb0] sm:$0xff]
    %v605 = vld [vmem:[#allocation5 + $0xfb8] sm:$0xff]
    %v606 = vld [vmem:[#allocation5 + $0xfc0] sm:$0xff]
    %v607 = vld [vmem:[#allocation5 + $0xfc8] sm:$0xff]
    %v608 = vld [vmem:[#allocation5 + $0xfd0] sm:$0xff]
    %v609 = vld [vmem:[#allocation5 + $0xfd8] sm:$0xff]
    %v610 = vld [vmem:[#allocation5 + $0xfe0] sm:$0xff]
    %v611 = vld [vmem:[#allocation5 + $0xfe8] sm:$0xff]
    %v612 = vld [vmem:[#allocation5 + $0xff0] sm:$0xff]
    %v613 = vld [vmem:[#allocation5 + $0xff8] sm:$0xff]
    %v614 = vld [vmem:[#allocation5 + $0x1000] sm:$0xff]
    %v615 = vld [vmem:[#allocation5 + $0x1008] sm:$0xff]
    %v616 = vld [vmem:[#allocation5 + $0x1010] sm:$0xff]
    %v617 = vld [vmem:[#allocation5 + $0x1018] sm:$0xff]
    %v618 = vld [vmem:[#allocation5 + $0x1020] sm:$0xff]
    %v619 = vld [vmem:[#allocation5 + $0x1028] sm:$0xff]
    %v620 = vld [vmem:[#allocation5 + $0x1030] sm:$0xff]
    %v621 = vld [vmem:[#allocation5 + $0x1038] sm:$0xff]
    %v622 = vld [vmem:[#allocation5 + $0x1040] sm:$0xff]
    %v623 = vld [vmem:[#allocation5 + $0x1048] sm:$0xff]
    %v624 = vld [vmem:[#allocation5 + $0x1050] sm:$0xff]
    %v625 = vld [vmem:[#allocation5 + $0x1058] sm:$0xff]
    %v626 = vld [vmem:[#allocation5 + $0x1060] sm:$0xff]
    %v627 = vld [vmem:[#allocation5 + $0x1068] sm:$0xff]
    %v628 = vld [vmem:[#allocation5 + $0x1070] sm:$0xff]
    %v629 = vld [vmem:[#allocation5 + $0x1078] sm:$0xff]
    %v630 = vld [vmem:[#allocation5 + $0x1080] sm:$0xff]
    %v631 = vld [vmem:[#allocation5 + $0x1088] sm:$0xff]
    %v632 = vld [vmem:[#allocation5 + $0x1090] sm:$0xff]
    %v633 = vld [vmem:[#allocation5 + $0x1098] sm:$0xff]
    %v634 = vld [vmem:[#allocation5 + $0x10a0] sm:$0xff]
    %v635 = vld [vmem:[#allocation5 + $0x10a8] sm:$0xff]
    %v636 = vld [vmem:[#allocation5 + $0x10b0] sm:$0xff]
    %v637 = vld [vmem:[#allocation5 + $0x10b8] sm:$0xff]
    %v638 = vld [vmem:[#allocation5 + $0x10c0] sm:$0xff]
    %v639 = vld [vmem:[#allocation5 + $0x10c8] sm:$0xff]
    %v640 = vld [vmem:[#allocation5 + $0x10d0] sm:$0xff]
    %v641 = vld [vmem:[#allocation5 + $0x10d8] sm:$0xff]
    %v642 = vld [vmem:[#allocation5 + $0x10e0] sm:$0xff]
    %v643 = vld [vmem:[#allocation5 + $0x10e8] sm:$0xff]
    %v644 = vld [vmem:[#allocation5 + $0x10f0] sm:$0xff]
    %v645 = vld [vmem:[#allocation5 + $0x10f8] sm:$0xff]
    %v646 = vld [vmem:[#allocation5 + $0x1100] sm:$0xff]
    %v647 = vld [vmem:[#allocation5 + $0x1108] sm:$0xff]
    %v648 = vld [vmem:[#allocation5 + $0x1110] sm:$0xff]
    %v649 = vld [vmem:[#allocation5 + $0x1118] sm:$0xff]
    %v650 = vld [vmem:[#allocation5 + $0x1120] sm:$0xff]
    %v651 = vld [vmem:[#allocation5 + $0x1128] sm:$0xff]
    %v652 = vld [vmem:[#allocation5 + $0x1130] sm:$0xff]
    %v653 = vld [vmem:[#allocation5 + $0x1138] sm:$0xff]
    %v654 = vld [vmem:[#allocation5 + $0x1140] sm:$0xff]
    %v655 = vld [vmem:[#allocation5 + $0x1148] sm:$0xff]
    %v656 = vld [vmem:[#allocation5 + $0x1150] sm:$0xff]
    %v657 = vld [vmem:[#allocation5 + $0x1158] sm:$0xff]
    %v658 = vld [vmem:[#allocation5 + $0x1160] sm:$0xff]
    %v659 = vld [vmem:[#allocation5 + $0x1168] sm:$0xff]
    %v660 = vld [vmem:[#allocation5 + $0x1170] sm:$0xff]
    %v661 = vld [vmem:[#allocation5 + $0x1178] sm:$0xff]
    %v662 = vld [vmem:[#allocation5 + $0x1180] sm:$0xff]
    %v663 = vld [vmem:[#allocation5 + $0x1188] sm:$0xff]
    %v664 = vld [vmem:[#allocation5 + $0x1190] sm:$0xff]
    %v665 = vld [vmem:[#allocation5 + $0x1198] sm:$0xff]
    %v666 = vld [vmem:[#allocation5 + $0x11a0] sm:$0xff]
    %v667 = vld [vmem:[#allocation5 + $0x11a8] sm:$0xff]
    %v668 = vld [vmem:[#allocation5 + $0x11b0] sm:$0xff]
    %v669 = vld [vmem:[#allocation5 + $0x11b8] sm:$0xff]
    %v670 = vld [vmem:[#allocation5 + $0x11c0] sm:$0xff]
    %v671 = vld [vmem:[#allocation5 + $0x11c8] sm:$0xff]
    %v672 = vld [vmem:[#allocation5 + $0x11d0] sm:$0xff]
    %v673 = vld [vmem:[#allocation5 + $0x11d8] sm:$0xff]
    %v674 = vld [vmem:[#allocation5 + $0x11e0] sm:$0xff]
    %v675 = vld [vmem:[#allocation5 + $0x11e8] sm:$0xff]
    %v676 = vld [vmem:[#allocation5 + $0x11f0] sm:$0xff]
    %v677 = vld [vmem:[#allocation5 + $0x11f8] sm:$0xff]
    %v678 = vld [vmem:[#allocation7] sm:$0xf]
    %v680 = vperm.slane %v678, 0
    %v681 = vperm.slane %v678, 1
    %v682 = vperm.slane %v678, 2
    %v683 = vperm.slane %v678, 3
    %v697 = vunpack.c.l.b16 %v93
    %v698 = vunpack.c.h.b16 %v93
    %v699 = vunpack.c.l.b16 %v94
    %v700 = vunpack.c.h.b16 %v94
    %v701 = vunpack.c.l.b16 %v95
    %v702 = vunpack.c.h.b16 %v95
    %v703 = vunpack.c.l.b16 %v96
    %v704 = vunpack.c.h.b16 %v96
    %v705 = vunpack.c.l.b16 %v97
    %v706 = vunpack.c.h.b16 %v97
    %v707 = vunpack.c.l.b16 %v98
    %v708 = vunpack.c.h.b16 %v98
    %v709 = vunpack.c.l.b16 %v99
    %v710 = vunpack.c.h.b16 %v99
    %v711 = vunpack.c.l.b16 %v100
    %v712 = vunpack.c.h.b16 %v100
    %v713 = vunpack.c.l.b16 %v101
    %v714 = vunpack.c.h.b16 %v101
    %v715 = vpack.c.b16 %v697, %v697
    %v716 = vpack.c.b16 %v698, %v698
    %v717 = vpack.c.b16 %v699, %v699
    %v718 = vpack.c.b16 %v700, %v700
    %v719 = vpack.c.b16 %v701, %v701
    %v720 = vpack.c.b16 %v702, %v702
    %v721 = vpack.c.b16 %v703, %v703
    %v722 = vpack.c.b16 %v704, %v704
    %v723 = vpack.c.b16 %v705, %v705
    %v724 = vpack.c.b16 %v706, %v706
    %v725 = vpack.c.b16 %v707, %v707
    %v726 = vpack.c.b16 %v708, %v708
    %v727 = vpack.c.b16 %v709, %v709
    %v728 = vpack.c.b16 %v710, %v710
    %v729 = vpack.c.b16 %v711, %v711
    %v730 = vpack.c.b16 %v712, %v712
    %v731 = vpack.c.b16 %v713, %v713
    %v732 = vpack.c.b16 %v714, %v714
    %v1327 = vunpack.c.l.b16 %v102
    %v1328 = vunpack.c.h.b16 %v102
    %v1329 = vunpack.c.l.b16 %v103
    %v1330 = vunpack.c.h.b16 %v103
    %v1331 = vunpack.c.l.b16 %v104
    %v1332 = vunpack.c.h.b16 %v104
    %v1333 = vunpack.c.l.b16 %v105
    %v1334 = vunpack.c.h.b16 %v105
    %v1335 = vunpack.c.l.b16 %v106
    %v1336 = vunpack.c.h.b16 %v106
    %v1337 = vunpack.c.l.b16 %v107
    %v1338 = vunpack.c.h.b16 %v107
    %v1339 = vunpack.c.l.b16 %v108
    %v1340 = vunpack.c.h.b16 %v108
    %v1341 = vunpack.c.l.b16 %v109
    %v1342 = vunpack.c.h.b16 %v109
    %v1343 = vunpack.c.l.b16 %v110
    %v1344 = vunpack.c.h.b16 %v110
    %v1345 = vunpack.c.l.b16 %v111
    %v1346 = vunpack.c.h.b16 %v111
    %v1347 = vunpack.c.l.b16 %v112
    %v1348 = vunpack.c.h.b16 %v112
    %v1349 = vunpack.c.l.b16 %v113
    %v1350 = vunpack.c.h.b16 %v113
    %v1351 = vunpack.c.l.b16 %v114
    %v1352 = vunpack.c.h.b16 %v114
    %v1353 = vunpack.c.l.b16 %v115
    %v1354 = vunpack.c.h.b16 %v115
    %v1355 = vunpack.c.l.b16 %v116
    %v1356 = vunpack.c.h.b16 %v116
    %v1357 = vunpack.c.l.b16 %v117
    %v1358 = vunpack.c.h.b16 %v117
    %v1359 = vunpack.c.l.b16 %v118
    %v1360 = vunpack.c.h.b16 %v118
    %v1361 = vunpack.c.l.b16 %v119
    %v1362 = vunpack.c.h.b16 %v119
    %v1363 = vunpack.c.l.b16 %v120
    %v1364 = vunpack.c.h.b16 %v120
    %v1365 = vunpack.c.l.b16 %v121
    %v1366 = vunpack.c.h.b16 %v121
    %v1367 = vunpack.c.l.b16 %v122
    %v1368 = vunpack.c.h.b16 %v122
    %v1369 = vunpack.c.l.b16 %v123
    %v1370 = vunpack.c.h.b16 %v123
    %v1371 = vunpack.c.l.b16 %v124
    %v1372 = vunpack.c.h.b16 %v124
    %v1373 = vunpack.c.l.b16 %v125
    %v1374 = vunpack.c.h.b16 %v125
    %v1375 = vunpack.c.l.b16 %v126
    %v1376 = vunpack.c.h.b16 %v126
    %v1377 = vunpack.c.l.b16 %v127
    %v1378 = vunpack.c.h.b16 %v127
    %v1379 = vunpack.c.l.b16 %v128
    %v1380 = vunpack.c.h.b16 %v128
    %v1381 = vunpack.c.l.b16 %v129
    %v1382 = vunpack.c.h.b16 %v129
    %v1383 = vunpack.c.l.b16 %v130
    %v1384 = vunpack.c.h.b16 %v130
    %v1385 = vunpack.c.l.b16 %v131
    %v1386 = vunpack.c.h.b16 %v131
    %v1387 = vunpack.c.l.b16 %v132
    %v1388 = vunpack.c.h.b16 %v132
    %v1389 = vunpack.c.l.b16 %v133
    %v1390 = vunpack.c.h.b16 %v133
    %v1391 = vunpack.c.l.b16 %v134
    %v1392 = vunpack.c.h.b16 %v134
    %v1393 = vunpack.c.l.b16 %v135
    %v1394 = vunpack.c.h.b16 %v135
    %v1395 = vunpack.c.l.b16 %v136
    %v1396 = vunpack.c.h.b16 %v136
    %v1397 = vunpack.c.l.b16 %v137
    %v1398 = vunpack.c.h.b16 %v137
    %v1399 = vunpack.c.l.b16 %v138
    %v1400 = vunpack.c.h.b16 %v138
    %v1401 = vunpack.c.l.b16 %v139
    %v1402 = vunpack.c.h.b16 %v139
    %v1403 = vunpack.c.l.b16 %v140
    %v1404 = vunpack.c.h.b16 %v140
    %v1405 = vunpack.c.l.b16 %v141
    %v1406 = vunpack.c.h.b16 %v141
    %v1407 = vunpack.c.l.b16 %v142
    %v1408 = vunpack.c.h.b16 %v142
    %v1409 = vunpack.c.l.b16 %v143
    %v1410 = vunpack.c.h.b16 %v143
    %v1411 = vunpack.c.l.b16 %v144
    %v1412 = vunpack.c.h.b16 %v144
    %v1413 = vunpack.c.l.b16 %v145
    %v1414 = vunpack.c.h.b16 %v145
    %v1415 = vunpack.c.l.b16 %v146
    %v1416 = vunpack.c.h.b16 %v146
    %v1417 = vunpack.c.l.b16 %v147
    %v1418 = vunpack.c.h.b16 %v147
    %v1419 = vunpack.c.l.b16 %v148
    %v1420 = vunpack.c.h.b16 %v148
    %v1421 = vunpack.c.l.b16 %v149
    %v1422 = vunpack.c.h.b16 %v149
    %v1423 = vunpack.c.l.b16 %v150
    %v1424 = vunpack.c.h.b16 %v150
    %v1425 = vunpack.c.l.b16 %v151
    %v1426 = vunpack.c.h.b16 %v151
    %v1427 = vunpack.c.l.b16 %v152
    %v1428 = vunpack.c.h.b16 %v152
    %v1429 = vunpack.c.l.b16 %v153
    %v1430 = vunpack.c.h.b16 %v153
    %v1431 = vunpack.c.l.b16 %v154
    %v1432 = vunpack.c.h.b16 %v154
    %v1433 = vunpack.c.l.b16 %v155
    %v1434 = vunpack.c.h.b16 %v155
    %v1435 = vunpack.c.l.b16 %v156
    %v1436 = vunpack.c.h.b16 %v156
    %v1437 = vunpack.c.l.b16 %v157
    %v1438 = vunpack.c.h.b16 %v157
    %v1439 = vunpack.c.l.b16 %v158
    %v1440 = vunpack.c.h.b16 %v158
    %v1441 = vunpack.c.l.b16 %v159
    %v1442 = vunpack.c.h.b16 %v159
    %v1443 = vunpack.c.l.b16 %v160
    %v1444 = vunpack.c.h.b16 %v160
    %v1445 = vunpack.c.l.b16 %v161
    %v1446 = vunpack.c.h.b16 %v161
    %v1447 = vunpack.c.l.b16 %v162
    %v1448 = vunpack.c.h.b16 %v162
    %v1449 = vunpack.c.l.b16 %v163
    %v1450 = vunpack.c.h.b16 %v163
    %v1451 = vunpack.c.l.b16 %v164
    %v1452 = vunpack.c.h.b16 %v164
    %v1453 = vunpack.c.l.b16 %v165
    %v1454 = vunpack.c.h.b16 %v165
    %v1455 = vunpack.c.l.b16 %v166
    %v1456 = vunpack.c.h.b16 %v166
    %v1457 = vunpack.c.l.b16 %v167
    %v1458 = vunpack.c.h.b16 %v167
    %v1459 = vunpack.c.l.b16 %v168
    %v1460 = vunpack.c.h.b16 %v168
    %v1461 = vunpack.c.l.b16 %v169
    %v1462 = vunpack.c.h.b16 %v169
    %v1463 = vunpack.c.l.b16 %v170
    %v1464 = vunpack.c.h.b16 %v170
    %v1465 = vunpack.c.l.b16 %v171
    %v1466 = vunpack.c.h.b16 %v171
    %v1467 = vunpack.c.l.b16 %v172
    %v1468 = vunpack.c.h.b16 %v172
    %v1469 = vunpack.c.l.b16 %v173
    %v1470 = vunpack.c.h.b16 %v173
    %v1471 = vunpack.c.l.b16 %v174
    %v1472 = vunpack.c.h.b16 %v174
    %v1473 = vunpack.c.l.b16 %v175
    %v1474 = vunpack.c.h.b16 %v175
    %v1475 = vunpack.c.l.b16 %v176
    %v1476 = vunpack.c.h.b16 %v176
    %v1477 = vunpack.c.l.b16 %v177
    %v1478 = vunpack.c.h.b16 %v177
    %v1479 = vunpack.c.l.b16 %v178
    %v1480 = vunpack.c.h.b16 %v178
    %v1481 = vunpack.c.l.b16 %v179
    %v1482 = vunpack.c.h.b16 %v179
    %v1483 = vunpack.c.l.b16 %v180
    %v1484 = vunpack.c.h.b16 %v180
    %v1485 = vunpack.c.l.b16 %v181
    %v1486 = vunpack.c.h.b16 %v181
    %v1487 = vunpack.c.l.b16 %v182
    %v1488 = vunpack.c.h.b16 %v182
    %v1489 = vunpack.c.l.b16 %v183
    %v1490 = vunpack.c.h.b16 %v183
    %v1491 = vunpack.c.l.b16 %v184
    %v1492 = vunpack.c.h.b16 %v184
    %v1493 = vunpack.c.l.b16 %v185
    %v1494 = vunpack.c.h.b16 %v185
    %v1495 = vunpack.c.l.b16 %v186
    %v1496 = vunpack.c.h.b16 %v186
    %v1497 = vunpack.c.l.b16 %v187
    %v1498 = vunpack.c.h.b16 %v187
    %v1499 = vunpack.c.l.b16 %v188
    %v1500 = vunpack.c.h.b16 %v188
    %v1501 = vunpack.c.l.b16 %v189
    %v1502 = vunpack.c.h.b16 %v189
    %v1503 = vunpack.c.l.b16 %v190
    %v1504 = vunpack.c.h.b16 %v190
    %v1505 = vunpack.c.l.b16 %v191
    %v1506 = vunpack.c.h.b16 %v191
    %v1507 = vunpack.c.l.b16 %v192
    %v1508 = vunpack.c.h.b16 %v192
    %v1509 = vunpack.c.l.b16 %v193
    %v1510 = vunpack.c.h.b16 %v193
    %v1511 = vunpack.c.l.b16 %v194
    %v1512 = vunpack.c.h.b16 %v194
    %v1513 = vunpack.c.l.b16 %v195
    %v1514 = vunpack.c.h.b16 %v195
    %v1515 = vunpack.c.l.b16 %v196
    %v1516 = vunpack.c.h.b16 %v196
    %v1517 = vunpack.c.l.b16 %v197
    %v1518 = vunpack.c.h.b16 %v197
    %v1519 = vunpack.c.l.b16 %v198
    %v1520 = vunpack.c.h.b16 %v198
    %v1521 = vunpack.c.l.b16 %v199
    %v1522 = vunpack.c.h.b16 %v199
    %v1523 = vunpack.c.l.b16 %v200
    %v1524 = vunpack.c.h.b16 %v200
    %v1525 = vunpack.c.l.b16 %v201
    %v1526 = vunpack.c.h.b16 %v201
    %v1527 = vunpack.c.l.b16 %v202
    %v1528 = vunpack.c.h.b16 %v202
    %v1529 = vunpack.c.l.b16 %v203
    %v1530 = vunpack.c.h.b16 %v203
    %v1531 = vunpack.c.l.b16 %v204
    %v1532 = vunpack.c.h.b16 %v204
    %v1533 = vunpack.c.l.b16 %v205
    %v1534 = vunpack.c.h.b16 %v205
    %v1535 = vunpack.c.l.b16 %v206
    %v1536 = vunpack.c.h.b16 %v206
    %v1537 = vunpack.c.l.b16 %v207
    %v1538 = vunpack.c.h.b16 %v207
    %v1539 = vunpack.c.l.b16 %v208
    %v1540 = vunpack.c.h.b16 %v208
    %v1541 = vunpack.c.l.b16 %v209
    %v1542 = vunpack.c.h.b16 %v209
    %v1543 = vunpack.c.l.b16 %v210
    %v1544 = vunpack.c.h.b16 %v210
    %v1545 = vunpack.c.l.b16 %v211
    %v1546 = vunpack.c.h.b16 %v211
    %v1547 = vunpack.c.l.b16 %v212
    %v1548 = vunpack.c.h.b16 %v212
    %v1549 = vunpack.c.l.b16 %v213
    %v1550 = vunpack.c.h.b16 %v213
    %v1551 = vunpack.c.l.b16 %v214
    %v1552 = vunpack.c.h.b16 %v214
    %v1553 = vunpack.c.l.b16 %v215
    %v1554 = vunpack.c.h.b16 %v215
    %v1555 = vunpack.c.l.b16 %v216
    %v1556 = vunpack.c.h.b16 %v216
    %v1557 = vunpack.c.l.b16 %v217
    %v1558 = vunpack.c.h.b16 %v217
    %v1559 = vunpack.c.l.b16 %v218
    %v1560 = vunpack.c.h.b16 %v218
    %v1561 = vunpack.c.l.b16 %v219
    %v1562 = vunpack.c.h.b16 %v219
    %v1563 = vunpack.c.l.b16 %v220
    %v1564 = vunpack.c.h.b16 %v220
    %v1565 = vunpack.c.l.b16 %v221
    %v1566 = vunpack.c.h.b16 %v221
    %v1567 = vunpack.c.l.b16 %v222
    %v1568 = vunpack.c.h.b16 %v222
    %v1569 = vunpack.c.l.b16 %v223
    %v1570 = vunpack.c.h.b16 %v223
    %v1571 = vunpack.c.l.b16 %v224
    %v1572 = vunpack.c.h.b16 %v224
    %v1573 = vunpack.c.l.b16 %v225
    %v1574 = vunpack.c.h.b16 %v225
    %v1575 = vunpack.c.l.b16 %v226
    %v1576 = vunpack.c.h.b16 %v226
    %v1577 = vunpack.c.l.b16 %v227
    %v1578 = vunpack.c.h.b16 %v227
    %v1579 = vunpack.c.l.b16 %v228
    %v1580 = vunpack.c.h.b16 %v228
    %v1581 = vunpack.c.l.b16 %v229
    %v1582 = vunpack.c.h.b16 %v229
    %v1583 = vunpack.c.l.b16 %v230
    %v1584 = vunpack.c.h.b16 %v230
    %v1585 = vunpack.c.l.b16 %v231
    %v1586 = vunpack.c.h.b16 %v231
    %v1587 = vunpack.c.l.b16 %v232
    %v1588 = vunpack.c.h.b16 %v232
    %v1589 = vunpack.c.l.b16 %v233
    %v1590 = vunpack.c.h.b16 %v233
    %v1591 = vunpack.c.l.b16 %v234
    %v1592 = vunpack.c.h.b16 %v234
    %v1593 = vunpack.c.l.b16 %v235
    %v1594 = vunpack.c.h.b16 %v235
    %v1595 = vunpack.c.l.b16 %v236
    %v1596 = vunpack.c.h.b16 %v236
    %v1597 = vunpack.c.l.b16 %v237
    %v1598 = vunpack.c.h.b16 %v237
    %v1599 = vunpack.c.l.b16 %v238
    %v1600 = vunpack.c.h.b16 %v238
    %v1601 = vunpack.c.l.b16 %v239
    %v1602 = vunpack.c.h.b16 %v239
    %v1603 = vunpack.c.l.b16 %v240
    %v1604 = vunpack.c.h.b16 %v240
    %v1605 = vunpack.c.l.b16 %v241
    %v1606 = vunpack.c.h.b16 %v241
    %v1607 = vunpack.c.l.b16 %v242
    %v1608 = vunpack.c.h.b16 %v242
    %v1609 = vunpack.c.l.b16 %v243
    %v1610 = vunpack.c.h.b16 %v243
    %v1611 = vunpack.c.l.b16 %v244
    %v1612 = vunpack.c.h.b16 %v244
    %v1613 = vunpack.c.l.b16 %v245
    %v1614 = vunpack.c.h.b16 %v245
    %v1615 = vunpack.c.l.b16 %v246
    %v1616 = vunpack.c.h.b16 %v246
    %v1617 = vunpack.c.l.b16 %v247
    %v1618 = vunpack.c.h.b16 %v247
    %v1619 = vunpack.c.l.b16 %v248
    %v1620 = vunpack.c.h.b16 %v248
    %v1621 = vunpack.c.l.b16 %v249
    %v1622 = vunpack.c.h.b16 %v249
    %v1623 = vunpack.c.l.b16 %v250
    %v1624 = vunpack.c.h.b16 %v250
    %v1625 = vunpack.c.l.b16 %v251
    %v1626 = vunpack.c.h.b16 %v251
    %v1627 = vunpack.c.l.b16 %v252
    %v1628 = vunpack.c.h.b16 %v252
    %v1629 = vunpack.c.l.b16 %v253
    %v1630 = vunpack.c.h.b16 %v253
    %v1631 = vunpack.c.l.b16 %v254
    %v1632 = vunpack.c.h.b16 %v254
    %v1633 = vunpack.c.l.b16 %v255
    %v1634 = vunpack.c.h.b16 %v255
    %v1635 = vunpack.c.l.b16 %v256
    %v1636 = vunpack.c.h.b16 %v256
    %v1637 = vunpack.c.l.b16 %v257
    %v1638 = vunpack.c.h.b16 %v257
    %v1639 = vunpack.c.l.b16 %v258
    %v1640 = vunpack.c.h.b16 %v258
    %v1641 = vunpack.c.l.b16 %v259
    %v1642 = vunpack.c.h.b16 %v259
    %v1643 = vunpack.c.l.b16 %v260
    %v1644 = vunpack.c.h.b16 %v260
    %v1645 = vunpack.c.l.b16 %v261
    %v1646 = vunpack.c.h.b16 %v261
    %v1647 = vunpack.c.l.b16 %v262
    %v1648 = vunpack.c.h.b16 %v262
    %v1649 = vunpack.c.l.b16 %v263
    %v1650 = vunpack.c.h.b16 %v263
    %v1651 = vunpack.c.l.b16 %v264
    %v1652 = vunpack.c.h.b16 %v264
    %v1653 = vunpack.c.l.b16 %v265
    %v1654 = vunpack.c.h.b16 %v265
    %v1655 = vunpack.c.l.b16 %v266
    %v1656 = vunpack.c.h.b16 %v266
    %v1657 = vunpack.c.l.b16 %v267
    %v1658 = vunpack.c.h.b16 %v267
    %v1659 = vunpack.c.l.b16 %v268
    %v1660 = vunpack.c.h.b16 %v268
    %v1661 = vunpack.c.l.b16 %v269
    %v1662 = vunpack.c.h.b16 %v269
    %v1663 = vunpack.c.l.b16 %v270
    %v1664 = vunpack.c.h.b16 %v270
    %v1665 = vunpack.c.l.b16 %v271
    %v1666 = vunpack.c.h.b16 %v271
    %v1667 = vunpack.c.l.b16 %v272
    %v1668 = vunpack.c.h.b16 %v272
    %v1669 = vunpack.c.l.b16 %v273
    %v1670 = vunpack.c.h.b16 %v273
    %v1671 = vunpack.c.l.b16 %v274
    %v1672 = vunpack.c.h.b16 %v274
    %v1673 = vunpack.c.l.b16 %v275
    %v1674 = vunpack.c.h.b16 %v275
    %v1675 = vunpack.c.l.b16 %v276
    %v1676 = vunpack.c.h.b16 %v276
    %v1677 = vunpack.c.l.b16 %v277
    %v1678 = vunpack.c.h.b16 %v277
    %v1679 = vunpack.c.l.b16 %v278
    %v1680 = vunpack.c.h.b16 %v278
    %v1681 = vunpack.c.l.b16 %v279
    %v1682 = vunpack.c.h.b16 %v279
    %v1683 = vunpack.c.l.b16 %v280
    %v1684 = vunpack.c.h.b16 %v280
    %v1685 = vunpack.c.l.b16 %v281
    %v1686 = vunpack.c.h.b16 %v281
    %v1687 = vunpack.c.l.b16 %v282
    %v1688 = vunpack.c.h.b16 %v282
    %v1689 = vunpack.c.l.b16 %v283
    %v1690 = vunpack.c.h.b16 %v283
    %v1691 = vunpack.c.l.b16 %v284
    %v1692 = vunpack.c.h.b16 %v284
    %v1693 = vunpack.c.l.b16 %v285
    %v1694 = vunpack.c.h.b16 %v285
    %v1695 = vunpack.c.l.b16 %v286
    %v1696 = vunpack.c.h.b16 %v286
    %v1697 = vunpack.c.l.b16 %v287
    %v1698 = vunpack.c.h.b16 %v287
    %v1699 = vunpack.c.l.b16 %v288
    %v1700 = vunpack.c.h.b16 %v288
    %v1701 = vunpack.c.l.b16 %v289
    %v1702 = vunpack.c.h.b16 %v289
    %v1703 = vunpack.c.l.b16 %v290
    %v1704 = vunpack.c.h.b16 %v290
    %v1705 = vunpack.c.l.b16 %v291
    %v1706 = vunpack.c.h.b16 %v291
    %v1707 = vunpack.c.l.b16 %v292
    %v1708 = vunpack.c.h.b16 %v292
    %v1709 = vunpack.c.l.b16 %v293
    %v1710 = vunpack.c.h.b16 %v293
    %v1711 = vunpack.c.l.b16 %v294
    %v1712 = vunpack.c.h.b16 %v294
    %v1713 = vunpack.c.l.b16 %v295
    %v1714 = vunpack.c.h.b16 %v295
    %v1715 = vunpack.c.l.b16 %v296
    %v1716 = vunpack.c.h.b16 %v296
    %v1717 = vunpack.c.l.b16 %v297
    %v1718 = vunpack.c.h.b16 %v297
    %v1719 = vunpack.c.l.b16 %v298
    %v1720 = vunpack.c.h.b16 %v298
    %v1721 = vunpack.c.l.b16 %v299
    %v1722 = vunpack.c.h.b16 %v299
    %v1723 = vunpack.c.l.b16 %v300
    %v1724 = vunpack.c.h.b16 %v300
    %v1725 = vunpack.c.l.b16 %v301
    %v1726 = vunpack.c.h.b16 %v301
    %v1727 = vunpack.c.l.b16 %v302
    %v1728 = vunpack.c.h.b16 %v302
    %v1729 = vunpack.c.l.b16 %v303
    %v1730 = vunpack.c.h.b16 %v303
    %v1731 = vunpack.c.l.b16 %v304
    %v1732 = vunpack.c.h.b16 %v304
    %v1733 = vunpack.c.l.b16 %v305
    %v1734 = vunpack.c.h.b16 %v305
    %v1735 = vunpack.c.l.b16 %v306
    %v1736 = vunpack.c.h.b16 %v306
    %v1737 = vunpack.c.l.b16 %v307
    %v1738 = vunpack.c.h.b16 %v307
    %v1739 = vunpack.c.l.b16 %v308
    %v1740 = vunpack.c.h.b16 %v308
    %v1741 = vunpack.c.l.b16 %v309
    %v1742 = vunpack.c.h.b16 %v309
    %v1743 = vunpack.c.l.b16 %v310
    %v1744 = vunpack.c.h.b16 %v310
    %v1745 = vunpack.c.l.b16 %v311
    %v1746 = vunpack.c.h.b16 %v311
    %v1747 = vunpack.c.l.b16 %v312
    %v1748 = vunpack.c.h.b16 %v312
    %v1749 = vunpack.c.l.b16 %v313
    %v1750 = vunpack.c.h.b16 %v313
    %v1751 = vunpack.c.l.b16 %v314
    %v1752 = vunpack.c.h.b16 %v314
    %v1753 = vunpack.c.l.b16 %v315
    %v1754 = vunpack.c.h.b16 %v315
    %v1755 = vunpack.c.l.b16 %v316
    %v1756 = vunpack.c.h.b16 %v316
    %v1757 = vunpack.c.l.b16 %v317
    %v1758 = vunpack.c.h.b16 %v317
    %v1759 = vunpack.c.l.b16 %v318
    %v1760 = vunpack.c.h.b16 %v318
    %v1761 = vunpack.c.l.b16 %v319
    %v1762 = vunpack.c.h.b16 %v319
    %v1763 = vunpack.c.l.b16 %v320
    %v1764 = vunpack.c.h.b16 %v320
    %v1765 = vunpack.c.l.b16 %v321
    %v1766 = vunpack.c.h.b16 %v321
    %v1767 = vunpack.c.l.b16 %v322
    %v1768 = vunpack.c.h.b16 %v322
    %v1769 = vunpack.c.l.b16 %v323
    %v1770 = vunpack.c.h.b16 %v323
    %v1771 = vunpack.c.l.b16 %v324
    %v1772 = vunpack.c.h.b16 %v324
    %v1773 = vunpack.c.l.b16 %v325
    %v1774 = vunpack.c.h.b16 %v325
    %v1775 = vunpack.c.l.b16 %v326
    %v1776 = vunpack.c.h.b16 %v326
    %v1777 = vunpack.c.l.b16 %v327
    %v1778 = vunpack.c.h.b16 %v327
    %v1779 = vunpack.c.l.b16 %v328
    %v1780 = vunpack.c.h.b16 %v328
    %v1781 = vunpack.c.l.b16 %v329
    %v1782 = vunpack.c.h.b16 %v329
    %v1783 = vunpack.c.l.b16 %v330
    %v1784 = vunpack.c.h.b16 %v330
    %v1785 = vunpack.c.l.b16 %v331
    %v1786 = vunpack.c.h.b16 %v331
    %v1787 = vunpack.c.l.b16 %v332
    %v1788 = vunpack.c.h.b16 %v332
    %v1789 = vunpack.c.l.b16 %v333
    %v1790 = vunpack.c.h.b16 %v333
    %v1791 = vunpack.c.l.b16 %v334
    %v1792 = vunpack.c.h.b16 %v334
    %v1793 = vunpack.c.l.b16 %v335
    %v1794 = vunpack.c.h.b16 %v335
    %v1795 = vunpack.c.l.b16 %v336
    %v1796 = vunpack.c.h.b16 %v336
    %v1797 = vunpack.c.l.b16 %v337
    %v1798 = vunpack.c.h.b16 %v337
    %v1799 = vunpack.c.l.b16 %v338
    %v1800 = vunpack.c.h.b16 %v338
    %v1801 = vunpack.c.l.b16 %v339
    %v1802 = vunpack.c.h.b16 %v339
    %v1803 = vunpack.c.l.b16 %v340
    %v1804 = vunpack.c.h.b16 %v340
    %v1805 = vunpack.c.l.b16 %v341
    %v1806 = vunpack.c.h.b16 %v341
    %v1807 = vunpack.c.l.b16 %v342
    %v1808 = vunpack.c.h.b16 %v342
    %v1809 = vunpack.c.l.b16 %v343
    %v1810 = vunpack.c.h.b16 %v343
    %v1811 = vunpack.c.l.b16 %v344
    %v1812 = vunpack.c.h.b16 %v344
    %v1813 = vunpack.c.l.b16 %v345
    %v1814 = vunpack.c.h.b16 %v345
    %v1815 = vunpack.c.l.b16 %v346
    %v1816 = vunpack.c.h.b16 %v346
    %v1817 = vunpack.c.l.b16 %v347
    %v1818 = vunpack.c.h.b16 %v347
    %v1819 = vunpack.c.l.b16 %v348
    %v1820 = vunpack.c.h.b16 %v348
    %v1821 = vunpack.c.l.b16 %v349
    %v1822 = vunpack.c.h.b16 %v349
    %v1823 = vunpack.c.l.b16 %v350
    %v1824 = vunpack.c.h.b16 %v350
    %v1825 = vunpack.c.l.b16 %v351
    %v1826 = vunpack.c.h.b16 %v351
    %v1827 = vunpack.c.l.b16 %v352
    %v1828 = vunpack.c.h.b16 %v352
    %v1829 = vunpack.c.l.b16 %v353
    %v1830 = vunpack.c.h.b16 %v353
    %v1831 = vunpack.c.l.b16 %v354
    %v1832 = vunpack.c.h.b16 %v354
    %v1833 = vunpack.c.l.b16 %v355
    %v1834 = vunpack.c.h.b16 %v355
    %v1835 = vunpack.c.l.b16 %v356
    %v1836 = vunpack.c.h.b16 %v356
    %v1837 = vunpack.c.l.b16 %v357
    %v1838 = vunpack.c.h.b16 %v357
    %v1839 = vunpack.c.l.b16 %v358
    %v1840 = vunpack.c.h.b16 %v358
    %v1841 = vunpack.c.l.b16 %v359
    %v1842 = vunpack.c.h.b16 %v359
    %v1843 = vunpack.c.l.b16 %v360
    %v1844 = vunpack.c.h.b16 %v360
    %v1845 = vunpack.c.l.b16 %v361
    %v1846 = vunpack.c.h.b16 %v361
    %v1847 = vunpack.c.l.b16 %v362
    %v1848 = vunpack.c.h.b16 %v362
    %v1849 = vunpack.c.l.b16 %v363
    %v1850 = vunpack.c.h.b16 %v363
    %v1851 = vunpack.c.l.b16 %v364
    %v1852 = vunpack.c.h.b16 %v364
    %v1853 = vunpack.c.l.b16 %v365
    %v1854 = vunpack.c.h.b16 %v365
    %v1855 = vunpack.c.l.b16 %v366
    %v1856 = vunpack.c.h.b16 %v366
    %v1857 = vunpack.c.l.b16 %v367
    %v1858 = vunpack.c.h.b16 %v367
    %v1859 = vunpack.c.l.b16 %v368
    %v1860 = vunpack.c.h.b16 %v368
    %v1861 = vunpack.c.l.b16 %v369
    %v1862 = vunpack.c.h.b16 %v369
    %v1863 = vunpack.c.l.b16 %v370
    %v1864 = vunpack.c.h.b16 %v370
    %v1865 = vunpack.c.l.b16 %v371
    %v1866 = vunpack.c.h.b16 %v371
    %v1867 = vunpack.c.l.b16 %v372
    %v1868 = vunpack.c.h.b16 %v372
    %v1869 = vunpack.c.l.b16 %v373
    %v1870 = vunpack.c.h.b16 %v373
    %v1871 = vunpack.c.l.b16 %v374
    %v1872 = vunpack.c.h.b16 %v374
    %v1873 = vunpack.c.l.b16 %v375
    %v1874 = vunpack.c.h.b16 %v375
    %v1875 = vunpack.c.l.b16 %v376
    %v1876 = vunpack.c.h.b16 %v376
    %v1877 = vunpack.c.l.b16 %v377
    %v1878 = vunpack.c.h.b16 %v377
    %v1879 = vunpack.c.l.b16 %v378
    %v1880 = vunpack.c.h.b16 %v378
    %v1881 = vunpack.c.l.b16 %v379
    %v1882 = vunpack.c.h.b16 %v379
    %v1883 = vunpack.c.l.b16 %v380
    %v1884 = vunpack.c.h.b16 %v380
    %v1885 = vunpack.c.l.b16 %v381
    %v1886 = vunpack.c.h.b16 %v381
    %v1887 = vunpack.c.l.b16 %v382
    %v1888 = vunpack.c.h.b16 %v382
    %v1889 = vunpack.c.l.b16 %v383
    %v1890 = vunpack.c.h.b16 %v383
    %v1891 = vunpack.c.l.b16 %v384
    %v1892 = vunpack.c.h.b16 %v384
    %v1893 = vunpack.c.l.b16 %v385
    %v1894 = vunpack.c.h.b16 %v385
    %v1895 = vunpack.c.l.b16 %v386
    %v1896 = vunpack.c.h.b16 %v386
    %v1897 = vunpack.c.l.b16 %v387
    %v1898 = vunpack.c.h.b16 %v387
    %v1899 = vunpack.c.l.b16 %v388
    %v1900 = vunpack.c.h.b16 %v388
    %v1901 = vunpack.c.l.b16 %v389
    %v1902 = vunpack.c.h.b16 %v389
    %v1903 = vunpack.c.l.b16 %v390
    %v1904 = vunpack.c.h.b16 %v390
    %v1905 = vunpack.c.l.b16 %v391
    %v1906 = vunpack.c.h.b16 %v391
    %v1907 = vunpack.c.l.b16 %v392
    %v1908 = vunpack.c.h.b16 %v392
    %v1909 = vunpack.c.l.b16 %v393
    %v1910 = vunpack.c.h.b16 %v393
    %v1911 = vunpack.c.l.b16 %v394
    %v1912 = vunpack.c.h.b16 %v394
    %v1913 = vunpack.c.l.b16 %v395
    %v1914 = vunpack.c.h.b16 %v395
    %v1915 = vunpack.c.l.b16 %v396
    %v1916 = vunpack.c.h.b16 %v396
    %v1917 = vunpack.c.l.b16 %v397
    %v1918 = vunpack.c.h.b16 %v397
    %v1919 = vunpack.c.l.b16 %v398
    %v1920 = vunpack.c.h.b16 %v398
    %v1921 = vunpack.c.l.b16 %v399
    %v1922 = vunpack.c.h.b16 %v399
    %v1923 = vunpack.c.l.b16 %v400
    %v1924 = vunpack.c.h.b16 %v400
    %v1925 = vunpack.c.l.b16 %v401
    %v1926 = vunpack.c.h.b16 %v401
    %v1927 = vunpack.c.l.b16 %v402
    %v1928 = vunpack.c.h.b16 %v402
    %v1929 = vunpack.c.l.b16 %v403
    %v1930 = vunpack.c.h.b16 %v403
    %v1931 = vunpack.c.l.b16 %v404
    %v1932 = vunpack.c.h.b16 %v404
    %v1933 = vunpack.c.l.b16 %v405
    %v1934 = vunpack.c.h.b16 %v405
    %v1935 = vunpack.c.l.b16 %v406
    %v1936 = vunpack.c.h.b16 %v406
    %v1937 = vunpack.c.l.b16 %v407
    %v1938 = vunpack.c.h.b16 %v407
    %v1939 = vunpack.c.l.b16 %v408
    %v1940 = vunpack.c.h.b16 %v408
    %v1941 = vunpack.c.l.b16 %v409
    %v1942 = vunpack.c.h.b16 %v409
    %v1943 = vunpack.c.l.b16 %v410
    %v1944 = vunpack.c.h.b16 %v410
    %v1945 = vunpack.c.l.b16 %v411
    %v1946 = vunpack.c.h.b16 %v411
    %v1947 = vunpack.c.l.b16 %v412
    %v1948 = vunpack.c.h.b16 %v412
    %v1949 = vunpack.c.l.b16 %v413
    %v1950 = vunpack.c.h.b16 %v413
    %v1951 = vunpack.c.l.b16 %v414
    %v1952 = vunpack.c.h.b16 %v414
    %v1953 = vunpack.c.l.b16 %v415
    %v1954 = vunpack.c.h.b16 %v415
    %v1955 = vunpack.c.l.b16 %v416
    %v1956 = vunpack.c.h.b16 %v416
    %v1957 = vunpack.c.l.b16 %v417
    %v1958 = vunpack.c.h.b16 %v417
    %v1959 = vunpack.c.l.b16 %v418
    %v1960 = vunpack.c.h.b16 %v418
    %v1961 = vunpack.c.l.b16 %v419
    %v1962 = vunpack.c.h.b16 %v419
    %v1963 = vunpack.c.l.b16 %v420
    %v1964 = vunpack.c.h.b16 %v420
    %v1965 = vunpack.c.l.b16 %v421
    %v1966 = vunpack.c.h.b16 %v421
    %v1967 = vunpack.c.l.b16 %v422
    %v1968 = vunpack.c.h.b16 %v422
    %v1969 = vunpack.c.l.b16 %v423
    %v1970 = vunpack.c.h.b16 %v423
    %v1971 = vunpack.c.l.b16 %v424
    %v1972 = vunpack.c.h.b16 %v424
    %v1973 = vunpack.c.l.b16 %v425
    %v1974 = vunpack.c.h.b16 %v425
    %v1975 = vunpack.c.l.b16 %v426
    %v1976 = vunpack.c.h.b16 %v426
    %v1977 = vunpack.c.l.b16 %v427
    %v1978 = vunpack.c.h.b16 %v427
    %v1979 = vunpack.c.l.b16 %v428
    %v1980 = vunpack.c.h.b16 %v428
    %v1981 = vunpack.c.l.b16 %v429
    %v1982 = vunpack.c.h.b16 %v429
    %v1983 = vunpack.c.l.b16 %v430
    %v1984 = vunpack.c.h.b16 %v430
    %v1985 = vunpack.c.l.b16 %v431
    %v1986 = vunpack.c.h.b16 %v431
    %v1987 = vunpack.c.l.b16 %v432
    %v1988 = vunpack.c.h.b16 %v432
    %v1989 = vunpack.c.l.b16 %v433
    %v1990 = vunpack.c.h.b16 %v433
    %v1991 = vunpack.c.l.b16 %v434
    %v1992 = vunpack.c.h.b16 %v434
    %v1993 = vunpack.c.l.b16 %v435
    %v1994 = vunpack.c.h.b16 %v435
    %v1995 = vunpack.c.l.b16 %v436
    %v1996 = vunpack.c.h.b16 %v436
    %v1997 = vunpack.c.l.b16 %v437
    %v1998 = vunpack.c.h.b16 %v437
    %v1999 = vunpack.c.l.b16 %v438
    %v2000 = vunpack.c.h.b16 %v438
    %v2001 = vunpack.c.l.b16 %v439
    %v2002 = vunpack.c.h.b16 %v439
    %v2003 = vunpack.c.l.b16 %v440
    %v2004 = vunpack.c.h.b16 %v440
    %v2005 = vunpack.c.l.b16 %v441
    %v2006 = vunpack.c.h.b16 %v441
    %v2007 = vunpack.c.l.b16 %v442
    %v2008 = vunpack.c.h.b16 %v442
    %v2009 = vunpack.c.l.b16 %v443
    %v2010 = vunpack.c.h.b16 %v443
    %v2011 = vunpack.c.l.b16 %v444
    %v2012 = vunpack.c.h.b16 %v444
    %v2013 = vunpack.c.l.b16 %v445
    %v2014 = vunpack.c.h.b16 %v445
    %v2015 = vunpack.c.l.b16 %v446
    %v2016 = vunpack.c.h.b16 %v446
    %v2017 = vunpack.c.l.b16 %v447
    %v2018 = vunpack.c.h.b16 %v447
    %v2019 = vunpack.c.l.b16 %v448
    %v2020 = vunpack.c.h.b16 %v448
    %v2021 = vunpack.c.l.b16 %v449
    %v2022 = vunpack.c.h.b16 %v449
    %v2023 = vunpack.c.l.b16 %v450
    %v2024 = vunpack.c.h.b16 %v450
    %v2025 = vunpack.c.l.b16 %v451
    %v2026 = vunpack.c.h.b16 %v451
    %v2027 = vunpack.c.l.b16 %v452
    %v2028 = vunpack.c.h.b16 %v452
    %v2029 = vunpack.c.l.b16 %v453
    %v2030 = vunpack.c.h.b16 %v453
    %v2031 = vunpack.c.l.b16 %v454
    %v2032 = vunpack.c.h.b16 %v454
    %v2033 = vunpack.c.l.b16 %v455
    %v2034 = vunpack.c.h.b16 %v455
    %v2035 = vunpack.c.l.b16 %v456
    %v2036 = vunpack.c.h.b16 %v456
    %v2037 = vunpack.c.l.b16 %v457
    %v2038 = vunpack.c.h.b16 %v457
    %v2039 = vunpack.c.l.b16 %v458
    %v2040 = vunpack.c.h.b16 %v458
    %v2041 = vunpack.c.l.b16 %v459
    %v2042 = vunpack.c.h.b16 %v459
    %v2043 = vunpack.c.l.b16 %v460
    %v2044 = vunpack.c.h.b16 %v460
    %v2045 = vunpack.c.l.b16 %v461
    %v2046 = vunpack.c.h.b16 %v461
    %v2047 = vunpack.c.l.b16 %v462
    %v2048 = vunpack.c.h.b16 %v462
    %v2049 = vunpack.c.l.b16 %v463
    %v2050 = vunpack.c.h.b16 %v463
    %v2051 = vunpack.c.l.b16 %v464
    %v2052 = vunpack.c.h.b16 %v464
    %v2053 = vunpack.c.l.b16 %v465
    %v2054 = vunpack.c.h.b16 %v465
    %v2055 = vunpack.c.l.b16 %v466
    %v2056 = vunpack.c.h.b16 %v466
    %v2057 = vunpack.c.l.b16 %v467
    %v2058 = vunpack.c.h.b16 %v467
    %v2059 = vunpack.c.l.b16 %v468
    %v2060 = vunpack.c.h.b16 %v468
    %v2061 = vunpack.c.l.b16 %v469
    %v2062 = vunpack.c.h.b16 %v469
    %v2063 = vunpack.c.l.b16 %v470
    %v2064 = vunpack.c.h.b16 %v470
    %v2065 = vunpack.c.l.b16 %v471
    %v2066 = vunpack.c.h.b16 %v471
    %v2067 = vunpack.c.l.b16 %v472
    %v2068 = vunpack.c.h.b16 %v472
    %v2069 = vunpack.c.l.b16 %v473
    %v2070 = vunpack.c.h.b16 %v473
    %v2071 = vunpack.c.l.b16 %v474
    %v2072 = vunpack.c.h.b16 %v474
    %v2073 = vunpack.c.l.b16 %v475
    %v2074 = vunpack.c.h.b16 %v475
    %v2075 = vunpack.c.l.b16 %v476
    %v2076 = vunpack.c.h.b16 %v476
    %v2077 = vunpack.c.l.b16 %v477
    %v2078 = vunpack.c.h.b16 %v477
    %v2079 = vunpack.c.l.b16 %v478
    %v2080 = vunpack.c.h.b16 %v478
    %v2081 = vunpack.c.l.b16 %v479
    %v2082 = vunpack.c.h.b16 %v479
    %v2083 = vunpack.c.l.b16 %v480
    %v2084 = vunpack.c.h.b16 %v480
    %v2085 = vunpack.c.l.b16 %v481
    %v2086 = vunpack.c.h.b16 %v481
    %v2087 = vunpack.c.l.b16 %v482
    %v2088 = vunpack.c.h.b16 %v482
    %v2089 = vunpack.c.l.b16 %v483
    %v2090 = vunpack.c.h.b16 %v483
    %v2091 = vunpack.c.l.b16 %v484
    %v2092 = vunpack.c.h.b16 %v484
    %v2093 = vunpack.c.l.b16 %v485
    %v2094 = vunpack.c.h.b16 %v485
    %v2095 = vunpack.c.l.b16 %v486
    %v2096 = vunpack.c.h.b16 %v486
    %v2097 = vunpack.c.l.b16 %v487
    %v2098 = vunpack.c.h.b16 %v487
    %v2099 = vunpack.c.l.b16 %v488
    %v2100 = vunpack.c.h.b16 %v488
    %v2101 = vunpack.c.l.b16 %v489
    %v2102 = vunpack.c.h.b16 %v489
    %v2103 = vunpack.c.l.b16 %v490
    %v2104 = vunpack.c.h.b16 %v490
    %v2105 = vunpack.c.l.b16 %v491
    %v2106 = vunpack.c.h.b16 %v491
    %v2107 = vunpack.c.l.b16 %v492
    %v2108 = vunpack.c.h.b16 %v492
    %v2109 = vunpack.c.l.b16 %v493
    %v2110 = vunpack.c.h.b16 %v493
    %v2111 = vunpack.c.l.b16 %v494
    %v2112 = vunpack.c.h.b16 %v494
    %v2113 = vunpack.c.l.b16 %v495
    %v2114 = vunpack.c.h.b16 %v495
    %v2115 = vunpack.c.l.b16 %v496
    %v2116 = vunpack.c.h.b16 %v496
    %v2117 = vunpack.c.l.b16 %v497
    %v2118 = vunpack.c.h.b16 %v497
    %v2119 = vunpack.c.l.b16 %v498
    %v2120 = vunpack.c.h.b16 %v498
    %v2121 = vunpack.c.l.b16 %v499
    %v2122 = vunpack.c.h.b16 %v499
    %v2123 = vunpack.c.l.b16 %v500
    %v2124 = vunpack.c.h.b16 %v500
    %v2125 = vunpack.c.l.b16 %v501
    %v2126 = vunpack.c.h.b16 %v501
    %v2127 = vunpack.c.l.b16 %v502
    %v2128 = vunpack.c.h.b16 %v502
    %v2129 = vunpack.c.l.b16 %v503
    %v2130 = vunpack.c.h.b16 %v503
    %v2131 = vunpack.c.l.b16 %v504
    %v2132 = vunpack.c.h.b16 %v504
    %v2133 = vunpack.c.l.b16 %v505
    %v2134 = vunpack.c.h.b16 %v505
    %v2135 = vunpack.c.l.b16 %v506
    %v2136 = vunpack.c.h.b16 %v506
    %v2137 = vunpack.c.l.b16 %v507
    %v2138 = vunpack.c.h.b16 %v507
    %v2139 = vunpack.c.l.b16 %v508
    %v2140 = vunpack.c.h.b16 %v508
    %v2141 = vunpack.c.l.b16 %v509
    %v2142 = vunpack.c.h.b16 %v509
    %v2143 = vunpack.c.l.b16 %v510
    %v2144 = vunpack.c.h.b16 %v510
    %v2145 = vunpack.c.l.b16 %v511
    %v2146 = vunpack.c.h.b16 %v511
    %v2147 = vunpack.c.l.b16 %v512
    %v2148 = vunpack.c.h.b16 %v512
    %v2149 = vunpack.c.l.b16 %v513
    %v2150 = vunpack.c.h.b16 %v513
    %v2151 = vunpack.c.l.b16 %v514
    %v2152 = vunpack.c.h.b16 %v514
    %v2153 = vunpack.c.l.b16 %v515
    %v2154 = vunpack.c.h.b16 %v515
    %v2155 = vunpack.c.l.b16 %v516
    %v2156 = vunpack.c.h.b16 %v516
    %v2157 = vunpack.c.l.b16 %v517
    %v2158 = vunpack.c.h.b16 %v517
    %v2159 = vunpack.c.l.b16 %v518
    %v2160 = vunpack.c.h.b16 %v518
    %v2161 = vunpack.c.l.b16 %v519
    %v2162 = vunpack.c.h.b16 %v519
    %v2163 = vunpack.c.l.b16 %v520
    %v2164 = vunpack.c.h.b16 %v520
    %v2165 = vunpack.c.l.b16 %v521
    %v2166 = vunpack.c.h.b16 %v521
    %v2167 = vunpack.c.l.b16 %v522
    %v2168 = vunpack.c.h.b16 %v522
    %v2169 = vunpack.c.l.b16 %v523
    %v2170 = vunpack.c.h.b16 %v523
    %v2171 = vunpack.c.l.b16 %v524
    %v2172 = vunpack.c.h.b16 %v524
    %v2173 = vunpack.c.l.b16 %v525
    %v2174 = vunpack.c.h.b16 %v525
    %v2175 = vunpack.c.l.b16 %v526
    %v2176 = vunpack.c.h.b16 %v526
    %v2177 = vunpack.c.l.b16 %v527
    %v2178 = vunpack.c.h.b16 %v527
    %v2179 = vunpack.c.l.b16 %v528
    %v2180 = vunpack.c.h.b16 %v528
    %v2181 = vunpack.c.l.b16 %v529
    %v2182 = vunpack.c.h.b16 %v529
    %v2183 = vunpack.c.l.b16 %v530
    %v2184 = vunpack.c.h.b16 %v530
    %v2185 = vunpack.c.l.b16 %v531
    %v2186 = vunpack.c.h.b16 %v531
    %v2187 = vunpack.c.l.b16 %v532
    %v2188 = vunpack.c.h.b16 %v532
    %v2189 = vunpack.c.l.b16 %v533
    %v2190 = vunpack.c.h.b16 %v533
    %v2191 = vunpack.c.l.b16 %v534
    %v2192 = vunpack.c.h.b16 %v534
    %v2193 = vunpack.c.l.b16 %v535
    %v2194 = vunpack.c.h.b16 %v535
    %v2195 = vunpack.c.l.b16 %v536
    %v2196 = vunpack.c.h.b16 %v536
    %v2197 = vunpack.c.l.b16 %v537
    %v2198 = vunpack.c.h.b16 %v537
    %v2199 = vunpack.c.l.b16 %v538
    %v2200 = vunpack.c.h.b16 %v538
    %v2201 = vunpack.c.l.b16 %v539
    %v2202 = vunpack.c.h.b16 %v539
    %v2203 = vunpack.c.l.b16 %v540
    %v2204 = vunpack.c.h.b16 %v540
    %v2205 = vunpack.c.l.b16 %v541
    %v2206 = vunpack.c.h.b16 %v541
    %v2207 = vunpack.c.l.b16 %v542
    %v2208 = vunpack.c.h.b16 %v542
    %v2209 = vunpack.c.l.b16 %v543
    %v2210 = vunpack.c.h.b16 %v543
    %v2211 = vunpack.c.l.b16 %v544
    %v2212 = vunpack.c.h.b16 %v544
    %v2213 = vunpack.c.l.b16 %v545
    %v2214 = vunpack.c.h.b16 %v545
    %v2215 = vunpack.c.l.b16 %v546
    %v2216 = vunpack.c.h.b16 %v546
    %v2217 = vunpack.c.l.b16 %v547
    %v2218 = vunpack.c.h.b16 %v547
    %v2219 = vunpack.c.l.b16 %v548
    %v2220 = vunpack.c.h.b16 %v548
    %v2221 = vunpack.c.l.b16 %v549
    %v2222 = vunpack.c.h.b16 %v549
    %v2223 = vunpack.c.l.b16 %v550
    %v2224 = vunpack.c.h.b16 %v550
    %v2225 = vunpack.c.l.b16 %v551
    %v2226 = vunpack.c.h.b16 %v551
    %v2227 = vunpack.c.l.b16 %v552
    %v2228 = vunpack.c.h.b16 %v552
    %v2229 = vunpack.c.l.b16 %v553
    %v2230 = vunpack.c.h.b16 %v553
    %v2231 = vunpack.c.l.b16 %v554
    %v2232 = vunpack.c.h.b16 %v554
    %v2233 = vunpack.c.l.b16 %v555
    %v2234 = vunpack.c.h.b16 %v555
    %v2235 = vunpack.c.l.b16 %v556
    %v2236 = vunpack.c.h.b16 %v556
    %v2237 = vunpack.c.l.b16 %v557
    %v2238 = vunpack.c.h.b16 %v557
    %v2239 = vunpack.c.l.b16 %v558
    %v2240 = vunpack.c.h.b16 %v558
    %v2241 = vunpack.c.l.b16 %v559
    %v2242 = vunpack.c.h.b16 %v559
    %v2243 = vunpack.c.l.b16 %v560
    %v2244 = vunpack.c.h.b16 %v560
    %v2245 = vunpack.c.l.b16 %v561
    %v2246 = vunpack.c.h.b16 %v561
    %v2247 = vunpack.c.l.b16 %v562
    %v2248 = vunpack.c.h.b16 %v562
    %v2249 = vunpack.c.l.b16 %v563
    %v2250 = vunpack.c.h.b16 %v563
    %v2251 = vunpack.c.l.b16 %v564
    %v2252 = vunpack.c.h.b16 %v564
    %v2253 = vunpack.c.l.b16 %v565
    %v2254 = vunpack.c.h.b16 %v565
    %v2255 = vunpack.c.l.b16 %v566
    %v2256 = vunpack.c.h.b16 %v566
    %v2257 = vunpack.c.l.b16 %v567
    %v2258 = vunpack.c.h.b16 %v567
    %v2259 = vunpack.c.l.b16 %v568
    %v2260 = vunpack.c.h.b16 %v568
    %v2261 = vunpack.c.l.b16 %v569
    %v2262 = vunpack.c.h.b16 %v569
    %v2263 = vunpack.c.l.b16 %v570
    %v2264 = vunpack.c.h.b16 %v570
    %v2265 = vunpack.c.l.b16 %v571
    %v2266 = vunpack.c.h.b16 %v571
    %v2267 = vunpack.c.l.b16 %v572
    %v2268 = vunpack.c.h.b16 %v572
    %v2269 = vunpack.c.l.b16 %v573
    %v2270 = vunpack.c.h.b16 %v573
    %v2271 = vunpack.c.l.b16 %v574
    %v2272 = vunpack.c.h.b16 %v574
    %v2273 = vunpack.c.l.b16 %v575
    %v2274 = vunpack.c.h.b16 %v575
    %v2275 = vunpack.c.l.b16 %v576
    %v2276 = vunpack.c.h.b16 %v576
    %v2277 = vunpack.c.l.b16 %v577
    %v2278 = vunpack.c.h.b16 %v577
    %v2279 = vunpack.c.l.b16 %v578
    %v2280 = vunpack.c.h.b16 %v578
    %v2281 = vunpack.c.l.b16 %v579
    %v2282 = vunpack.c.h.b16 %v579
    %v2283 = vunpack.c.l.b16 %v580
    %v2284 = vunpack.c.h.b16 %v580
    %v2285 = vunpack.c.l.b16 %v581
    %v2286 = vunpack.c.h.b16 %v581
    %v2287 = vunpack.c.l.b16 %v582
    %v2288 = vunpack.c.h.b16 %v582
    %v2289 = vunpack.c.l.b16 %v583
    %v2290 = vunpack.c.h.b16 %v583
    %v2291 = vunpack.c.l.b16 %v584
    %v2292 = vunpack.c.h.b16 %v584
    %v2293 = vunpack.c.l.b16 %v585
    %v2294 = vunpack.c.h.b16 %v585
    %v2295 = vunpack.c.l.b16 %v586
    %v2296 = vunpack.c.h.b16 %v586
    %v2297 = vunpack.c.l.b16 %v587
    %v2298 = vunpack.c.h.b16 %v587
    %v2299 = vunpack.c.l.b16 %v588
    %v2300 = vunpack.c.h.b16 %v588
    %v2301 = vunpack.c.l.b16 %v589
    %v2302 = vunpack.c.h.b16 %v589
    %v2303 = vunpack.c.l.b16 %v590
    %v2304 = vunpack.c.h.b16 %v590
    %v2305 = vunpack.c.l.b16 %v591
    %v2306 = vunpack.c.h.b16 %v591
    %v2307 = vunpack.c.l.b16 %v592
    %v2308 = vunpack.c.h.b16 %v592
    %v2309 = vunpack.c.l.b16 %v593
    %v2310 = vunpack.c.h.b16 %v593
    %v2311 = vunpack.c.l.b16 %v594
    %v2312 = vunpack.c.h.b16 %v594
    %v2313 = vunpack.c.l.b16 %v595
    %v2314 = vunpack.c.h.b16 %v595
    %v2315 = vunpack.c.l.b16 %v596
    %v2316 = vunpack.c.h.b16 %v596
    %v2317 = vunpack.c.l.b16 %v597
    %v2318 = vunpack.c.h.b16 %v597
    %v2319 = vunpack.c.l.b16 %v598
    %v2320 = vunpack.c.h.b16 %v598
    %v2321 = vunpack.c.l.b16 %v599
    %v2322 = vunpack.c.h.b16 %v599
    %v2323 = vunpack.c.l.b16 %v600
    %v2324 = vunpack.c.h.b16 %v600
    %v2325 = vunpack.c.l.b16 %v601
    %v2326 = vunpack.c.h.b16 %v601
    %v2327 = vunpack.c.l.b16 %v602
    %v2328 = vunpack.c.h.b16 %v602
    %v2329 = vunpack.c.l.b16 %v603
    %v2330 = vunpack.c.h.b16 %v603
    %v2331 = vunpack.c.l.b16 %v604
    %v2332 = vunpack.c.h.b16 %v604
    %v2333 = vunpack.c.l.b16 %v605
    %v2334 = vunpack.c.h.b16 %v605
    %v2335 = vunpack.c.l.b16 %v606
    %v2336 = vunpack.c.h.b16 %v606
    %v2337 = vunpack.c.l.b16 %v607
    %v2338 = vunpack.c.h.b16 %v607
    %v2339 = vunpack.c.l.b16 %v608
    %v2340 = vunpack.c.h.b16 %v608
    %v2341 = vunpack.c.l.b16 %v609
    %v2342 = vunpack.c.h.b16 %v609
    %v2343 = vunpack.c.l.b16 %v610
    %v2344 = vunpack.c.h.b16 %v610
    %v2345 = vunpack.c.l.b16 %v611
    %v2346 = vunpack.c.h.b16 %v611
    %v2347 = vunpack.c.l.b16 %v612
    %v2348 = vunpack.c.h.b16 %v612
    %v2349 = vunpack.c.l.b16 %v613
    %v2350 = vunpack.c.h.b16 %v613
    %v2351 = vunpack.c.l.b16 %v614
    %v2352 = vunpack.c.h.b16 %v614
    %v2353 = vunpack.c.l.b16 %v615
    %v2354 = vunpack.c.h.b16 %v615
    %v2355 = vunpack.c.l.b16 %v616
    %v2356 = vunpack.c.h.b16 %v616
    %v2357 = vunpack.c.l.b16 %v617
    %v2358 = vunpack.c.h.b16 %v617
    %v2359 = vunpack.c.l.b16 %v618
    %v2360 = vunpack.c.h.b16 %v618
    %v2361 = vunpack.c.l.b16 %v619
    %v2362 = vunpack.c.h.b16 %v619
    %v2363 = vunpack.c.l.b16 %v620
    %v2364 = vunpack.c.h.b16 %v620
    %v2365 = vunpack.c.l.b16 %v621
    %v2366 = vunpack.c.h.b16 %v621
    %v2367 = vunpack.c.l.b16 %v622
    %v2368 = vunpack.c.h.b16 %v622
    %v2369 = vunpack.c.l.b16 %v623
    %v2370 = vunpack.c.h.b16 %v623
    %v2371 = vunpack.c.l.b16 %v624
    %v2372 = vunpack.c.h.b16 %v624
    %v2373 = vunpack.c.l.b16 %v625
    %v2374 = vunpack.c.h.b16 %v625
    %v2375 = vunpack.c.l.b16 %v626
    %v2376 = vunpack.c.h.b16 %v626
    %v2377 = vunpack.c.l.b16 %v627
    %v2378 = vunpack.c.h.b16 %v627
    %v2379 = vunpack.c.l.b16 %v628
    %v2380 = vunpack.c.h.b16 %v628
    %v2381 = vunpack.c.l.b16 %v629
    %v2382 = vunpack.c.h.b16 %v629
    %v2383 = vunpack.c.l.b16 %v630
    %v2384 = vunpack.c.h.b16 %v630
    %v2385 = vunpack.c.l.b16 %v631
    %v2386 = vunpack.c.h.b16 %v631
    %v2387 = vunpack.c.l.b16 %v632
    %v2388 = vunpack.c.h.b16 %v632
    %v2389 = vunpack.c.l.b16 %v633
    %v2390 = vunpack.c.h.b16 %v633
    %v2391 = vunpack.c.l.b16 %v634
    %v2392 = vunpack.c.h.b16 %v634
    %v2393 = vunpack.c.l.b16 %v635
    %v2394 = vunpack.c.h.b16 %v635
    %v2395 = vunpack.c.l.b16 %v636
    %v2396 = vunpack.c.h.b16 %v636
    %v2397 = vunpack.c.l.b16 %v637
    %v2398 = vunpack.c.h.b16 %v637
    %v2399 = vunpack.c.l.b16 %v638
    %v2400 = vunpack.c.h.b16 %v638
    %v2401 = vunpack.c.l.b16 %v639
    %v2402 = vunpack.c.h.b16 %v639
    %v2403 = vunpack.c.l.b16 %v640
    %v2404 = vunpack.c.h.b16 %v640
    %v2405 = vunpack.c.l.b16 %v641
    %v2406 = vunpack.c.h.b16 %v641
    %v2407 = vunpack.c.l.b16 %v642
    %v2408 = vunpack.c.h.b16 %v642
    %v2409 = vunpack.c.l.b16 %v643
    %v2410 = vunpack.c.h.b16 %v643
    %v2411 = vunpack.c.l.b16 %v644
    %v2412 = vunpack.c.h.b16 %v644
    %v2413 = vunpack.c.l.b16 %v645
    %v2414 = vunpack.c.h.b16 %v645
    %v2415 = vunpack.c.l.b16 %v646
    %v2416 = vunpack.c.h.b16 %v646
    %v2417 = vunpack.c.l.b16 %v647
    %v2418 = vunpack.c.h.b16 %v647
    %v2419 = vunpack.c.l.b16 %v648
    %v2420 = vunpack.c.h.b16 %v648
    %v2421 = vunpack.c.l.b16 %v649
    %v2422 = vunpack.c.h.b16 %v649
    %v2423 = vunpack.c.l.b16 %v650
    %v2424 = vunpack.c.h.b16 %v650
    %v2425 = vunpack.c.l.b16 %v651
    %v2426 = vunpack.c.h.b16 %v651
    %v2427 = vunpack.c.l.b16 %v652
    %v2428 = vunpack.c.h.b16 %v652
    %v2429 = vunpack.c.l.b16 %v653
    %v2430 = vunpack.c.h.b16 %v653
    %v2431 = vunpack.c.l.b16 %v654
    %v2432 = vunpack.c.h.b16 %v654
    %v2433 = vunpack.c.l.b16 %v655
    %v2434 = vunpack.c.h.b16 %v655
    %v2435 = vunpack.c.l.b16 %v656
    %v2436 = vunpack.c.h.b16 %v656
    %v2437 = vunpack.c.l.b16 %v657
    %v2438 = vunpack.c.h.b16 %v657
    %v2439 = vunpack.c.l.b16 %v658
    %v2440 = vunpack.c.h.b16 %v658
    %v2441 = vunpack.c.l.b16 %v659
    %v2442 = vunpack.c.h.b16 %v659
    %v2443 = vunpack.c.l.b16 %v660
    %v2444 = vunpack.c.h.b16 %v660
    %v2445 = vunpack.c.l.b16 %v661
    %v2446 = vunpack.c.h.b16 %v661
    %v2447 = vunpack.c.l.b16 %v662
    %v2448 = vunpack.c.h.b16 %v662
    %v2449 = vunpack.c.l.b16 %v663
    %v2450 = vunpack.c.h.b16 %v663
    %v2451 = vunpack.c.l.b16 %v664
    %v2452 = vunpack.c.h.b16 %v664
    %v2453 = vunpack.c.l.b16 %v665
    %v2454 = vunpack.c.h.b16 %v665
    %v2455 = vunpack.c.l.b16 %v666
    %v2456 = vunpack.c.h.b16 %v666
    %v2457 = vunpack.c.l.b16 %v667
    %v2458 = vunpack.c.h.b16 %v667
    %v2459 = vunpack.c.l.b16 %v668
    %v2460 = vunpack.c.h.b16 %v668
    %v2461 = vunpack.c.l.b16 %v669
    %v2462 = vunpack.c.h.b16 %v669
    %v2463 = vunpack.c.l.b16 %v670
    %v2464 = vunpack.c.h.b16 %v670
    %v2465 = vunpack.c.l.b16 %v671
    %v2466 = vunpack.c.h.b16 %v671
    %v2467 = vunpack.c.l.b16 %v672
    %v2468 = vunpack.c.h.b16 %v672
    %v2469 = vunpack.c.l.b16 %v673
    %v2470 = vunpack.c.h.b16 %v673
    %v2471 = vunpack.c.l.b16 %v674
    %v2472 = vunpack.c.h.b16 %v674
    %v2473 = vunpack.c.l.b16 %v675
    %v2474 = vunpack.c.h.b16 %v675
    %v2475 = vunpack.c.l.b16 %v676
    %v2476 = vunpack.c.h.b16 %v676
    %v2477 = vunpack.c.l.b16 %v677
    %v2478 = vunpack.c.h.b16 %v677
    %v2479 = vpack.c.b16 %v1331, %v1327
    %v2480 = vpack.c.b16 %v1332, %v1328
    %v2481 = vpack.c.b16 %v1333, %v1329
    %v2482 = vpack.c.b16 %v1334, %v1330
    %v2483 = vpack.c.b16 %v1339, %v1335
    %v2484 = vpack.c.b16 %v1340, %v1336
    %v2485 = vpack.c.b16 %v1341, %v1337
    %v2486 = vpack.c.b16 %v1342, %v1338
    %v2487 = vpack.c.b16 %v1347, %v1343
    %v2488 = vpack.c.b16 %v1348, %v1344
    %v2489 = vpack.c.b16 %v1349, %v1345
    %v2490 = vpack.c.b16 %v1350, %v1346
    %v2491 = vpack.c.b16 %v1355, %v1351
    %v2492 = vpack.c.b16 %v1356, %v1352
    %v2493 = vpack.c.b16 %v1357, %v1353
    %v2494 = vpack.c.b16 %v1358, %v1354
    %v2495 = vpack.c.b16 %v1363, %v1359
    %v2496 = vpack.c.b16 %v1364, %v1360
    %v2497 = vpack.c.b16 %v1365, %v1361
    %v2498 = vpack.c.b16 %v1366, %v1362
    %v2499 = vpack.c.b16 %v1371, %v1367
    %v2500 = vpack.c.b16 %v1372, %v1368
    %v2501 = vpack.c.b16 %v1373, %v1369
    %v2502 = vpack.c.b16 %v1374, %v1370
    %v2503 = vpack.c.b16 %v1379, %v1375
    %v2504 = vpack.c.b16 %v1380, %v1376
    %v2505 = vpack.c.b16 %v1381, %v1377
    %v2506 = vpack.c.b16 %v1382, %v1378
    %v2507 = vpack.c.b16 %v1387, %v1383
    %v2508 = vpack.c.b16 %v1388, %v1384
    %v2509 = vpack.c.b16 %v1389, %v1385
    %v2510 = vpack.c.b16 %v1390, %v1386
    %v2511 = vpack.c.b16 %v1395, %v1391
    %v2512 = vpack.c.b16 %v1396, %v1392
    %v2513 = vpack.c.b16 %v1397, %v1393
    %v2514 = vpack.c.b16 %v1398, %v1394
    %v2515 = vpack.c.b16 %v1403, %v1399
    %v2516 = vpack.c.b16 %v1404, %v1400
    %v2517 = vpack.c.b16 %v1405, %v1401
    %v2518 = vpack.c.b16 %v1406, %v1402
    %v2519 = vpack.c.b16 %v1411, %v1407
    %v2520 = vpack.c.b16 %v1412, %v1408
    %v2521 = vpack.c.b16 %v1413, %v1409
    %v2522 = vpack.c.b16 %v1414, %v1410
    %v2523 = vpack.c.b16 %v1419, %v1415
    %v2524 = vpack.c.b16 %v1420, %v1416
    %v2525 = vpack.c.b16 %v1421, %v1417
    %v2526 = vpack.c.b16 %v1422, %v1418
    %v2527 = vpack.c.b16 %v1427, %v1423
    %v2528 = vpack.c.b16 %v1428, %v1424
    %v2529 = vpack.c.b16 %v1429, %v1425
    %v2530 = vpack.c.b16 %v1430, %v1426
    %v2531 = vpack.c.b16 %v1435, %v1431
    %v2532 = vpack.c.b16 %v1436, %v1432
    %v2533 = vpack.c.b16 %v1437, %v1433
    %v2534 = vpack.c.b16 %v1438, %v1434
    %v2535 = vpack.c.b16 %v1443, %v1439
    %v2536 = vpack.c.b16 %v1444, %v1440
    %v2537 = vpack.c.b16 %v1445, %v1441
    %v2538 = vpack.c.b16 %v1446, %v1442
    %v2539 = vpack.c.b16 %v1451, %v1447
    %v2540 = vpack.c.b16 %v1452, %v1448
    %v2541 = vpack.c.b16 %v1453, %v1449
    %v2542 = vpack.c.b16 %v1454, %v1450
    %v2543 = vpack.c.b16 %v1459, %v1455
    %v2544 = vpack.c.b16 %v1460, %v1456
    %v2545 = vpack.c.b16 %v1461, %v1457
    %v2546 = vpack.c.b16 %v1462, %v1458
    %v2547 = vpack.c.b16 %v1467, %v1463
    %v2548 = vpack.c.b16 %v1468, %v1464
    %v2549 = vpack.c.b16 %v1469, %v1465
    %v2550 = vpack.c.b16 %v1470, %v1466
    %v2551 = vpack.c.b16 %v1475, %v1471
    %v2552 = vpack.c.b16 %v1476, %v1472
    %v2553 = vpack.c.b16 %v1477, %v1473
    %v2554 = vpack.c.b16 %v1478, %v1474
    %v2555 = vpack.c.b16 %v1483, %v1479
    %v2556 = vpack.c.b16 %v1484, %v1480
    %v2557 = vpack.c.b16 %v1485, %v1481
    %v2558 = vpack.c.b16 %v1486, %v1482
    %v2559 = vpack.c.b16 %v1491, %v1487
    %v2560 = vpack.c.b16 %v1492, %v1488
    %v2561 = vpack.c.b16 %v1493, %v1489
    %v2562 = vpack.c.b16 %v1494, %v1490
    %v2563 = vpack.c.b16 %v1499, %v1495
    %v2564 = vpack.c.b16 %v1500, %v1496
    %v2565 = vpack.c.b16 %v1501, %v1497
    %v2566 = vpack.c.b16 %v1502, %v1498
    %v2567 = vpack.c.b16 %v1507, %v1503
    %v2568 = vpack.c.b16 %v1508, %v1504
    %v2569 = vpack.c.b16 %v1509, %v1505
    %v2570 = vpack.c.b16 %v1510, %v1506
    %v2571 = vpack.c.b16 %v1515, %v1511
    %v2572 = vpack.c.b16 %v1516, %v1512
    %v2573 = vpack.c.b16 %v1517, %v1513
    %v2574 = vpack.c.b16 %v1518, %v1514
    %v2575 = vpack.c.b16 %v1523, %v1519
    %v2576 = vpack.c.b16 %v1524, %v1520
    %v2577 = vpack.c.b16 %v1525, %v1521
    %v2578 = vpack.c.b16 %v1526, %v1522
    %v2579 = vpack.c.b16 %v1531, %v1527
    %v2580 = vpack.c.b16 %v1532, %v1528
    %v2581 = vpack.c.b16 %v1533, %v1529
    %v2582 = vpack.c.b16 %v1534, %v1530
    %v2583 = vpack.c.b16 %v1539, %v1535
    %v2584 = vpack.c.b16 %v1540, %v1536
    %v2585 = vpack.c.b16 %v1541, %v1537
    %v2586 = vpack.c.b16 %v1542, %v1538
    %v2587 = vpack.c.b16 %v1547, %v1543
    %v2588 = vpack.c.b16 %v1548, %v1544
    %v2589 = vpack.c.b16 %v1549, %v1545
    %v2590 = vpack.c.b16 %v1550, %v1546
    %v2591 = vpack.c.b16 %v1555, %v1551
    %v2592 = vpack.c.b16 %v1556, %v1552
    %v2593 = vpack.c.b16 %v1557, %v1553
    %v2594 = vpack.c.b16 %v1558, %v1554
    %v2595 = vpack.c.b16 %v1563, %v1559
    %v2596 = vpack.c.b16 %v1564, %v1560
    %v2597 = vpack.c.b16 %v1565, %v1561
    %v2598 = vpack.c.b16 %v1566, %v1562
    %v2599 = vpack.c.b16 %v1571, %v1567
    %v2600 = vpack.c.b16 %v1572, %v1568
    %v2601 = vpack.c.b16 %v1573, %v1569
    %v2602 = vpack.c.b16 %v1574, %v1570
    %v2603 = vpack.c.b16 %v1579, %v1575
    %v2604 = vpack.c.b16 %v1580, %v1576
    %v2605 = vpack.c.b16 %v1581, %v1577
    %v2606 = vpack.c.b16 %v1582, %v1578
    %v2607 = vpack.c.b16 %v1587, %v1583
    %v2608 = vpack.c.b16 %v1588, %v1584
    %v2609 = vpack.c.b16 %v1589, %v1585
    %v2610 = vpack.c.b16 %v1590, %v1586
    %v2611 = vpack.c.b16 %v1595, %v1591
    %v2612 = vpack.c.b16 %v1596, %v1592
    %v2613 = vpack.c.b16 %v1597, %v1593
    %v2614 = vpack.c.b16 %v1598, %v1594
    %v2615 = vpack.c.b16 %v1603, %v1599
    %v2616 = vpack.c.b16 %v1604, %v1600
    %v2617 = vpack.c.b16 %v1605, %v1601
    %v2618 = vpack.c.b16 %v1606, %v1602
    %v2619 = vpack.c.b16 %v1611, %v1607
    %v2620 = vpack.c.b16 %v1612, %v1608
    %v2621 = vpack.c.b16 %v1613, %v1609
    %v2622 = vpack.c.b16 %v1614, %v1610
    %v2623 = vpack.c.b16 %v1619, %v1615
    %v2624 = vpack.c.b16 %v1620, %v1616
    %v2625 = vpack.c.b16 %v1621, %v1617
    %v2626 = vpack.c.b16 %v1622, %v1618
    %v2627 = vpack.c.b16 %v1627, %v1623
    %v2628 = vpack.c.b16 %v1628, %v1624
    %v2629 = vpack.c.b16 %v1629, %v1625
    %v2630 = vpack.c.b16 %v1630, %v1626
    %v2631 = vpack.c.b16 %v1635, %v1631
    %v2632 = vpack.c.b16 %v1636, %v1632
    %v2633 = vpack.c.b16 %v1637, %v1633
    %v2634 = vpack.c.b16 %v1638, %v1634
    %v2635 = vpack.c.b16 %v1643, %v1639
    %v2636 = vpack.c.b16 %v1644, %v1640
    %v2637 = vpack.c.b16 %v1645, %v1641
    %v2638 = vpack.c.b16 %v1646, %v1642
    %v2639 = vpack.c.b16 %v1651, %v1647
    %v2640 = vpack.c.b16 %v1652, %v1648
    %v2641 = vpack.c.b16 %v1653, %v1649
    %v2642 = vpack.c.b16 %v1654, %v1650
    %v2643 = vpack.c.b16 %v1659, %v1655
    %v2644 = vpack.c.b16 %v1660, %v1656
    %v2645 = vpack.c.b16 %v1661, %v1657
    %v2646 = vpack.c.b16 %v1662, %v1658
    %v2647 = vpack.c.b16 %v1667, %v1663
    %v2648 = vpack.c.b16 %v1668, %v1664
    %v2649 = vpack.c.b16 %v1669, %v1665
    %v2650 = vpack.c.b16 %v1670, %v1666
    %v2651 = vpack.c.b16 %v1675, %v1671
    %v2652 = vpack.c.b16 %v1676, %v1672
    %v2653 = vpack.c.b16 %v1677, %v1673
    %v2654 = vpack.c.b16 %v1678, %v1674
    %v2655 = vpack.c.b16 %v1683, %v1679
    %v2656 = vpack.c.b16 %v1684, %v1680
    %v2657 = vpack.c.b16 %v1685, %v1681
    %v2658 = vpack.c.b16 %v1686, %v1682
    %v2659 = vpack.c.b16 %v1691, %v1687
    %v2660 = vpack.c.b16 %v1692, %v1688
    %v2661 = vpack.c.b16 %v1693, %v1689
    %v2662 = vpack.c.b16 %v1694, %v1690
    %v2663 = vpack.c.b16 %v1699, %v1695
    %v2664 = vpack.c.b16 %v1700, %v1696
    %v2665 = vpack.c.b16 %v1701, %v1697
    %v2666 = vpack.c.b16 %v1702, %v1698
    %v2667 = vpack.c.b16 %v1707, %v1703
    %v2668 = vpack.c.b16 %v1708, %v1704
    %v2669 = vpack.c.b16 %v1709, %v1705
    %v2670 = vpack.c.b16 %v1710, %v1706
    %v2671 = vpack.c.b16 %v1715, %v1711
    %v2672 = vpack.c.b16 %v1716, %v1712
    %v2673 = vpack.c.b16 %v1717, %v1713
    %v2674 = vpack.c.b16 %v1718, %v1714
    %v2675 = vpack.c.b16 %v1723, %v1719
    %v2676 = vpack.c.b16 %v1724, %v1720
    %v2677 = vpack.c.b16 %v1725, %v1721
    %v2678 = vpack.c.b16 %v1726, %v1722
    %v2679 = vpack.c.b16 %v1731, %v1727
    %v2680 = vpack.c.b16 %v1732, %v1728
    %v2681 = vpack.c.b16 %v1733, %v1729
    %v2682 = vpack.c.b16 %v1734, %v1730
    %v2683 = vpack.c.b16 %v1739, %v1735
    %v2684 = vpack.c.b16 %v1740, %v1736
    %v2685 = vpack.c.b16 %v1741, %v1737
    %v2686 = vpack.c.b16 %v1742, %v1738
    %v2687 = vpack.c.b16 %v1747, %v1743
    %v2688 = vpack.c.b16 %v1748, %v1744
    %v2689 = vpack.c.b16 %v1749, %v1745
    %v2690 = vpack.c.b16 %v1750, %v1746
    %v2691 = vpack.c.b16 %v1755, %v1751
    %v2692 = vpack.c.b16 %v1756, %v1752
    %v2693 = vpack.c.b16 %v1757, %v1753
    %v2694 = vpack.c.b16 %v1758, %v1754
    %v2695 = vpack.c.b16 %v1763, %v1759
    %v2696 = vpack.c.b16 %v1764, %v1760
    %v2697 = vpack.c.b16 %v1765, %v1761
    %v2698 = vpack.c.b16 %v1766, %v1762
    %v2699 = vpack.c.b16 %v1771, %v1767
    %v2700 = vpack.c.b16 %v1772, %v1768
    %v2701 = vpack.c.b16 %v1773, %v1769
    %v2702 = vpack.c.b16 %v1774, %v1770
    %v2703 = vpack.c.b16 %v1779, %v1775
    %v2704 = vpack.c.b16 %v1780, %v1776
    %v2705 = vpack.c.b16 %v1781, %v1777
    %v2706 = vpack.c.b16 %v1782, %v1778
    %v2707 = vpack.c.b16 %v1787, %v1783
    %v2708 = vpack.c.b16 %v1788, %v1784
    %v2709 = vpack.c.b16 %v1789, %v1785
    %v2710 = vpack.c.b16 %v1790, %v1786
    %v2711 = vpack.c.b16 %v1795, %v1791
    %v2712 = vpack.c.b16 %v1796, %v1792
    %v2713 = vpack.c.b16 %v1797, %v1793
    %v2714 = vpack.c.b16 %v1798, %v1794
    %v2715 = vpack.c.b16 %v1803, %v1799
    %v2716 = vpack.c.b16 %v1804, %v1800
    %v2717 = vpack.c.b16 %v1805, %v1801
    %v2718 = vpack.c.b16 %v1806, %v1802
    %v2719 = vpack.c.b16 %v1811, %v1807
    %v2720 = vpack.c.b16 %v1812, %v1808
    %v2721 = vpack.c.b16 %v1813, %v1809
    %v2722 = vpack.c.b16 %v1814, %v1810
    %v2723 = vpack.c.b16 %v1819, %v1815
    %v2724 = vpack.c.b16 %v1820, %v1816
    %v2725 = vpack.c.b16 %v1821, %v1817
    %v2726 = vpack.c.b16 %v1822, %v1818
    %v2727 = vpack.c.b16 %v1827, %v1823
    %v2728 = vpack.c.b16 %v1828, %v1824
    %v2729 = vpack.c.b16 %v1829, %v1825
    %v2730 = vpack.c.b16 %v1830, %v1826
    %v2731 = vpack.c.b16 %v1835, %v1831
    %v2732 = vpack.c.b16 %v1836, %v1832
    %v2733 = vpack.c.b16 %v1837, %v1833
    %v2734 = vpack.c.b16 %v1838, %v1834
    %v2735 = vpack.c.b16 %v1843, %v1839
    %v2736 = vpack.c.b16 %v1844, %v1840
    %v2737 = vpack.c.b16 %v1845, %v1841
    %v2738 = vpack.c.b16 %v1846, %v1842
    %v2739 = vpack.c.b16 %v1851, %v1847
    %v2740 = vpack.c.b16 %v1852, %v1848
    %v2741 = vpack.c.b16 %v1853, %v1849
    %v2742 = vpack.c.b16 %v1854, %v1850
    %v2743 = vpack.c.b16 %v1859, %v1855
    %v2744 = vpack.c.b16 %v1860, %v1856
    %v2745 = vpack.c.b16 %v1861, %v1857
    %v2746 = vpack.c.b16 %v1862, %v1858
    %v2747 = vpack.c.b16 %v1867, %v1863
    %v2748 = vpack.c.b16 %v1868, %v1864
    %v2749 = vpack.c.b16 %v1869, %v1865
    %v2750 = vpack.c.b16 %v1870, %v1866
    %v2751 = vpack.c.b16 %v1875, %v1871
    %v2752 = vpack.c.b16 %v1876, %v1872
    %v2753 = vpack.c.b16 %v1877, %v1873
    %v2754 = vpack.c.b16 %v1878, %v1874
    %v2755 = vpack.c.b16 %v1883, %v1879
    %v2756 = vpack.c.b16 %v1884, %v1880
    %v2757 = vpack.c.b16 %v1885, %v1881
    %v2758 = vpack.c.b16 %v1886, %v1882
    %v2759 = vpack.c.b16 %v1891, %v1887
    %v2760 = vpack.c.b16 %v1892, %v1888
    %v2761 = vpack.c.b16 %v1893, %v1889
    %v2762 = vpack.c.b16 %v1894, %v1890
    %v2763 = vpack.c.b16 %v1899, %v1895
    %v2764 = vpack.c.b16 %v1900, %v1896
    %v2765 = vpack.c.b16 %v1901, %v1897
    %v2766 = vpack.c.b16 %v1902, %v1898
    %v2767 = vpack.c.b16 %v1907, %v1903
    %v2768 = vpack.c.b16 %v1908, %v1904
    %v2769 = vpack.c.b16 %v1909, %v1905
    %v2770 = vpack.c.b16 %v1910, %v1906
    %v2771 = vpack.c.b16 %v1915, %v1911
    %v2772 = vpack.c.b16 %v1916, %v1912
    %v2773 = vpack.c.b16 %v1917, %v1913
    %v2774 = vpack.c.b16 %v1918, %v1914
    %v2775 = vpack.c.b16 %v1923, %v1919
    %v2776 = vpack.c.b16 %v1924, %v1920
    %v2777 = vpack.c.b16 %v1925, %v1921
    %v2778 = vpack.c.b16 %v1926, %v1922
    %v2779 = vpack.c.b16 %v1931, %v1927
    %v2780 = vpack.c.b16 %v1932, %v1928
    %v2781 = vpack.c.b16 %v1933, %v1929
    %v2782 = vpack.c.b16 %v1934, %v1930
    %v2783 = vpack.c.b16 %v1939, %v1935
    %v2784 = vpack.c.b16 %v1940, %v1936
    %v2785 = vpack.c.b16 %v1941, %v1937
    %v2786 = vpack.c.b16 %v1942, %v1938
    %v2787 = vpack.c.b16 %v1947, %v1943
    %v2788 = vpack.c.b16 %v1948, %v1944
    %v2789 = vpack.c.b16 %v1949, %v1945
    %v2790 = vpack.c.b16 %v1950, %v1946
    %v2791 = vpack.c.b16 %v1955, %v1951
    %v2792 = vpack.c.b16 %v1956, %v1952
    %v2793 = vpack.c.b16 %v1957, %v1953
    %v2794 = vpack.c.b16 %v1958, %v1954
    %v2795 = vpack.c.b16 %v1963, %v1959
    %v2796 = vpack.c.b16 %v1964, %v1960
    %v2797 = vpack.c.b16 %v1965, %v1961
    %v2798 = vpack.c.b16 %v1966, %v1962
    %v2799 = vpack.c.b16 %v1971, %v1967
    %v2800 = vpack.c.b16 %v1972, %v1968
    %v2801 = vpack.c.b16 %v1973, %v1969
    %v2802 = vpack.c.b16 %v1974, %v1970
    %v2803 = vpack.c.b16 %v1979, %v1975
    %v2804 = vpack.c.b16 %v1980, %v1976
    %v2805 = vpack.c.b16 %v1981, %v1977
    %v2806 = vpack.c.b16 %v1982, %v1978
    %v2807 = vpack.c.b16 %v1987, %v1983
    %v2808 = vpack.c.b16 %v1988, %v1984
    %v2809 = vpack.c.b16 %v1989, %v1985
    %v2810 = vpack.c.b16 %v1990, %v1986
    %v2811 = vpack.c.b16 %v1995, %v1991
    %v2812 = vpack.c.b16 %v1996, %v1992
    %v2813 = vpack.c.b16 %v1997, %v1993
    %v2814 = vpack.c.b16 %v1998, %v1994
    %v2815 = vpack.c.b16 %v2003, %v1999
    %v2816 = vpack.c.b16 %v2004, %v2000
    %v2817 = vpack.c.b16 %v2005, %v2001
    %v2818 = vpack.c.b16 %v2006, %v2002
    %v2819 = vpack.c.b16 %v2011, %v2007
    %v2820 = vpack.c.b16 %v2012, %v2008
    %v2821 = vpack.c.b16 %v2013, %v2009
    %v2822 = vpack.c.b16 %v2014, %v2010
    %v2823 = vpack.c.b16 %v2019, %v2015
    %v2824 = vpack.c.b16 %v2020, %v2016
    %v2825 = vpack.c.b16 %v2021, %v2017
    %v2826 = vpack.c.b16 %v2022, %v2018
    %v2827 = vpack.c.b16 %v2027, %v2023
    %v2828 = vpack.c.b16 %v2028, %v2024
    %v2829 = vpack.c.b16 %v2029, %v2025
    %v2830 = vpack.c.b16 %v2030, %v2026
    %v2831 = vpack.c.b16 %v2035, %v2031
    %v2832 = vpack.c.b16 %v2036, %v2032
    %v2833 = vpack.c.b16 %v2037, %v2033
    %v2834 = vpack.c.b16 %v2038, %v2034
    %v2835 = vpack.c.b16 %v2043, %v2039
    %v2836 = vpack.c.b16 %v2044, %v2040
    %v2837 = vpack.c.b16 %v2045, %v2041
    %v2838 = vpack.c.b16 %v2046, %v2042
    %v2839 = vpack.c.b16 %v2051, %v2047
    %v2840 = vpack.c.b16 %v2052, %v2048
    %v2841 = vpack.c.b16 %v2053, %v2049
    %v2842 = vpack.c.b16 %v2054, %v2050
    %v2843 = vpack.c.b16 %v2059, %v2055
    %v2844 = vpack.c.b16 %v2060, %v2056
    %v2845 = vpack.c.b16 %v2061, %v2057
    %v2846 = vpack.c.b16 %v2062, %v2058
    %v2847 = vpack.c.b16 %v2067, %v2063
    %v2848 = vpack.c.b16 %v2068, %v2064
    %v2849 = vpack.c.b16 %v2069, %v2065
    %v2850 = vpack.c.b16 %v2070, %v2066
    %v2851 = vpack.c.b16 %v2075, %v2071
    %v2852 = vpack.c.b16 %v2076, %v2072
    %v2853 = vpack.c.b16 %v2077, %v2073
    %v2854 = vpack.c.b16 %v2078, %v2074
    %v2855 = vpack.c.b16 %v2083, %v2079
    %v2856 = vpack.c.b16 %v2084, %v2080
    %v2857 = vpack.c.b16 %v2085, %v2081
    %v2858 = vpack.c.b16 %v2086, %v2082
    %v2859 = vpack.c.b16 %v2091, %v2087
    %v2860 = vpack.c.b16 %v2092, %v2088
    %v2861 = vpack.c.b16 %v2093, %v2089
    %v2862 = vpack.c.b16 %v2094, %v2090
    %v2863 = vpack.c.b16 %v2099, %v2095
    %v2864 = vpack.c.b16 %v2100, %v2096
    %v2865 = vpack.c.b16 %v2101, %v2097
    %v2866 = vpack.c.b16 %v2102, %v2098
    %v2867 = vpack.c.b16 %v2107, %v2103
    %v2868 = vpack.c.b16 %v2108, %v2104
    %v2869 = vpack.c.b16 %v2109, %v2105
    %v2870 = vpack.c.b16 %v2110, %v2106
    %v2871 = vpack.c.b16 %v2115, %v2111
    %v2872 = vpack.c.b16 %v2116, %v2112
    %v2873 = vpack.c.b16 %v2117, %v2113
    %v2874 = vpack.c.b16 %v2118, %v2114
    %v2875 = vpack.c.b16 %v2123, %v2119
    %v2876 = vpack.c.b16 %v2124, %v2120
    %v2877 = vpack.c.b16 %v2125, %v2121
    %v2878 = vpack.c.b16 %v2126, %v2122
    %v2879 = vpack.c.b16 %v2131, %v2127
    %v2880 = vpack.c.b16 %v2132, %v2128
    %v2881 = vpack.c.b16 %v2133, %v2129
    %v2882 = vpack.c.b16 %v2134, %v2130
    %v2883 = vpack.c.b16 %v2139, %v2135
    %v2884 = vpack.c.b16 %v2140, %v2136
    %v2885 = vpack.c.b16 %v2141, %v2137
    %v2886 = vpack.c.b16 %v2142, %v2138
    %v2887 = vpack.c.b16 %v2147, %v2143
    %v2888 = vpack.c.b16 %v2148, %v2144
    %v2889 = vpack.c.b16 %v2149, %v2145
    %v2890 = vpack.c.b16 %v2150, %v2146
    %v2891 = vpack.c.b16 %v2155, %v2151
    %v2892 = vpack.c.b16 %v2156, %v2152
    %v2893 = vpack.c.b16 %v2157, %v2153
    %v2894 = vpack.c.b16 %v2158, %v2154
    %v2895 = vpack.c.b16 %v2163, %v2159
    %v2896 = vpack.c.b16 %v2164, %v2160
    %v2897 = vpack.c.b16 %v2165, %v2161
    %v2898 = vpack.c.b16 %v2166, %v2162
    %v2899 = vpack.c.b16 %v2171, %v2167
    %v2900 = vpack.c.b16 %v2172, %v2168
    %v2901 = vpack.c.b16 %v2173, %v2169
    %v2902 = vpack.c.b16 %v2174, %v2170
    %v2903 = vpack.c.b16 %v2179, %v2175
    %v2904 = vpack.c.b16 %v2180, %v2176
    %v2905 = vpack.c.b16 %v2181, %v2177
    %v2906 = vpack.c.b16 %v2182, %v2178
    %v2907 = vpack.c.b16 %v2187, %v2183
    %v2908 = vpack.c.b16 %v2188, %v2184
    %v2909 = vpack.c.b16 %v2189, %v2185
    %v2910 = vpack.c.b16 %v2190, %v2186
    %v2911 = vpack.c.b16 %v2195, %v2191
    %v2912 = vpack.c.b16 %v2196, %v2192
    %v2913 = vpack.c.b16 %v2197, %v2193
    %v2914 = vpack.c.b16 %v2198, %v2194
    %v2915 = vpack.c.b16 %v2203, %v2199
    %v2916 = vpack.c.b16 %v2204, %v2200
    %v2917 = vpack.c.b16 %v2205, %v2201
    %v2918 = vpack.c.b16 %v2206, %v2202
    %v2919 = vpack.c.b16 %v2211, %v2207
    %v2920 = vpack.c.b16 %v2212, %v2208
    %v2921 = vpack.c.b16 %v2213, %v2209
    %v2922 = vpack.c.b16 %v2214, %v2210
    %v2923 = vpack.c.b16 %v2219, %v2215
    %v2924 = vpack.c.b16 %v2220, %v2216
    %v2925 = vpack.c.b16 %v2221, %v2217
    %v2926 = vpack.c.b16 %v2222, %v2218
    %v2927 = vpack.c.b16 %v2227, %v2223
    %v2928 = vpack.c.b16 %v2228, %v2224
    %v2929 = vpack.c.b16 %v2229, %v2225
    %v2930 = vpack.c.b16 %v2230, %v2226
    %v2931 = vpack.c.b16 %v2235, %v2231
    %v2932 = vpack.c.b16 %v2236, %v2232
    %v2933 = vpack.c.b16 %v2237, %v2233
    %v2934 = vpack.c.b16 %v2238, %v2234
    %v2935 = vpack.c.b16 %v2243, %v2239
    %v2936 = vpack.c.b16 %v2244, %v2240
    %v2937 = vpack.c.b16 %v2245, %v2241
    %v2938 = vpack.c.b16 %v2246, %v2242
    %v2939 = vpack.c.b16 %v2251, %v2247
    %v2940 = vpack.c.b16 %v2252, %v2248
    %v2941 = vpack.c.b16 %v2253, %v2249
    %v2942 = vpack.c.b16 %v2254, %v2250
    %v2943 = vpack.c.b16 %v2259, %v2255
    %v2944 = vpack.c.b16 %v2260, %v2256
    %v2945 = vpack.c.b16 %v2261, %v2257
    %v2946 = vpack.c.b16 %v2262, %v2258
    %v2947 = vpack.c.b16 %v2267, %v2263
    %v2948 = vpack.c.b16 %v2268, %v2264
    %v2949 = vpack.c.b16 %v2269, %v2265
    %v2950 = vpack.c.b16 %v2270, %v2266
    %v2951 = vpack.c.b16 %v2275, %v2271
    %v2952 = vpack.c.b16 %v2276, %v2272
    %v2953 = vpack.c.b16 %v2277, %v2273
    %v2954 = vpack.c.b16 %v2278, %v2274
    %v2955 = vpack.c.b16 %v2283, %v2279
    %v2956 = vpack.c.b16 %v2284, %v2280
    %v2957 = vpack.c.b16 %v2285, %v2281
    %v2958 = vpack.c.b16 %v2286, %v2282
    %v2959 = vpack.c.b16 %v2291, %v2287
    %v2960 = vpack.c.b16 %v2292, %v2288
    %v2961 = vpack.c.b16 %v2293, %v2289
    %v2962 = vpack.c.b16 %v2294, %v2290
    %v2963 = vpack.c.b16 %v2299, %v2295
    %v2964 = vpack.c.b16 %v2300, %v2296
    %v2965 = vpack.c.b16 %v2301, %v2297
    %v2966 = vpack.c.b16 %v2302, %v2298
    %v2967 = vpack.c.b16 %v2307, %v2303
    %v2968 = vpack.c.b16 %v2308, %v2304
    %v2969 = vpack.c.b16 %v2309, %v2305
    %v2970 = vpack.c.b16 %v2310, %v2306
    %v2971 = vpack.c.b16 %v2315, %v2311
    %v2972 = vpack.c.b16 %v2316, %v2312
    %v2973 = vpack.c.b16 %v2317, %v2313
    %v2974 = vpack.c.b16 %v2318, %v2314
    %v2975 = vpack.c.b16 %v2323, %v2319
    %v2976 = vpack.c.b16 %v2324, %v2320
    %v2977 = vpack.c.b16 %v2325, %v2321
    %v2978 = vpack.c.b16 %v2326, %v2322
    %v2979 = vpack.c.b16 %v2331, %v2327
    %v2980 = vpack.c.b16 %v2332, %v2328
    %v2981 = vpack.c.b16 %v2333, %v2329
    %v2982 = vpack.c.b16 %v2334, %v2330
    %v2983 = vpack.c.b16 %v2339, %v2335
    %v2984 = vpack.c.b16 %v2340, %v2336
    %v2985 = vpack.c.b16 %v2341, %v2337
    %v2986 = vpack.c.b16 %v2342, %v2338
    %v2987 = vpack.c.b16 %v2347, %v2343
    %v2988 = vpack.c.b16 %v2348, %v2344
    %v2989 = vpack.c.b16 %v2349, %v2345
    %v2990 = vpack.c.b16 %v2350, %v2346
    %v2991 = vpack.c.b16 %v2355, %v2351
    %v2992 = vpack.c.b16 %v2356, %v2352
    %v2993 = vpack.c.b16 %v2357, %v2353
    %v2994 = vpack.c.b16 %v2358, %v2354
    %v2995 = vpack.c.b16 %v2363, %v2359
    %v2996 = vpack.c.b16 %v2364, %v2360
    %v2997 = vpack.c.b16 %v2365, %v2361
    %v2998 = vpack.c.b16 %v2366, %v2362
    %v2999 = vpack.c.b16 %v2371, %v2367
    %v3000 = vpack.c.b16 %v2372, %v2368
    %v3001 = vpack.c.b16 %v2373, %v2369
    %v3002 = vpack.c.b16 %v2374, %v2370
    %v3003 = vpack.c.b16 %v2379, %v2375
    %v3004 = vpack.c.b16 %v2380, %v2376
    %v3005 = vpack.c.b16 %v2381, %v2377
    %v3006 = vpack.c.b16 %v2382, %v2378
    %v3007 = vpack.c.b16 %v2387, %v2383
    %v3008 = vpack.c.b16 %v2388, %v2384
    %v3009 = vpack.c.b16 %v2389, %v2385
    %v3010 = vpack.c.b16 %v2390, %v2386
    %v3011 = vpack.c.b16 %v2395, %v2391
    %v3012 = vpack.c.b16 %v2396, %v2392
    %v3013 = vpack.c.b16 %v2397, %v2393
    %v3014 = vpack.c.b16 %v2398, %v2394
    %v3015 = vpack.c.b16 %v2403, %v2399
    %v3016 = vpack.c.b16 %v2404, %v2400
    %v3017 = vpack.c.b16 %v2405, %v2401
    %v3018 = vpack.c.b16 %v2406, %v2402
    %v3019 = vpack.c.b16 %v2411, %v2407
    %v3020 = vpack.c.b16 %v2412, %v2408
    %v3021 = vpack.c.b16 %v2413, %v2409
    %v3022 = vpack.c.b16 %v2414, %v2410
    %v3023 = vpack.c.b16 %v2419, %v2415
    %v3024 = vpack.c.b16 %v2420, %v2416
    %v3025 = vpack.c.b16 %v2421, %v2417
    %v3026 = vpack.c.b16 %v2422, %v2418
    %v3027 = vpack.c.b16 %v2427, %v2423
    %v3028 = vpack.c.b16 %v2428, %v2424
    %v3029 = vpack.c.b16 %v2429, %v2425
    %v3030 = vpack.c.b16 %v2430, %v2426
    %v3031 = vpack.c.b16 %v2435, %v2431
    %v3032 = vpack.c.b16 %v2436, %v2432
    %v3033 = vpack.c.b16 %v2437, %v2433
    %v3034 = vpack.c.b16 %v2438, %v2434
    %v3035 = vpack.c.b16 %v2443, %v2439
    %v3036 = vpack.c.b16 %v2444, %v2440
    %v3037 = vpack.c.b16 %v2445, %v2441
    %v3038 = vpack.c.b16 %v2446, %v2442
    %v3039 = vpack.c.b16 %v2451, %v2447
    %v3040 = vpack.c.b16 %v2452, %v2448
    %v3041 = vpack.c.b16 %v2453, %v2449
    %v3042 = vpack.c.b16 %v2454, %v2450
    %v3043 = vpack.c.b16 %v2459, %v2455
    %v3044 = vpack.c.b16 %v2460, %v2456
    %v3045 = vpack.c.b16 %v2461, %v2457
    %v3046 = vpack.c.b16 %v2462, %v2458
    %v3047 = vpack.c.b16 %v2467, %v2463
    %v3048 = vpack.c.b16 %v2468, %v2464
    %v3049 = vpack.c.b16 %v2469, %v2465
    %v3050 = vpack.c.b16 %v2470, %v2466
    %v3051 = vpack.c.b16 %v2475, %v2471
    %v3052 = vpack.c.b16 %v2476, %v2472
    %v3053 = vpack.c.b16 %v2477, %v2473
    %v3054 = vpack.c.b16 %v2478, %v2474
    %3631 = vmatpush.bf16.msra.mxu0 %v2507
    %3632 = vmatpush.bf16.msra.mxu0 %v2503
    %3633 = vmatpush.bf16.msra.mxu0 %v2499
    %3634 = vmatpush.bf16.msra.mxu0 %v2495
    %3635 = vmatpush.bf16.msra.mxu0 %v2491
    %3636 = vmatpush.bf16.msra.mxu0 %v2487
    %3637 = vmatpush.bf16.msra.mxu0 %v2483
    %3638 = vmatpush.bf16.msra.mxu0 %v2479
    %3639 = vmatmul.bf16.gmra.mxu0 %v715
    %v3640 = vpop.f32.mrf.mxu0
    %v3641 = vadd.f32 %v680, %v3640
    %v3642 = vpop.f32.mrf.mxu0
    %3643 = vdwg.mxu0
    %3644 = vmatpush.bf16.msra.mxu0 %v2539
    %3645 = vmatpush.bf16.msra.mxu0 %v2535
    %3646 = vmatpush.bf16.msra.mxu0 %v2531
    %3647 = vmatpush.bf16.msra.mxu0 %v2527
    %3648 = vmatpush.bf16.msra.mxu0 %v2523
    %3649 = vmatpush.bf16.msra.mxu0 %v2519
    %3650 = vmatpush.bf16.msra.mxu0 %v2515
    %3651 = vmatpush.bf16.msra.mxu0 %v2511
    %3652 = vmatmul.bf16.gmra.mxu0 %v716
    %v3653 = vpop.f32.mrf.mxu0
    %v3654 = vadd.f32 %v3641, %v3653
    %v3655 = vpop.f32.mrf.mxu0
    %3656 = vdwg.mxu0
    %3657 = vmatpush.bf16.msra.mxu0 %v2571
    %3658 = vmatpush.bf16.msra.mxu0 %v2567
    %3659 = vmatpush.bf16.msra.mxu0 %v2563
    %3660 = vmatpush.bf16.msra.mxu0 %v2559
    %3661 = vmatpush.bf16.msra.mxu0 %v2555
    %3662 = vmatpush.bf16.msra.mxu0 %v2551
    %3663 = vmatpush.bf16.msra.mxu0 %v2547
    %3664 = vmatpush.bf16.msra.mxu0 %v2543
    %3665 = vmatmul.bf16.gmra.mxu0 %v717
    %v3666 = vpop.f32.mrf.mxu0
    %v3667 = vadd.f32 %v3654, %v3666
    %v3668 = vpop.f32.mrf.mxu0
    %3669 = vdwg.mxu0
    %3670 = vmatpush.bf16.msra.mxu0 %v2603
    %3671 = vmatpush.bf16.msra.mxu0 %v2599
    %3672 = vmatpush.bf16.msra.mxu0 %v2595
    %3673 = vmatpush.bf16.msra.mxu0 %v2591
    %3674 = vmatpush.bf16.msra.mxu0 %v2587
    %3675 = vmatpush.bf16.msra.mxu0 %v2583
    %3676 = vmatpush.bf16.msra.mxu0 %v2579
    %3677 = vmatpush.bf16.msra.mxu0 %v2575
    %3678 = vmatmul.bf16.gmra.mxu0 %v718
    %v3679 = vpop.f32.mrf.mxu0
    %v3680 = vadd.f32 %v3667, %v3679
    %v3681 = vpop.f32.mrf.mxu0
    %3682 = vdwg.mxu0
    %3683 = vmatpush.bf16.msra.mxu0 %v2635
    %3684 = vmatpush.bf16.msra.mxu0 %v2631
    %3685 = vmatpush.bf16.msra.mxu0 %v2627
    %3686 = vmatpush.bf16.msra.mxu0 %v2623
    %3687 = vmatpush.bf16.msra.mxu0 %v2619
    %3688 = vmatpush.bf16.msra.mxu0 %v2615
    %3689 = vmatpush.bf16.msra.mxu0 %v2611
    %3690 = vmatpush.bf16.msra.mxu0 %v2607
    %3691 = vmatmul.bf16.gmra.mxu0 %v719
    %v3692 = vpop.f32.mrf.mxu0
    %v3693 = vadd.f32 %v3680, %v3692
    %v3694 = vpop.f32.mrf.mxu0
    %3695 = vdwg.mxu0
    %3696 = vmatpush.bf16.msra.mxu0 %v2667
    %3697 = vmatpush.bf16.msra.mxu0 %v2663
    %3698 = vmatpush.bf16.msra.mxu0 %v2659
    %3699 = vmatpush.bf16.msra.mxu0 %v2655
    %3700 = vmatpush.bf16.msra.mxu0 %v2651
    %3701 = vmatpush.bf16.msra.mxu0 %v2647
    %3702 = vmatpush.bf16.msra.mxu0 %v2643
    %3703 = vmatpush.bf16.msra.mxu0 %v2639
    %3704 = vmatmul.bf16.gmra.mxu0 %v720
    %v3705 = vpop.f32.mrf.mxu0
    %v3706 = vadd.f32 %v3693, %v3705
    %v3707 = vpop.f32.mrf.mxu0
    %3708 = vdwg.mxu0
    %3709 = vmatpush.bf16.msra.mxu0 %v2699
    %3710 = vmatpush.bf16.msra.mxu0 %v2695
    %3711 = vmatpush.bf16.msra.mxu0 %v2691
    %3712 = vmatpush.bf16.msra.mxu0 %v2687
    %3713 = vmatpush.bf16.msra.mxu0 %v2683
    %3714 = vmatpush.bf16.msra.mxu0 %v2679
    %3715 = vmatpush.bf16.msra.mxu0 %v2675
    %3716 = vmatpush.bf16.msra.mxu0 %v2671
    %3717 = vmatmul.bf16.gmra.mxu0 %v721
    %v3718 = vpop.f32.mrf.mxu0
    %v3719 = vadd.f32 %v3706, %v3718
    %v3720 = vpop.f32.mrf.mxu0
    %3721 = vdwg.mxu0
    %3722 = vmatpush.bf16.msra.mxu0 %v2731
    %3723 = vmatpush.bf16.msra.mxu0 %v2727
    %3724 = vmatpush.bf16.msra.mxu0 %v2723
    %3725 = vmatpush.bf16.msra.mxu0 %v2719
    %3726 = vmatpush.bf16.msra.mxu0 %v2715
    %3727 = vmatpush.bf16.msra.mxu0 %v2711
    %3728 = vmatpush.bf16.msra.mxu0 %v2707
    %3729 = vmatpush.bf16.msra.mxu0 %v2703
    %3730 = vmatmul.bf16.gmra.mxu0 %v722
    %v3731 = vpop.f32.mrf.mxu0
    %v3732 = vadd.f32 %v3719, %v3731
    %v3733 = vpop.f32.mrf.mxu0
    %3734 = vdwg.mxu0
    %3735 = vmatpush.bf16.msra.mxu0 %v2763
    %3736 = vmatpush.bf16.msra.mxu0 %v2759
    %3737 = vmatpush.bf16.msra.mxu0 %v2755
    %3738 = vmatpush.bf16.msra.mxu0 %v2751
    %3739 = vmatpush.bf16.msra.mxu0 %v2747
    %3740 = vmatpush.bf16.msra.mxu0 %v2743
    %3741 = vmatpush.bf16.msra.mxu0 %v2739
    %3742 = vmatpush.bf16.msra.mxu0 %v2735
    %3743 = vmatmul.bf16.gmra.mxu0 %v723
    %v3744 = vpop.f32.mrf.mxu0
    %v3745 = vadd.f32 %v3732, %v3744
    %v3746 = vpop.f32.mrf.mxu0
    %3747 = vdwg.mxu0
    %3748 = vmatpush.bf16.msra.mxu0 %v2795
    %3749 = vmatpush.bf16.msra.mxu0 %v2791
    %3750 = vmatpush.bf16.msra.mxu0 %v2787
    %3751 = vmatpush.bf16.msra.mxu0 %v2783
    %3752 = vmatpush.bf16.msra.mxu0 %v2779
    %3753 = vmatpush.bf16.msra.mxu0 %v2775
    %3754 = vmatpush.bf16.msra.mxu0 %v2771
    %3755 = vmatpush.bf16.msra.mxu0 %v2767
    %3756 = vmatmul.bf16.gmra.mxu0 %v724
    %v3757 = vpop.f32.mrf.mxu0
    %v3758 = vadd.f32 %v3745, %v3757
    %v3759 = vpop.f32.mrf.mxu0
    %3760 = vdwg.mxu0
    %3761 = vmatpush.bf16.msra.mxu0 %v2827
    %3762 = vmatpush.bf16.msra.mxu0 %v2823
    %3763 = vmatpush.bf16.msra.mxu0 %v2819
    %3764 = vmatpush.bf16.msra.mxu0 %v2815
    %3765 = vmatpush.bf16.msra.mxu0 %v2811
    %3766 = vmatpush.bf16.msra.mxu0 %v2807
    %3767 = vmatpush.bf16.msra.mxu0 %v2803
    %3768 = vmatpush.bf16.msra.mxu0 %v2799
    %3769 = vmatmul.bf16.gmra.mxu0 %v725
    %v3770 = vpop.f32.mrf.mxu0
    %v3771 = vadd.f32 %v3758, %v3770
    %v3772 = vpop.f32.mrf.mxu0
    %3773 = vdwg.mxu0
    %3774 = vmatpush.bf16.msra.mxu0 %v2859
    %3775 = vmatpush.bf16.msra.mxu0 %v2855
    %3776 = vmatpush.bf16.msra.mxu0 %v2851
    %3777 = vmatpush.bf16.msra.mxu0 %v2847
    %3778 = vmatpush.bf16.msra.mxu0 %v2843
    %3779 = vmatpush.bf16.msra.mxu0 %v2839
    %3780 = vmatpush.bf16.msra.mxu0 %v2835
    %3781 = vmatpush.bf16.msra.mxu0 %v2831
    %3782 = vmatmul.bf16.gmra.mxu0 %v726
    %v3783 = vpop.f32.mrf.mxu0
    %v3784 = vadd.f32 %v3771, %v3783
    %v3785 = vpop.f32.mrf.mxu0
    %3786 = vdwg.mxu0
    %3787 = vmatpush.bf16.msra.mxu0 %v2891
    %3788 = vmatpush.bf16.msra.mxu0 %v2887
    %3789 = vmatpush.bf16.msra.mxu0 %v2883
    %3790 = vmatpush.bf16.msra.mxu0 %v2879
    %3791 = vmatpush.bf16.msra.mxu0 %v2875
    %3792 = vmatpush.bf16.msra.mxu0 %v2871
    %3793 = vmatpush.bf16.msra.mxu0 %v2867
    %3794 = vmatpush.bf16.msra.mxu0 %v2863
    %3795 = vmatmul.bf16.gmra.mxu0 %v727
    %v3796 = vpop.f32.mrf.mxu0
    %v3797 = vadd.f32 %v3784, %v3796
    %v3798 = vpop.f32.mrf.mxu0
    %3799 = vdwg.mxu0
    %3800 = vmatpush.bf16.msra.mxu0 %v2923
    %3801 = vmatpush.bf16.msra.mxu0 %v2919
    %3802 = vmatpush.bf16.msra.mxu0 %v2915
    %3803 = vmatpush.bf16.msra.mxu0 %v2911
    %3804 = vmatpush.bf16.msra.mxu0 %v2907
    %3805 = vmatpush.bf16.msra.mxu0 %v2903
    %3806 = vmatpush.bf16.msra.mxu0 %v2899
    %3807 = vmatpush.bf16.msra.mxu0 %v2895
    %3808 = vmatmul.bf16.gmra.mxu0 %v728
    %v3809 = vpop.f32.mrf.mxu0
    %v3810 = vadd.f32 %v3797, %v3809
    %v3811 = vpop.f32.mrf.mxu0
    %3812 = vdwg.mxu0
    %3813 = vmatpush.bf16.msra.mxu0 %v2955
    %3814 = vmatpush.bf16.msra.mxu0 %v2951
    %3815 = vmatpush.bf16.msra.mxu0 %v2947
    %3816 = vmatpush.bf16.msra.mxu0 %v2943
    %3817 = vmatpush.bf16.msra.mxu0 %v2939
    %3818 = vmatpush.bf16.msra.mxu0 %v2935
    %3819 = vmatpush.bf16.msra.mxu0 %v2931
    %3820 = vmatpush.bf16.msra.mxu0 %v2927
    %3821 = vmatmul.bf16.gmra.mxu0 %v729
    %v3822 = vpop.f32.mrf.mxu0
    %v3823 = vadd.f32 %v3810, %v3822
    %v3824 = vpop.f32.mrf.mxu0
    %3825 = vdwg.mxu0
    %3826 = vmatpush.bf16.msra.mxu0 %v2987
    %3827 = vmatpush.bf16.msra.mxu0 %v2983
    %3828 = vmatpush.bf16.msra.mxu0 %v2979
    %3829 = vmatpush.bf16.msra.mxu0 %v2975
    %3830 = vmatpush.bf16.msra.mxu0 %v2971
    %3831 = vmatpush.bf16.msra.mxu0 %v2967
    %3832 = vmatpush.bf16.msra.mxu0 %v2963
    %3833 = vmatpush.bf16.msra.mxu0 %v2959
    %3834 = vmatmul.bf16.gmra.mxu0 %v730
    %v3835 = vpop.f32.mrf.mxu0
    %v3836 = vadd.f32 %v3823, %v3835
    %v3837 = vpop.f32.mrf.mxu0
    %3838 = vdwg.mxu0
    %3839 = vmatpush.bf16.msra.mxu0 %v3019
    %3840 = vmatpush.bf16.msra.mxu0 %v3015
    %3841 = vmatpush.bf16.msra.mxu0 %v3011
    %3842 = vmatpush.bf16.msra.mxu0 %v3007
    %3843 = vmatpush.bf16.msra.mxu0 %v3003
    %3844 = vmatpush.bf16.msra.mxu0 %v2999
    %3845 = vmatpush.bf16.msra.mxu0 %v2995
    %3846 = vmatpush.bf16.msra.mxu0 %v2991
    %3847 = vmatmul.bf16.gmra.mxu0 %v731
    %v3848 = vpop.f32.mrf.mxu0
    %v3849 = vadd.f32 %v3836, %v3848
    %v3850 = vpop.f32.mrf.mxu0
    %3851 = vdwg.mxu0
    %3852 = vmatpush.bf16.msra.mxu0 %v3051
    %3853 = vmatpush.bf16.msra.mxu0 %v3047
    %3854 = vmatpush.bf16.msra.mxu0 %v3043
    %3855 = vmatpush.bf16.msra.mxu0 %v3039
    %3856 = vmatpush.bf16.msra.mxu0 %v3035
    %3857 = vmatpush.bf16.msra.mxu0 %v3031
    %3858 = vmatpush.bf16.msra.mxu0 %v3027
    %3859 = vmatpush.bf16.msra.mxu0 %v3023
    %3860 = vmatmul.bf16.gmra.mxu0 %v732
    %v3861 = vpop.f32.mrf.mxu0
    %v3862 = vadd.f32 %v3849, %v3861
    %v3863 = vpop.f32.mrf.mxu0
    %3864 = vdwg.mxu0
    %3865 = vmatpush.bf16.msra.mxu0 %v2508
    %3866 = vmatpush.bf16.msra.mxu0 %v2504
    %3867 = vmatpush.bf16.msra.mxu0 %v2500
    %3868 = vmatpush.bf16.msra.mxu0 %v2496
    %3869 = vmatpush.bf16.msra.mxu0 %v2492
    %3870 = vmatpush.bf16.msra.mxu0 %v2488
    %3871 = vmatpush.bf16.msra.mxu0 %v2484
    %3872 = vmatpush.bf16.msra.mxu0 %v2480
    %3873 = vmatmul.bf16.gmra.mxu0 %v715
    %v3874 = vpop.f32.mrf.mxu0
    %v3875 = vadd.f32 %v681, %v3874
    %v3876 = vpop.f32.mrf.mxu0
    %3877 = vdwg.mxu0
    %3878 = vmatpush.bf16.msra.mxu0 %v2540
    %3879 = vmatpush.bf16.msra.mxu0 %v2536
    %3880 = vmatpush.bf16.msra.mxu0 %v2532
    %3881 = vmatpush.bf16.msra.mxu0 %v2528
    %3882 = vmatpush.bf16.msra.mxu0 %v2524
    %3883 = vmatpush.bf16.msra.mxu0 %v2520
    %3884 = vmatpush.bf16.msra.mxu0 %v2516
    %3885 = vmatpush.bf16.msra.mxu0 %v2512
    %3886 = vmatmul.bf16.gmra.mxu0 %v716
    %v3887 = vpop.f32.mrf.mxu0
    %v3888 = vadd.f32 %v3875, %v3887
    %v3889 = vpop.f32.mrf.mxu0
    %3890 = vdwg.mxu0
    %3891 = vmatpush.bf16.msra.mxu0 %v2572
    %3892 = vmatpush.bf16.msra.mxu0 %v2568
    %3893 = vmatpush.bf16.msra.mxu0 %v2564
    %3894 = vmatpush.bf16.msra.mxu0 %v2560
    %3895 = vmatpush.bf16.msra.mxu0 %v2556
    %3896 = vmatpush.bf16.msra.mxu0 %v2552
    %3897 = vmatpush.bf16.msra.mxu0 %v2548
    %3898 = vmatpush.bf16.msra.mxu0 %v2544
    %3899 = vmatmul.bf16.gmra.mxu0 %v717
    %v3900 = vpop.f32.mrf.mxu0
    %v3901 = vadd.f32 %v3888, %v3900
    %v3902 = vpop.f32.mrf.mxu0
    %3903 = vdwg.mxu0
    %3904 = vmatpush.bf16.msra.mxu0 %v2604
    %3905 = vmatpush.bf16.msra.mxu0 %v2600
    %3906 = vmatpush.bf16.msra.mxu0 %v2596
    %3907 = vmatpush.bf16.msra.mxu0 %v2592
    %3908 = vmatpush.bf16.msra.mxu0 %v2588
    %3909 = vmatpush.bf16.msra.mxu0 %v2584
    %3910 = vmatpush.bf16.msra.mxu0 %v2580
    %3911 = vmatpush.bf16.msra.mxu0 %v2576
    %3912 = vmatmul.bf16.gmra.mxu0 %v718
    %v3913 = vpop.f32.mrf.mxu0
    %v3914 = vadd.f32 %v3901, %v3913
    %v3915 = vpop.f32.mrf.mxu0
    %3916 = vdwg.mxu0
    %3917 = vmatpush.bf16.msra.mxu0 %v2636
    %3918 = vmatpush.bf16.msra.mxu0 %v2632
    %3919 = vmatpush.bf16.msra.mxu0 %v2628
    %3920 = vmatpush.bf16.msra.mxu0 %v2624
    %3921 = vmatpush.bf16.msra.mxu0 %v2620
    %3922 = vmatpush.bf16.msra.mxu0 %v2616
    %3923 = vmatpush.bf16.msra.mxu0 %v2612
    %3924 = vmatpush.bf16.msra.mxu0 %v2608
    %3925 = vmatmul.bf16.gmra.mxu0 %v719
    %v3926 = vpop.f32.mrf.mxu0
    %v3927 = vadd.f32 %v3914, %v3926
    %v3928 = vpop.f32.mrf.mxu0
    %3929 = vdwg.mxu0
    %3930 = vmatpush.bf16.msra.mxu0 %v2668
    %3931 = vmatpush.bf16.msra.mxu0 %v2664
    %3932 = vmatpush.bf16.msra.mxu0 %v2660
    %3933 = vmatpush.bf16.msra.mxu0 %v2656
    %3934 = vmatpush.bf16.msra.mxu0 %v2652
    %3935 = vmatpush.bf16.msra.mxu0 %v2648
    %3936 = vmatpush.bf16.msra.mxu0 %v2644
    %3937 = vmatpush.bf16.msra.mxu0 %v2640
    %3938 = vmatmul.bf16.gmra.mxu0 %v720
    %v3939 = vpop.f32.mrf.mxu0
    %v3940 = vadd.f32 %v3927, %v3939
    %v3941 = vpop.f32.mrf.mxu0
    %3942 = vdwg.mxu0
    %3943 = vmatpush.bf16.msra.mxu0 %v2700
    %3944 = vmatpush.bf16.msra.mxu0 %v2696
    %3945 = vmatpush.bf16.msra.mxu0 %v2692
    %3946 = vmatpush.bf16.msra.mxu0 %v2688
    %3947 = vmatpush.bf16.msra.mxu0 %v2684
    %3948 = vmatpush.bf16.msra.mxu0 %v2680
    %3949 = vmatpush.bf16.msra.mxu0 %v2676
    %3950 = vmatpush.bf16.msra.mxu0 %v2672
    %3951 = vmatmul.bf16.gmra.mxu0 %v721
    %v3952 = vpop.f32.mrf.mxu0
    %v3953 = vadd.f32 %v3940, %v3952
    %v3954 = vpop.f32.mrf.mxu0
    %3955 = vdwg.mxu0
    %3956 = vmatpush.bf16.msra.mxu0 %v2732
    %3957 = vmatpush.bf16.msra.mxu0 %v2728
    %3958 = vmatpush.bf16.msra.mxu0 %v2724
    %3959 = vmatpush.bf16.msra.mxu0 %v2720
    %3960 = vmatpush.bf16.msra.mxu0 %v2716
    %3961 = vmatpush.bf16.msra.mxu0 %v2712
    %3962 = vmatpush.bf16.msra.mxu0 %v2708
    %3963 = vmatpush.bf16.msra.mxu0 %v2704
    %3964 = vmatmul.bf16.gmra.mxu0 %v722
    %v3965 = vpop.f32.mrf.mxu0
    %v3966 = vadd.f32 %v3953, %v3965
    %v3967 = vpop.f32.mrf.mxu0
    %3968 = vdwg.mxu0
    %3969 = vmatpush.bf16.msra.mxu0 %v2764
    %3970 = vmatpush.bf16.msra.mxu0 %v2760
    %3971 = vmatpush.bf16.msra.mxu0 %v2756
    %3972 = vmatpush.bf16.msra.mxu0 %v2752
    %3973 = vmatpush.bf16.msra.mxu0 %v2748
    %3974 = vmatpush.bf16.msra.mxu0 %v2744
    %3975 = vmatpush.bf16.msra.mxu0 %v2740
    %3976 = vmatpush.bf16.msra.mxu0 %v2736
    %3977 = vmatmul.bf16.gmra.mxu0 %v723
    %v3978 = vpop.f32.mrf.mxu0
    %v3979 = vadd.f32 %v3966, %v3978
    %v3980 = vpop.f32.mrf.mxu0
    %3981 = vdwg.mxu0
    %3982 = vmatpush.bf16.msra.mxu0 %v2796
    %3983 = vmatpush.bf16.msra.mxu0 %v2792
    %3984 = vmatpush.bf16.msra.mxu0 %v2788
    %3985 = vmatpush.bf16.msra.mxu0 %v2784
    %3986 = vmatpush.bf16.msra.mxu0 %v2780
    %3987 = vmatpush.bf16.msra.mxu0 %v2776
    %3988 = vmatpush.bf16.msra.mxu0 %v2772
    %3989 = vmatpush.bf16.msra.mxu0 %v2768
    %3990 = vmatmul.bf16.gmra.mxu0 %v724
    %v3991 = vpop.f32.mrf.mxu0
    %v3992 = vadd.f32 %v3979, %v3991
    %v3993 = vpop.f32.mrf.mxu0
    %3994 = vdwg.mxu0
    %3995 = vmatpush.bf16.msra.mxu0 %v2828
    %3996 = vmatpush.bf16.msra.mxu0 %v2824
    %3997 = vmatpush.bf16.msra.mxu0 %v2820
    %3998 = vmatpush.bf16.msra.mxu0 %v2816
    %3999 = vmatpush.bf16.msra.mxu0 %v2812
    %4000 = vmatpush.bf16.msra.mxu0 %v2808
    %4001 = vmatpush.bf16.msra.mxu0 %v2804
    %4002 = vmatpush.bf16.msra.mxu0 %v2800
    %4003 = vmatmul.bf16.gmra.mxu0 %v725
    %v4004 = vpop.f32.mrf.mxu0
    %v4005 = vadd.f32 %v3992, %v4004
    %v4006 = vpop.f32.mrf.mxu0
    %4007 = vdwg.mxu0
    %4008 = vmatpush.bf16.msra.mxu0 %v2860
    %4009 = vmatpush.bf16.msra.mxu0 %v2856
    %4010 = vmatpush.bf16.msra.mxu0 %v2852
    %4011 = vmatpush.bf16.msra.mxu0 %v2848
    %4012 = vmatpush.bf16.msra.mxu0 %v2844
    %4013 = vmatpush.bf16.msra.mxu0 %v2840
    %4014 = vmatpush.bf16.msra.mxu0 %v2836
    %4015 = vmatpush.bf16.msra.mxu0 %v2832
    %4016 = vmatmul.bf16.gmra.mxu0 %v726
    %v4017 = vpop.f32.mrf.mxu0
    %v4018 = vadd.f32 %v4005, %v4017
    %v4019 = vpop.f32.mrf.mxu0
    %4020 = vdwg.mxu0
    %4021 = vmatpush.bf16.msra.mxu0 %v2892
    %4022 = vmatpush.bf16.msra.mxu0 %v2888
    %4023 = vmatpush.bf16.msra.mxu0 %v2884
    %4024 = vmatpush.bf16.msra.mxu0 %v2880
    %4025 = vmatpush.bf16.msra.mxu0 %v2876
    %4026 = vmatpush.bf16.msra.mxu0 %v2872
    %4027 = vmatpush.bf16.msra.mxu0 %v2868
    %4028 = vmatpush.bf16.msra.mxu0 %v2864
    %4029 = vmatmul.bf16.gmra.mxu0 %v727
    %v4030 = vpop.f32.mrf.mxu0
    %v4031 = vadd.f32 %v4018, %v4030
    %v4032 = vpop.f32.mrf.mxu0
    %4033 = vdwg.mxu0
    %4034 = vmatpush.bf16.msra.mxu0 %v2924
    %4035 = vmatpush.bf16.msra.mxu0 %v2920
    %4036 = vmatpush.bf16.msra.mxu0 %v2916
    %4037 = vmatpush.bf16.msra.mxu0 %v2912
    %4038 = vmatpush.bf16.msra.mxu0 %v2908
    %4039 = vmatpush.bf16.msra.mxu0 %v2904
    %4040 = vmatpush.bf16.msra.mxu0 %v2900
    %4041 = vmatpush.bf16.msra.mxu0 %v2896
    %4042 = vmatmul.bf16.gmra.mxu0 %v728
    %v4043 = vpop.f32.mrf.mxu0
    %v4044 = vadd.f32 %v4031, %v4043
    %v4045 = vpop.f32.mrf.mxu0
    %4046 = vdwg.mxu0
    %4047 = vmatpush.bf16.msra.mxu0 %v2956
    %4048 = vmatpush.bf16.msra.mxu0 %v2952
    %4049 = vmatpush.bf16.msra.mxu0 %v2948
    %4050 = vmatpush.bf16.msra.mxu0 %v2944
    %4051 = vmatpush.bf16.msra.mxu0 %v2940
    %4052 = vmatpush.bf16.msra.mxu0 %v2936
    %4053 = vmatpush.bf16.msra.mxu0 %v2932
    %4054 = vmatpush.bf16.msra.mxu0 %v2928
    %4055 = vmatmul.bf16.gmra.mxu0 %v729
    %v4056 = vpop.f32.mrf.mxu0
    %v4057 = vadd.f32 %v4044, %v4056
    %v4058 = vpop.f32.mrf.mxu0
    %4059 = vdwg.mxu0
    %4060 = vmatpush.bf16.msra.mxu0 %v2988
    %4061 = vmatpush.bf16.msra.mxu0 %v2984
    %4062 = vmatpush.bf16.msra.mxu0 %v2980
    %4063 = vmatpush.bf16.msra.mxu0 %v2976
    %4064 = vmatpush.bf16.msra.mxu0 %v2972
    %4065 = vmatpush.bf16.msra.mxu0 %v2968
    %4066 = vmatpush.bf16.msra.mxu0 %v2964
    %4067 = vmatpush.bf16.msra.mxu0 %v2960
    %4068 = vmatmul.bf16.gmra.mxu0 %v730
    %v4069 = vpop.f32.mrf.mxu0
    %v4070 = vadd.f32 %v4057, %v4069
    %v4071 = vpop.f32.mrf.mxu0
    %4072 = vdwg.mxu0
    %4073 = vmatpush.bf16.msra.mxu0 %v3020
    %4074 = vmatpush.bf16.msra.mxu0 %v3016
    %4075 = vmatpush.bf16.msra.mxu0 %v3012
    %4076 = vmatpush.bf16.msra.mxu0 %v3008
    %4077 = vmatpush.bf16.msra.mxu0 %v3004
    %4078 = vmatpush.bf16.msra.mxu0 %v3000
    %4079 = vmatpush.bf16.msra.mxu0 %v2996
    %4080 = vmatpush.bf16.msra.mxu0 %v2992
    %4081 = vmatmul.bf16.gmra.mxu0 %v731
    %v4082 = vpop.f32.mrf.mxu0
    %v4083 = vadd.f32 %v4070, %v4082
    %v4084 = vpop.f32.mrf.mxu0
    %4085 = vdwg.mxu0
    %4086 = vmatpush.bf16.msra.mxu0 %v3052
    %4087 = vmatpush.bf16.msra.mxu0 %v3048
    %4088 = vmatpush.bf16.msra.mxu0 %v3044
    %4089 = vmatpush.bf16.msra.mxu0 %v3040
    %4090 = vmatpush.bf16.msra.mxu0 %v3036
    %4091 = vmatpush.bf16.msra.mxu0 %v3032
    %4092 = vmatpush.bf16.msra.mxu0 %v3028
    %4093 = vmatpush.bf16.msra.mxu0 %v3024
    %4094 = vmatmul.bf16.gmra.mxu0 %v732
    %v4095 = vpop.f32.mrf.mxu0
    %v4096 = vadd.f32 %v4083, %v4095
    %v4097 = vpop.f32.mrf.mxu0
    %4098 = vdwg.mxu0
    %4099 = vmatpush.bf16.msra.mxu0 %v2509
    %4100 = vmatpush.bf16.msra.mxu0 %v2505
    %4101 = vmatpush.bf16.msra.mxu0 %v2501
    %4102 = vmatpush.bf16.msra.mxu0 %v2497
    %4103 = vmatpush.bf16.msra.mxu0 %v2493
    %4104 = vmatpush.bf16.msra.mxu0 %v2489
    %4105 = vmatpush.bf16.msra.mxu0 %v2485
    %4106 = vmatpush.bf16.msra.mxu0 %v2481
    %4107 = vmatmul.bf16.gmra.mxu0 %v715
    %v4108 = vpop.f32.mrf.mxu0
    %v4109 = vadd.f32 %v682, %v4108
    %v4110 = vpop.f32.mrf.mxu0
    %4111 = vdwg.mxu0
    %4112 = vmatpush.bf16.msra.mxu0 %v2541
    %4113 = vmatpush.bf16.msra.mxu0 %v2537
    %4114 = vmatpush.bf16.msra.mxu0 %v2533
    %4115 = vmatpush.bf16.msra.mxu0 %v2529
    %4116 = vmatpush.bf16.msra.mxu0 %v2525
    %4117 = vmatpush.bf16.msra.mxu0 %v2521
    %4118 = vmatpush.bf16.msra.mxu0 %v2517
    %4119 = vmatpush.bf16.msra.mxu0 %v2513
    %4120 = vmatmul.bf16.gmra.mxu0 %v716
    %v4121 = vpop.f32.mrf.mxu0
    %v4122 = vadd.f32 %v4109, %v4121
    %v4123 = vpop.f32.mrf.mxu0
    %4124 = vdwg.mxu0
    %4125 = vmatpush.bf16.msra.mxu0 %v2573
    %4126 = vmatpush.bf16.msra.mxu0 %v2569
    %4127 = vmatpush.bf16.msra.mxu0 %v2565
    %4128 = vmatpush.bf16.msra.mxu0 %v2561
    %4129 = vmatpush.bf16.msra.mxu0 %v2557
    %4130 = vmatpush.bf16.msra.mxu0 %v2553
    %4131 = vmatpush.bf16.msra.mxu0 %v2549
    %4132 = vmatpush.bf16.msra.mxu0 %v2545
    %4133 = vmatmul.bf16.gmra.mxu0 %v717
    %v4134 = vpop.f32.mrf.mxu0
    %v4135 = vadd.f32 %v4122, %v4134
    %v4136 = vpop.f32.mrf.mxu0
    %4137 = vdwg.mxu0
    %4138 = vmatpush.bf16.msra.mxu0 %v2605
    %4139 = vmatpush.bf16.msra.mxu0 %v2601
    %4140 = vmatpush.bf16.msra.mxu0 %v2597
    %4141 = vmatpush.bf16.msra.mxu0 %v2593
    %4142 = vmatpush.bf16.msra.mxu0 %v2589
    %4143 = vmatpush.bf16.msra.mxu0 %v2585
    %4144 = vmatpush.bf16.msra.mxu0 %v2581
    %4145 = vmatpush.bf16.msra.mxu0 %v2577
    %4146 = vmatmul.bf16.gmra.mxu0 %v718
    %v4147 = vpop.f32.mrf.mxu0
    %v4148 = vadd.f32 %v4135, %v4147
    %v4149 = vpop.f32.mrf.mxu0
    %4150 = vdwg.mxu0
    %4151 = vmatpush.bf16.msra.mxu0 %v2637
    %4152 = vmatpush.bf16.msra.mxu0 %v2633
    %4153 = vmatpush.bf16.msra.mxu0 %v2629
    %4154 = vmatpush.bf16.msra.mxu0 %v2625
    %4155 = vmatpush.bf16.msra.mxu0 %v2621
    %4156 = vmatpush.bf16.msra.mxu0 %v2617
    %4157 = vmatpush.bf16.msra.mxu0 %v2613
    %4158 = vmatpush.bf16.msra.mxu0 %v2609
    %4159 = vmatmul.bf16.gmra.mxu0 %v719
    %v4160 = vpop.f32.mrf.mxu0
    %v4161 = vadd.f32 %v4148, %v4160
    %v4162 = vpop.f32.mrf.mxu0
    %4163 = vdwg.mxu0
    %4164 = vmatpush.bf16.msra.mxu0 %v2669
    %4165 = vmatpush.bf16.msra.mxu0 %v2665
    %4166 = vmatpush.bf16.msra.mxu0 %v2661
    %4167 = vmatpush.bf16.msra.mxu0 %v2657
    %4168 = vmatpush.bf16.msra.mxu0 %v2653
    %4169 = vmatpush.bf16.msra.mxu0 %v2649
    %4170 = vmatpush.bf16.msra.mxu0 %v2645
    %4171 = vmatpush.bf16.msra.mxu0 %v2641
    %4172 = vmatmul.bf16.gmra.mxu0 %v720
    %v4173 = vpop.f32.mrf.mxu0
    %v4174 = vadd.f32 %v4161, %v4173
    %v4175 = vpop.f32.mrf.mxu0
    %4176 = vdwg.mxu0
    %4177 = vmatpush.bf16.msra.mxu0 %v2701
    %4178 = vmatpush.bf16.msra.mxu0 %v2697
    %4179 = vmatpush.bf16.msra.mxu0 %v2693
    %4180 = vmatpush.bf16.msra.mxu0 %v2689
    %4181 = vmatpush.bf16.msra.mxu0 %v2685
    %4182 = vmatpush.bf16.msra.mxu0 %v2681
    %4183 = vmatpush.bf16.msra.mxu0 %v2677
    %4184 = vmatpush.bf16.msra.mxu0 %v2673
    %4185 = vmatmul.bf16.gmra.mxu0 %v721
    %v4186 = vpop.f32.mrf.mxu0
    %v4187 = vadd.f32 %v4174, %v4186
    %v4188 = vpop.f32.mrf.mxu0
    %4189 = vdwg.mxu0
    %4190 = vmatpush.bf16.msra.mxu0 %v2733
    %4191 = vmatpush.bf16.msra.mxu0 %v2729
    %4192 = vmatpush.bf16.msra.mxu0 %v2725
    %4193 = vmatpush.bf16.msra.mxu0 %v2721
    %4194 = vmatpush.bf16.msra.mxu0 %v2717
    %4195 = vmatpush.bf16.msra.mxu0 %v2713
    %4196 = vmatpush.bf16.msra.mxu0 %v2709
    %4197 = vmatpush.bf16.msra.mxu0 %v2705
    %4198 = vmatmul.bf16.gmra.mxu0 %v722
    %v4199 = vpop.f32.mrf.mxu0
    %v4200 = vadd.f32 %v4187, %v4199
    %v4201 = vpop.f32.mrf.mxu0
    %4202 = vdwg.mxu0
    %4203 = vmatpush.bf16.msra.mxu0 %v2765
    %4204 = vmatpush.bf16.msra.mxu0 %v2761
    %4205 = vmatpush.bf16.msra.mxu0 %v2757
    %4206 = vmatpush.bf16.msra.mxu0 %v2753
    %4207 = vmatpush.bf16.msra.mxu0 %v2749
    %4208 = vmatpush.bf16.msra.mxu0 %v2745
    %4209 = vmatpush.bf16.msra.mxu0 %v2741
    %4210 = vmatpush.bf16.msra.mxu0 %v2737
    %4211 = vmatmul.bf16.gmra.mxu0 %v723
    %v4212 = vpop.f32.mrf.mxu0
    %v4213 = vadd.f32 %v4200, %v4212
    %v4214 = vpop.f32.mrf.mxu0
    %4215 = vdwg.mxu0
    %4216 = vmatpush.bf16.msra.mxu0 %v2797
    %4217 = vmatpush.bf16.msra.mxu0 %v2793
    %4218 = vmatpush.bf16.msra.mxu0 %v2789
    %4219 = vmatpush.bf16.msra.mxu0 %v2785
    %4220 = vmatpush.bf16.msra.mxu0 %v2781
    %4221 = vmatpush.bf16.msra.mxu0 %v2777
    %4222 = vmatpush.bf16.msra.mxu0 %v2773
    %4223 = vmatpush.bf16.msra.mxu0 %v2769
    %4224 = vmatmul.bf16.gmra.mxu0 %v724
    %v4225 = vpop.f32.mrf.mxu0
    %v4226 = vadd.f32 %v4213, %v4225
    %v4227 = vpop.f32.mrf.mxu0
    %4228 = vdwg.mxu0
    %4229 = vmatpush.bf16.msra.mxu0 %v2829
    %4230 = vmatpush.bf16.msra.mxu0 %v2825
    %4231 = vmatpush.bf16.msra.mxu0 %v2821
    %4232 = vmatpush.bf16.msra.mxu0 %v2817
    %4233 = vmatpush.bf16.msra.mxu0 %v2813
    %4234 = vmatpush.bf16.msra.mxu0 %v2809
    %4235 = vmatpush.bf16.msra.mxu0 %v2805
    %4236 = vmatpush.bf16.msra.mxu0 %v2801
    %4237 = vmatmul.bf16.gmra.mxu0 %v725
    %v4238 = vpop.f32.mrf.mxu0
    %v4239 = vadd.f32 %v4226, %v4238
    %v4240 = vpop.f32.mrf.mxu0
    %4241 = vdwg.mxu0
    %4242 = vmatpush.bf16.msra.mxu0 %v2861
    %4243 = vmatpush.bf16.msra.mxu0 %v2857
    %4244 = vmatpush.bf16.msra.mxu0 %v2853
    %4245 = vmatpush.bf16.msra.mxu0 %v2849
    %4246 = vmatpush.bf16.msra.mxu0 %v2845
    %4247 = vmatpush.bf16.msra.mxu0 %v2841
    %4248 = vmatpush.bf16.msra.mxu0 %v2837
    %4249 = vmatpush.bf16.msra.mxu0 %v2833
    %4250 = vmatmul.bf16.gmra.mxu0 %v726
    %v4251 = vpop.f32.mrf.mxu0
    %v4252 = vadd.f32 %v4239, %v4251
    %v4253 = vpop.f32.mrf.mxu0
    %4254 = vdwg.mxu0
    %4255 = vmatpush.bf16.msra.mxu0 %v2893
    %4256 = vmatpush.bf16.msra.mxu0 %v2889
    %4257 = vmatpush.bf16.msra.mxu0 %v2885
    %4258 = vmatpush.bf16.msra.mxu0 %v2881
    %4259 = vmatpush.bf16.msra.mxu0 %v2877
    %4260 = vmatpush.bf16.msra.mxu0 %v2873
    %4261 = vmatpush.bf16.msra.mxu0 %v2869
    %4262 = vmatpush.bf16.msra.mxu0 %v2865
    %4263 = vmatmul.bf16.gmra.mxu0 %v727
    %v4264 = vpop.f32.mrf.mxu0
    %v4265 = vadd.f32 %v4252, %v4264
    %v4266 = vpop.f32.mrf.mxu0
    %4267 = vdwg.mxu0
    %4268 = vmatpush.bf16.msra.mxu0 %v2925
    %4269 = vmatpush.bf16.msra.mxu0 %v2921
    %4270 = vmatpush.bf16.msra.mxu0 %v2917
    %4271 = vmatpush.bf16.msra.mxu0 %v2913
    %4272 = vmatpush.bf16.msra.mxu0 %v2909
    %4273 = vmatpush.bf16.msra.mxu0 %v2905
    %4274 = vmatpush.bf16.msra.mxu0 %v2901
    %4275 = vmatpush.bf16.msra.mxu0 %v2897
    %4276 = vmatmul.bf16.gmra.mxu0 %v728
    %v4277 = vpop.f32.mrf.mxu0
    %v4278 = vadd.f32 %v4265, %v4277
    %v4279 = vpop.f32.mrf.mxu0
    %4280 = vdwg.mxu0
    %4281 = vmatpush.bf16.msra.mxu0 %v2957
    %4282 = vmatpush.bf16.msra.mxu0 %v2953
    %4283 = vmatpush.bf16.msra.mxu0 %v2949
    %4284 = vmatpush.bf16.msra.mxu0 %v2945
    %4285 = vmatpush.bf16.msra.mxu0 %v2941
    %4286 = vmatpush.bf16.msra.mxu0 %v2937
    %4287 = vmatpush.bf16.msra.mxu0 %v2933
    %4288 = vmatpush.bf16.msra.mxu0 %v2929
    %4289 = vmatmul.bf16.gmra.mxu0 %v729
    %v4290 = vpop.f32.mrf.mxu0
    %v4291 = vadd.f32 %v4278, %v4290
    %v4292 = vpop.f32.mrf.mxu0
    %4293 = vdwg.mxu0
    %4294 = vmatpush.bf16.msra.mxu0 %v2989
    %4295 = vmatpush.bf16.msra.mxu0 %v2985
    %4296 = vmatpush.bf16.msra.mxu0 %v2981
    %4297 = vmatpush.bf16.msra.mxu0 %v2977
    %4298 = vmatpush.bf16.msra.mxu0 %v2973
    %4299 = vmatpush.bf16.msra.mxu0 %v2969
    %4300 = vmatpush.bf16.msra.mxu0 %v2965
    %4301 = vmatpush.bf16.msra.mxu0 %v2961
    %4302 = vmatmul.bf16.gmra.mxu0 %v730
    %v4303 = vpop.f32.mrf.mxu0
    %v4304 = vadd.f32 %v4291, %v4303
    %v4305 = vpop.f32.mrf.mxu0
    %4306 = vdwg.mxu0
    %4307 = vmatpush.bf16.msra.mxu0 %v3021
    %4308 = vmatpush.bf16.msra.mxu0 %v3017
    %4309 = vmatpush.bf16.msra.mxu0 %v3013
    %4310 = vmatpush.bf16.msra.mxu0 %v3009
    %4311 = vmatpush.bf16.msra.mxu0 %v3005
    %4312 = vmatpush.bf16.msra.mxu0 %v3001
    %4313 = vmatpush.bf16.msra.mxu0 %v2997
    %4314 = vmatpush.bf16.msra.mxu0 %v2993
    %4315 = vmatmul.bf16.gmra.mxu0 %v731
    %v4316 = vpop.f32.mrf.mxu0
    %v4317 = vadd.f32 %v4304, %v4316
    %v4318 = vpop.f32.mrf.mxu0
    %4319 = vdwg.mxu0
    %4320 = vmatpush.bf16.msra.mxu0 %v3053
    %4321 = vmatpush.bf16.msra.mxu0 %v3049
    %4322 = vmatpush.bf16.msra.mxu0 %v3045
    %4323 = vmatpush.bf16.msra.mxu0 %v3041
    %4324 = vmatpush.bf16.msra.mxu0 %v3037
    %4325 = vmatpush.bf16.msra.mxu0 %v3033
    %4326 = vmatpush.bf16.msra.mxu0 %v3029
    %4327 = vmatpush.bf16.msra.mxu0 %v3025
    %4328 = vmatmul.bf16.gmra.mxu0 %v732
    %v4329 = vpop.f32.mrf.mxu0
    %v4330 = vadd.f32 %v4317, %v4329
    %v4331 = vpop.f32.mrf.mxu0
    %4332 = vdwg.mxu0
    %4333 = vmatpush.bf16.msra.mxu0 %v2510
    %4334 = vmatpush.bf16.msra.mxu0 %v2506
    %4335 = vmatpush.bf16.msra.mxu0 %v2502
    %4336 = vmatpush.bf16.msra.mxu0 %v2498
    %4337 = vmatpush.bf16.msra.mxu0 %v2494
    %4338 = vmatpush.bf16.msra.mxu0 %v2490
    %4339 = vmatpush.bf16.msra.mxu0 %v2486
    %4340 = vmatpush.bf16.msra.mxu0 %v2482
    %4341 = vmatmul.bf16.gmra.mxu0 %v715
    %v4342 = vpop.f32.mrf.mxu0
    %v4343 = vadd.f32 %v683, %v4342
    %v4344 = vpop.f32.mrf.mxu0
    %4345 = vdwg.mxu0
    %4346 = vmatpush.bf16.msra.mxu0 %v2542
    %4347 = vmatpush.bf16.msra.mxu0 %v2538
    %4348 = vmatpush.bf16.msra.mxu0 %v2534
    %4349 = vmatpush.bf16.msra.mxu0 %v2530
    %4350 = vmatpush.bf16.msra.mxu0 %v2526
    %4351 = vmatpush.bf16.msra.mxu0 %v2522
    %4352 = vmatpush.bf16.msra.mxu0 %v2518
    %4353 = vmatpush.bf16.msra.mxu0 %v2514
    %4354 = vmatmul.bf16.gmra.mxu0 %v716
    %v4355 = vpop.f32.mrf.mxu0
    %v4356 = vadd.f32 %v4343, %v4355
    %v4357 = vpop.f32.mrf.mxu0
    %4358 = vdwg.mxu0
    %4359 = vmatpush.bf16.msra.mxu0 %v2574
    %4360 = vmatpush.bf16.msra.mxu0 %v2570
    %4361 = vmatpush.bf16.msra.mxu0 %v2566
    %4362 = vmatpush.bf16.msra.mxu0 %v2562
    %4363 = vmatpush.bf16.msra.mxu0 %v2558
    %4364 = vmatpush.bf16.msra.mxu0 %v2554
    %4365 = vmatpush.bf16.msra.mxu0 %v2550
    %4366 = vmatpush.bf16.msra.mxu0 %v2546
    %4367 = vmatmul.bf16.gmra.mxu0 %v717
    %v4368 = vpop.f32.mrf.mxu0
    %v4369 = vadd.f32 %v4356, %v4368
    %v4370 = vpop.f32.mrf.mxu0
    %4371 = vdwg.mxu0
    %4372 = vmatpush.bf16.msra.mxu0 %v2606
    %4373 = vmatpush.bf16.msra.mxu0 %v2602
    %4374 = vmatpush.bf16.msra.mxu0 %v2598
    %4375 = vmatpush.bf16.msra.mxu0 %v2594
    %4376 = vmatpush.bf16.msra.mxu0 %v2590
    %4377 = vmatpush.bf16.msra.mxu0 %v2586
    %4378 = vmatpush.bf16.msra.mxu0 %v2582
    %4379 = vmatpush.bf16.msra.mxu0 %v2578
    %4380 = vmatmul.bf16.gmra.mxu0 %v718
    %v4381 = vpop.f32.mrf.mxu0
    %v4382 = vadd.f32 %v4369, %v4381
    %v4383 = vpop.f32.mrf.mxu0
    %4384 = vdwg.mxu0
    %4385 = vmatpush.bf16.msra.mxu0 %v2638
    %4386 = vmatpush.bf16.msra.mxu0 %v2634
    %4387 = vmatpush.bf16.msra.mxu0 %v2630
    %4388 = vmatpush.bf16.msra.mxu0 %v2626
    %4389 = vmatpush.bf16.msra.mxu0 %v2622
    %4390 = vmatpush.bf16.msra.mxu0 %v2618
    %4391 = vmatpush.bf16.msra.mxu0 %v2614
    %4392 = vmatpush.bf16.msra.mxu0 %v2610
    %4393 = vmatmul.bf16.gmra.mxu0 %v719
    %v4394 = vpop.f32.mrf.mxu0
    %v4395 = vadd.f32 %v4382, %v4394
    %v4396 = vpop.f32.mrf.mxu0
    %4397 = vdwg.mxu0
    %4398 = vmatpush.bf16.msra.mxu0 %v2670
    %4399 = vmatpush.bf16.msra.mxu0 %v2666
    %4400 = vmatpush.bf16.msra.mxu0 %v2662
    %4401 = vmatpush.bf16.msra.mxu0 %v2658
    %4402 = vmatpush.bf16.msra.mxu0 %v2654
    %4403 = vmatpush.bf16.msra.mxu0 %v2650
    %4404 = vmatpush.bf16.msra.mxu0 %v2646
    %4405 = vmatpush.bf16.msra.mxu0 %v2642
    %4406 = vmatmul.bf16.gmra.mxu0 %v720
    %v4407 = vpop.f32.mrf.mxu0
    %v4408 = vadd.f32 %v4395, %v4407
    %v4409 = vpop.f32.mrf.mxu0
    %4410 = vdwg.mxu0
    %4411 = vmatpush.bf16.msra.mxu0 %v2702
    %4412 = vmatpush.bf16.msra.mxu0 %v2698
    %4413 = vmatpush.bf16.msra.mxu0 %v2694
    %4414 = vmatpush.bf16.msra.mxu0 %v2690
    %4415 = vmatpush.bf16.msra.mxu0 %v2686
    %4416 = vmatpush.bf16.msra.mxu0 %v2682
    %4417 = vmatpush.bf16.msra.mxu0 %v2678
    %4418 = vmatpush.bf16.msra.mxu0 %v2674
    %4419 = vmatmul.bf16.gmra.mxu0 %v721
    %v4420 = vpop.f32.mrf.mxu0
    %v4421 = vadd.f32 %v4408, %v4420
    %v4422 = vpop.f32.mrf.mxu0
    %4423 = vdwg.mxu0
    %4424 = vmatpush.bf16.msra.mxu0 %v2734
    %4425 = vmatpush.bf16.msra.mxu0 %v2730
    %4426 = vmatpush.bf16.msra.mxu0 %v2726
    %4427 = vmatpush.bf16.msra.mxu0 %v2722
    %4428 = vmatpush.bf16.msra.mxu0 %v2718
    %4429 = vmatpush.bf16.msra.mxu0 %v2714
    %4430 = vmatpush.bf16.msra.mxu0 %v2710
    %4431 = vmatpush.bf16.msra.mxu0 %v2706
    %4432 = vmatmul.bf16.gmra.mxu0 %v722
    %v4433 = vpop.f32.mrf.mxu0
    %v4434 = vadd.f32 %v4421, %v4433
    %v4435 = vpop.f32.mrf.mxu0
    %4436 = vdwg.mxu0
    %4437 = vmatpush.bf16.msra.mxu0 %v2766
    %4438 = vmatpush.bf16.msra.mxu0 %v2762
    %4439 = vmatpush.bf16.msra.mxu0 %v2758
    %4440 = vmatpush.bf16.msra.mxu0 %v2754
    %4441 = vmatpush.bf16.msra.mxu0 %v2750
    %4442 = vmatpush.bf16.msra.mxu0 %v2746
    %4443 = vmatpush.bf16.msra.mxu0 %v2742
    %4444 = vmatpush.bf16.msra.mxu0 %v2738
    %4445 = vmatmul.bf16.gmra.mxu0 %v723
    %v4446 = vpop.f32.mrf.mxu0
    %v4447 = vadd.f32 %v4434, %v4446
    %v4448 = vpop.f32.mrf.mxu0
    %4449 = vdwg.mxu0
    %4450 = vmatpush.bf16.msra.mxu0 %v2798
    %4451 = vmatpush.bf16.msra.mxu0 %v2794
    %4452 = vmatpush.bf16.msra.mxu0 %v2790
    %4453 = vmatpush.bf16.msra.mxu0 %v2786
    %4454 = vmatpush.bf16.msra.mxu0 %v2782
    %4455 = vmatpush.bf16.msra.mxu0 %v2778
    %4456 = vmatpush.bf16.msra.mxu0 %v2774
    %4457 = vmatpush.bf16.msra.mxu0 %v2770
    %4458 = vmatmul.bf16.gmra.mxu0 %v724
    %v4459 = vpop.f32.mrf.mxu0
    %v4460 = vadd.f32 %v4447, %v4459
    %v4461 = vpop.f32.mrf.mxu0
    %4462 = vdwg.mxu0
    %4463 = vmatpush.bf16.msra.mxu0 %v2830
    %4464 = vmatpush.bf16.msra.mxu0 %v2826
    %4465 = vmatpush.bf16.msra.mxu0 %v2822
    %4466 = vmatpush.bf16.msra.mxu0 %v2818
    %4467 = vmatpush.bf16.msra.mxu0 %v2814
    %4468 = vmatpush.bf16.msra.mxu0 %v2810
    %4469 = vmatpush.bf16.msra.mxu0 %v2806
    %4470 = vmatpush.bf16.msra.mxu0 %v2802
    %4471 = vmatmul.bf16.gmra.mxu0 %v725
    %v4472 = vpop.f32.mrf.mxu0
    %v4473 = vadd.f32 %v4460, %v4472
    %v4474 = vpop.f32.mrf.mxu0
    %4475 = vdwg.mxu0
    %4476 = vmatpush.bf16.msra.mxu0 %v2862
    %4477 = vmatpush.bf16.msra.mxu0 %v2858
    %4478 = vmatpush.bf16.msra.mxu0 %v2854
    %4479 = vmatpush.bf16.msra.mxu0 %v2850
    %4480 = vmatpush.bf16.msra.mxu0 %v2846
    %4481 = vmatpush.bf16.msra.mxu0 %v2842
    %4482 = vmatpush.bf16.msra.mxu0 %v2838
    %4483 = vmatpush.bf16.msra.mxu0 %v2834
    %4484 = vmatmul.bf16.gmra.mxu0 %v726
    %v4485 = vpop.f32.mrf.mxu0
    %v4486 = vadd.f32 %v4473, %v4485
    %v4487 = vpop.f32.mrf.mxu0
    %4488 = vdwg.mxu0
    %4489 = vmatpush.bf16.msra.mxu0 %v2894
    %4490 = vmatpush.bf16.msra.mxu0 %v2890
    %4491 = vmatpush.bf16.msra.mxu0 %v2886
    %4492 = vmatpush.bf16.msra.mxu0 %v2882
    %4493 = vmatpush.bf16.msra.mxu0 %v2878
    %4494 = vmatpush.bf16.msra.mxu0 %v2874
    %4495 = vmatpush.bf16.msra.mxu0 %v2870
    %4496 = vmatpush.bf16.msra.mxu0 %v2866
    %4497 = vmatmul.bf16.gmra.mxu0 %v727
    %v4498 = vpop.f32.mrf.mxu0
    %v4499 = vadd.f32 %v4486, %v4498
    %v4500 = vpop.f32.mrf.mxu0
    %4501 = vdwg.mxu0
    %4502 = vmatpush.bf16.msra.mxu0 %v2926
    %4503 = vmatpush.bf16.msra.mxu0 %v2922
    %4504 = vmatpush.bf16.msra.mxu0 %v2918
    %4505 = vmatpush.bf16.msra.mxu0 %v2914
    %4506 = vmatpush.bf16.msra.mxu0 %v2910
    %4507 = vmatpush.bf16.msra.mxu0 %v2906
    %4508 = vmatpush.bf16.msra.mxu0 %v2902
    %4509 = vmatpush.bf16.msra.mxu0 %v2898
    %4510 = vmatmul.bf16.gmra.mxu0 %v728
    %v4511 = vpop.f32.mrf.mxu0
    %v4512 = vadd.f32 %v4499, %v4511
    %v4513 = vpop.f32.mrf.mxu0
    %4514 = vdwg.mxu0
    %4515 = vmatpush.bf16.msra.mxu0 %v2958
    %4516 = vmatpush.bf16.msra.mxu0 %v2954
    %4517 = vmatpush.bf16.msra.mxu0 %v2950
    %4518 = vmatpush.bf16.msra.mxu0 %v2946
    %4519 = vmatpush.bf16.msra.mxu0 %v2942
    %4520 = vmatpush.bf16.msra.mxu0 %v2938
    %4521 = vmatpush.bf16.msra.mxu0 %v2934
    %4522 = vmatpush.bf16.msra.mxu0 %v2930
    %4523 = vmatmul.bf16.gmra.mxu0 %v729
    %v4524 = vpop.f32.mrf.mxu0
    %v4525 = vadd.f32 %v4512, %v4524
    %v4526 = vpop.f32.mrf.mxu0
    %4527 = vdwg.mxu0
    %4528 = vmatpush.bf16.msra.mxu0 %v2990
    %4529 = vmatpush.bf16.msra.mxu0 %v2986
    %4530 = vmatpush.bf16.msra.mxu0 %v2982
    %4531 = vmatpush.bf16.msra.mxu0 %v2978
    %4532 = vmatpush.bf16.msra.mxu0 %v2974
    %4533 = vmatpush.bf16.msra.mxu0 %v2970
    %4534 = vmatpush.bf16.msra.mxu0 %v2966
    %4535 = vmatpush.bf16.msra.mxu0 %v2962
    %4536 = vmatmul.bf16.gmra.mxu0 %v730
    %v4537 = vpop.f32.mrf.mxu0
    %v4538 = vadd.f32 %v4525, %v4537
    %v4539 = vpop.f32.mrf.mxu0
    %4540 = vdwg.mxu0
    %4541 = vmatpush.bf16.msra.mxu0 %v3022
    %4542 = vmatpush.bf16.msra.mxu0 %v3018
    %4543 = vmatpush.bf16.msra.mxu0 %v3014
    %4544 = vmatpush.bf16.msra.mxu0 %v3010
    %4545 = vmatpush.bf16.msra.mxu0 %v3006
    %4546 = vmatpush.bf16.msra.mxu0 %v3002
    %4547 = vmatpush.bf16.msra.mxu0 %v2998
    %4548 = vmatpush.bf16.msra.mxu0 %v2994
    %4549 = vmatmul.bf16.gmra.mxu0 %v731
    %v4550 = vpop.f32.mrf.mxu0
    %v4551 = vadd.f32 %v4538, %v4550
    %v4552 = vpop.f32.mrf.mxu0
    %4553 = vdwg.mxu0
    %4554 = vmatpush.bf16.msra.mxu0 %v3054
    %4555 = vmatpush.bf16.msra.mxu0 %v3050
    %4556 = vmatpush.bf16.msra.mxu0 %v3046
    %4557 = vmatpush.bf16.msra.mxu0 %v3042
    %4558 = vmatpush.bf16.msra.mxu0 %v3038
    %4559 = vmatpush.bf16.msra.mxu0 %v3034
    %4560 = vmatpush.bf16.msra.mxu0 %v3030
    %4561 = vmatpush.bf16.msra.mxu0 %v3026
    %4562 = vmatmul.bf16.gmra.mxu0 %v732
    %v4563 = vpop.f32.mrf.mxu0
    %v4564 = vadd.f32 %v4551, %v4563
    %v4565 = vpop.f32.mrf.mxu0
    %4566 = vdwg.mxu0
    %v4567 = vmax.f32 %v3862, 0.0
    %v4568 = vmax.f32 %v4096, 0.0
    %v4569 = vmax.f32 %v4330, 0.0
    %v4570 = vmax.f32 %v4564, 0.0
    %v4571 = vpack.c.bf16 %v4567, %v4567
    %v4572 = vpack.c.bf16 %v4568, %v4568
    %v4573 = vpack.c.bf16 %v4569, %v4569
    %v4574 = vpack.c.bf16 %v4570, %v4570
    %v4575 = vld [vmem:[#allocation8] sm:$0xf]
    %v4576 = vld [vmem:[#allocation8 + $0x4] sm:$0xf]
    %v4577 = vld [vmem:[#allocation8 + $0x8] sm:$0xf]
    %v4578 = vld [vmem:[#allocation8 + $0xc] sm:$0xf]
    %v4579 = vld [vmem:[#allocation8 + $0x10] sm:$0xf]
    %v4580 = vld [vmem:[#allocation8 + $0x14] sm:$0xf]
    %v4581 = vld [vmem:[#allocation8 + $0x18] sm:$0xf]
    %v4582 = vld [vmem:[#allocation8 + $0x1c] sm:$0xf]
    %v4583 = vld [vmem:[#allocation8 + $0x20] sm:$0xf]
    %v4584 = vld [vmem:[#allocation8 + $0x24] sm:$0xf]
    %v4585 = vld [vmem:[#allocation8 + $0x28] sm:$0xf]
    %v4586 = vld [vmem:[#allocation8 + $0x2c] sm:$0xf]
    %v4587 = vld [vmem:[#allocation8 + $0x30] sm:$0xf]
    %v4588 = vld [vmem:[#allocation8 + $0x34] sm:$0xf]
    %v4589 = vld [vmem:[#allocation8 + $0x38] sm:$0xf]
    %v4590 = vld [vmem:[#allocation8 + $0x3c] sm:$0xf]
    %v4591 = vld [vmem:[#allocation8 + $0x40] sm:$0xf]
    %v4592 = vld [vmem:[#allocation8 + $0x44] sm:$0xf]
    %v4593 = vld [vmem:[#allocation8 + $0x48] sm:$0xf]
    %v4594 = vld [vmem:[#allocation8 + $0x4c] sm:$0xf]
    %v4595 = vld [vmem:[#allocation8 + $0x50] sm:$0xf]
    %v4596 = vld [vmem:[#allocation8 + $0x54] sm:$0xf]
    %v4597 = vld [vmem:[#allocation8 + $0x58] sm:$0xf]
    %v4598 = vld [vmem:[#allocation8 + $0x5c] sm:$0xf]
    %v4599 = vld [vmem:[#allocation8 + $0x60] sm:$0xf]
    %v4600 = vld [vmem:[#allocation8 + $0x64] sm:$0xf]
    %v4601 = vld [vmem:[#allocation8 + $0x68] sm:$0xf]
    %v4602 = vld [vmem:[#allocation8 + $0x6c] sm:$0xf]
    %v4603 = vld [vmem:[#allocation8 + $0x70] sm:$0xf]
    %v4604 = vld [vmem:[#allocation8 + $0x74] sm:$0xf]
    %v4605 = vld [vmem:[#allocation8 + $0x78] sm:$0xf]
    %v4606 = vld [vmem:[#allocation8 + $0x7c] sm:$0xf]
    %v4607 = vld [vmem:[#allocation8 + $0x80] sm:$0xf]
    %v4608 = vld [vmem:[#allocation8 + $0x84] sm:$0xf]
    %v4609 = vld [vmem:[#allocation8 + $0x88] sm:$0xf]
    %v4610 = vld [vmem:[#allocation8 + $0x8c] sm:$0xf]
    %v4611 = vld [vmem:[#allocation8 + $0x90] sm:$0xf]
    %v4612 = vld [vmem:[#allocation8 + $0x94] sm:$0xf]
    %v4613 = vld [vmem:[#allocation8 + $0x98] sm:$0xf]
    %v4614 = vld [vmem:[#allocation8 + $0x9c] sm:$0xf]
    %v4615 = vld [vmem:[#allocation8 + $0xa0] sm:$0xf]
    %v4616 = vld [vmem:[#allocation8 + $0xa4] sm:$0xf]
    %v4617 = vld [vmem:[#allocation8 + $0xa8] sm:$0xf]
    %v4618 = vld [vmem:[#allocation8 + $0xac] sm:$0xf]
    %v4619 = vld [vmem:[#allocation8 + $0xb0] sm:$0xf]
    %v4620 = vld [vmem:[#allocation8 + $0xb4] sm:$0xf]
    %v4621 = vld [vmem:[#allocation8 + $0xb8] sm:$0xf]
    %v4622 = vld [vmem:[#allocation8 + $0xbc] sm:$0xf]
    %v4623 = vld [vmem:[#allocation8 + $0xc0] sm:$0xf]
    %v4624 = vld [vmem:[#allocation8 + $0xc4] sm:$0xf]
    %v4625 = vld [vmem:[#allocation8 + $0xc8] sm:$0xf]
    %v4626 = vld [vmem:[#allocation8 + $0xcc] sm:$0xf]
    %v4627 = vld [vmem:[#allocation8 + $0xd0] sm:$0xf]
    %v4628 = vld [vmem:[#allocation8 + $0xd4] sm:$0xf]
    %v4629 = vld [vmem:[#allocation8 + $0xd8] sm:$0xf]
    %v4630 = vld [vmem:[#allocation8 + $0xdc] sm:$0xf]
    %v4631 = vld [vmem:[#allocation8 + $0xe0] sm:$0xf]
    %v4632 = vld [vmem:[#allocation8 + $0xe4] sm:$0xf]
    %v4633 = vld [vmem:[#allocation8 + $0xe8] sm:$0xf]
    %v4634 = vld [vmem:[#allocation8 + $0xec] sm:$0xf]
    %v4635 = vld [vmem:[#allocation8 + $0xf0] sm:$0xf]
    %v4636 = vld [vmem:[#allocation8 + $0xf4] sm:$0xf]
    %v4637 = vld [vmem:[#allocation8 + $0xf8] sm:$0xf]
    %v4638 = vld [vmem:[#allocation8 + $0xfc] sm:$0xf]
    %v4639 = vld [vmem:[#allocation10] sm:$0x1]
    %v4641 = vperm.slane %v4639, 0
    %v4707 = vunpack.c.l.b16 %v4575
    %v4708 = vunpack.c.l.b16 %v4576
    %v4709 = vunpack.c.l.b16 %v4577
    %v4710 = vunpack.c.l.b16 %v4578
    %v4711 = vunpack.c.l.b16 %v4579
    %v4712 = vunpack.c.l.b16 %v4580
    %v4713 = vunpack.c.l.b16 %v4581
    %v4714 = vunpack.c.l.b16 %v4582
    %v4715 = vunpack.c.l.b16 %v4583
    %v4716 = vunpack.c.l.b16 %v4584
    %v4717 = vunpack.c.l.b16 %v4585
    %v4718 = vunpack.c.l.b16 %v4586
    %v4719 = vunpack.c.l.b16 %v4587
    %v4720 = vunpack.c.l.b16 %v4588
    %v4721 = vunpack.c.l.b16 %v4589
    %v4722 = vunpack.c.l.b16 %v4590
    %v4723 = vunpack.c.l.b16 %v4591
    %v4724 = vunpack.c.l.b16 %v4592
    %v4725 = vunpack.c.l.b16 %v4593
    %v4726 = vunpack.c.l.b16 %v4594
    %v4727 = vunpack.c.l.b16 %v4595
    %v4728 = vunpack.c.l.b16 %v4596
    %v4729 = vunpack.c.l.b16 %v4597
    %v4730 = vunpack.c.l.b16 %v4598
    %v4731 = vunpack.c.l.b16 %v4599
    %v4732 = vunpack.c.l.b16 %v4600
    %v4733 = vunpack.c.l.b16 %v4601
    %v4734 = vunpack.c.l.b16 %v4602
    %v4735 = vunpack.c.l.b16 %v4603
    %v4736 = vunpack.c.l.b16 %v4604
    %v4737 = vunpack.c.l.b16 %v4605
    %v4738 = vunpack.c.l.b16 %v4606
    %v4739 = vunpack.c.l.b16 %v4607
    %v4740 = vunpack.c.l.b16 %v4608
    %v4741 = vunpack.c.l.b16 %v4609
    %v4742 = vunpack.c.l.b16 %v4610
    %v4743 = vunpack.c.l.b16 %v4611
    %v4744 = vunpack.c.l.b16 %v4612
    %v4745 = vunpack.c.l.b16 %v4613
    %v4746 = vunpack.c.l.b16 %v4614
    %v4747 = vunpack.c.l.b16 %v4615
    %v4748 = vunpack.c.l.b16 %v4616
    %v4749 = vunpack.c.l.b16 %v4617
    %v4750 = vunpack.c.l.b16 %v4618
    %v4751 = vunpack.c.l.b16 %v4619
    %v4752 = vunpack.c.l.b16 %v4620
    %v4753 = vunpack.c.l.b16 %v4621
    %v4754 = vunpack.c.l.b16 %v4622
    %v4755 = vunpack.c.l.b16 %v4623
    %v4756 = vunpack.c.l.b16 %v4624
    %v4757 = vunpack.c.l.b16 %v4625
    %v4758 = vunpack.c.l.b16 %v4626
    %v4759 = vunpack.c.l.b16 %v4627
    %v4760 = vunpack.c.l.b16 %v4628
    %v4761 = vunpack.c.l.b16 %v4629
    %v4762 = vunpack.c.l.b16 %v4630
    %v4763 = vunpack.c.l.b16 %v4631
    %v4764 = vunpack.c.l.b16 %v4632
    %v4765 = vunpack.c.l.b16 %v4633
    %v4766 = vunpack.c.l.b16 %v4634
    %v4767 = vunpack.c.l.b16 %v4635
    %v4768 = vunpack.c.l.b16 %v4636
    %v4769 = vunpack.c.l.b16 %v4637
    %v4770 = vunpack.c.l.b16 %v4638
    %v4771 = vpack.c.b16 %v4708, %v4707
    %v4772 = vpack.c.b16 %v4710, %v4709
    %v4773 = vpack.c.b16 %v4712, %v4711
    %v4774 = vpack.c.b16 %v4714, %v4713
    %v4775 = vpack.c.b16 %v4716, %v4715
    %v4776 = vpack.c.b16 %v4718, %v4717
    %v4777 = vpack.c.b16 %v4720, %v4719
    %v4778 = vpack.c.b16 %v4722, %v4721
    %v4779 = vpack.c.b16 %v4724, %v4723
    %v4780 = vpack.c.b16 %v4726, %v4725
    %v4781 = vpack.c.b16 %v4728, %v4727
    %v4782 = vpack.c.b16 %v4730, %v4729
    %v4783 = vpack.c.b16 %v4732, %v4731
    %v4784 = vpack.c.b16 %v4734, %v4733
    %v4785 = vpack.c.b16 %v4736, %v4735
    %v4786 = vpack.c.b16 %v4738, %v4737
    %v4787 = vpack.c.b16 %v4740, %v4739
    %v4788 = vpack.c.b16 %v4742, %v4741
    %v4789 = vpack.c.b16 %v4744, %v4743
    %v4790 = vpack.c.b16 %v4746, %v4745
    %v4791 = vpack.c.b16 %v4748, %v4747
    %v4792 = vpack.c.b16 %v4750, %v4749
    %v4793 = vpack.c.b16 %v4752, %v4751
    %v4794 = vpack.c.b16 %v4754, %v4753
    %v4795 = vpack.c.b16 %v4756, %v4755
    %v4796 = vpack.c.b16 %v4758, %v4757
    %v4797 = vpack.c.b16 %v4760, %v4759
    %v4798 = vpack.c.b16 %v4762, %v4761
    %v4799 = vpack.c.b16 %v4764, %v4763
    %v4800 = vpack.c.b16 %v4766, %v4765
    %v4801 = vpack.c.b16 %v4768, %v4767
    %v4802 = vpack.c.b16 %v4770, %v4769
    %4835 = vmatpush.bf16.msra.mxu0 %v4778
    %4836 = vmatpush.bf16.msra.mxu0 %v4777
    %4837 = vmatpush.bf16.msra.mxu0 %v4776
    %4838 = vmatpush.bf16.msra.mxu0 %v4775
    %4839 = vmatpush.bf16.msra.mxu0 %v4774
    %4840 = vmatpush.bf16.msra.mxu0 %v4773
    %4841 = vmatpush.bf16.msra.mxu0 %v4772
    %4842 = vmatpush.bf16.msra.mxu0 %v4771
    %4843 = vmatmul.bf16.gmra.mxu0 %v4571
    %v4844 = vpop.f32.mrf.mxu0
    %v4845 = vadd.f32 %v4641, %v4844
    %v4846 = vpop.f32.mrf.mxu0
    %4847 = vdwg.mxu0
    %4848 = vmatpush.bf16.msra.mxu0 %v4786
    %4849 = vmatpush.bf16.msra.mxu0 %v4785
    %4850 = vmatpush.bf16.msra.mxu0 %v4784
    %4851 = vmatpush.bf16.msra.mxu0 %v4783
    %4852 = vmatpush.bf16.msra.mxu0 %v4782
    %4853 = vmatpush.bf16.msra.mxu0 %v4781
    %4854 = vmatpush.bf16.msra.mxu0 %v4780
    %4855 = vmatpush.bf16.msra.mxu0 %v4779
    %4856 = vmatmul.bf16.gmra.mxu0 %v4572
    %v4857 = vpop.f32.mrf.mxu0
    %v4858 = vadd.f32 %v4845, %v4857
    %v4859 = vpop.f32.mrf.mxu0
    %4860 = vdwg.mxu0
    %4861 = vmatpush.bf16.msra.mxu0 %v4794
    %4862 = vmatpush.bf16.msra.mxu0 %v4793
    %4863 = vmatpush.bf16.msra.mxu0 %v4792
    %4864 = vmatpush.bf16.msra.mxu0 %v4791
    %4865 = vmatpush.bf16.msra.mxu0 %v4790
    %4866 = vmatpush.bf16.msra.mxu0 %v4789
    %4867 = vmatpush.bf16.msra.mxu0 %v4788
    %4868 = vmatpush.bf16.msra.mxu0 %v4787
    %4869 = vmatmul.bf16.gmra.mxu0 %v4573
    %v4870 = vpop.f32.mrf.mxu0
    %v4871 = vadd.f32 %v4858, %v4870
    %v4872 = vpop.f32.mrf.mxu0
    %4873 = vdwg.mxu0
    %4874 = vmatpush.bf16.msra.mxu0 %v4802
    %4875 = vmatpush.bf16.msra.mxu0 %v4801
    %4876 = vmatpush.bf16.msra.mxu0 %v4800
    %4877 = vmatpush.bf16.msra.mxu0 %v4799
    %4878 = vmatpush.bf16.msra.mxu0 %v4798
    %4879 = vmatpush.bf16.msra.mxu0 %v4797
    %4880 = vmatpush.bf16.msra.mxu0 %v4796
    %4881 = vmatpush.bf16.msra.mxu0 %v4795
    %4882 = vmatmul.bf16.gmra.mxu0 %v4574
    %v4883 = vpop.f32.mrf.mxu0
    %v4884 = vadd.f32 %v4871, %v4883
    %v4885 = vpop.f32.mrf.mxu0
    %4886 = vdwg.mxu0
    %4887 = vst [vmem:[#allocation11] sm:$0xff] %v4884
    // Predicated region
    $region42: #{tpu_custom_call.1} parent=1 // pred_check
      _
    $region43: #{tpu_custom_call.1} parent=1 // pred_check_branch
      %4889 = sbr.rel (0) target = $region45
    $region44: #{tpu_custom_call.1} parent=1 // pred_region
      %4891 = vsyncadd [#allocation4], 0
      %s4893 = sshll.u32 [#allocation11], 4
      %s4894 = int_to_ptr.vmem [resolvable:$true] %s4893
      %s4895 = sshll.u32 %s5, 4
      %s4896 = int_to_ptr.hbm [resolvable:$true] %s4895
      %4898 = dma.vmem_to_hbm [thread:$0]  %s4894, 128, %s4896, [#allocation4]
    $region45: #{tpu_custom_call.1} parent=1 // pred_fallthru
      _
    // Predicated region
    $region46: #{tpu_custom_call.1} parent=1 // pred_check
      _
    $region47: #{tpu_custom_call.1} parent=1 // pred_check_branch
      %4900 = sbr.rel (0) target = $region49
    $region48: #{tpu_custom_call.1} parent=1 // pred_region
      %4902 = dma.done [#allocation4], 128
    $region49: #{tpu_custom_call.1} parent=1 // pred_fallthru
      _
    %4903 = vsyncpa [#allocation3], 1
    %4904 = vsyncpa [#allocation6], 1
    %4905 = vsyncpa [#allocation9], 1
    %4906 = vsyncpa [#allocation4], 1

</llo_original>
